<compile_context>
chip_gen: v5e
topology: v5e:2x2
jax: 0.10.0
libtpu: 0.0.40
codegen_flags: <defaults>
</compile_context>

<pallas_src>
import numpy as np
import jax
import jax.numpy as jnp
from jax.experimental import pallas as pl
from jax.experimental.pallas import tpu as pltpu

TB_MAX = 32                       # images per grid step (VMEM-safe on v7x too)
VMEM_LIMIT = 32 * 1024 * 1024


def _cdiv(a, b):
    return -(-a // b)


# ----------------------------------------------------------------------------
# The single fused kernel.  Per grid step it processes a tile of TB images.
# Row layouts (per image): conv1 stage 32 rows, pooled1/conv2 stage 16 rows,
# pooled2/fc stage 8 rows.  Only a prefix of rows/lanes is "real"; garbage
# rows/lanes are finite and are either multiplied by zero weights or discarded.
# ----------------------------------------------------------------------------
def _lenet_kernel(x_ref, w1_ref, b1_ref, w2_ref, b2_ref, f1_ref, bf1_ref,
                  wf2_ref, bf2_ref, wf3_ref, bf3_ref, o_ref,
                  y1_ref, z1_ref, y2_ref, z2_ref, yf_ref, zf_ref):
    r1 = x_ref.shape[0]           # TB * 32
    r2 = r1 // 2                  # TB * 16
    r3 = r2 // 2                  # TB * 8

    # ---- conv1: 5 row-taps, width taps folded into the banded weights --------
    x = x_ref[...]                                            # (r1, 96) bf16
    for dh in range(5):
        y = jnp.dot(x, w1_ref[dh], preferred_element_type=jnp.float32)   # (r1, 256)
        if dh == 0:
            z1_ref[...] = y
        else:
            y1_ref[...] = y
            n = r1 - dh
            z1_ref[pl.ds(0, n), :] = (z1_ref[pl.ds(0, n), :]
                                      + y1_ref[pl.ds(dh, n), :])
    z1 = jnp.maximum(z1_ref[...] + b1_ref[...], 0.0)          # bias + ReLU (f32)
    z1 = jnp.max(z1.reshape(r2, 2, 256), axis=1)              # 2x2 pool: h pairs
    p1 = jnp.maximum(z1[:, 0:128], z1[:, 128:256])            # 2x2 pool: w halves
    p1 = p1.astype(jnp.bfloat16)                              # (r2, 128)

    # ---- conv2 ----------------------------------------------------------------
    for dh in range(5):
        y = jnp.dot(p1, w2_ref[dh], preferred_element_type=jnp.float32)  # (r2, 256)
        if dh == 0:
            z2_ref[...] = y
        else:
            y2_ref[...] = y
            n = r2 - dh
            z2_ref[pl.ds(0, n), :] = (z2_ref[pl.ds(0, n), :]
                                      + y2_ref[pl.ds(dh, n), :])
    z2 = jnp.maximum(z2_ref[...] + b2_ref[...], 0.0)
    z2 = jnp.max(z2.reshape(r3, 2, 256), axis=1)
    p2 = jnp.maximum(z2[:, 0:128], z2[:, 128:256]).astype(jnp.bfloat16)  # (r3, 128)

    # ---- fc1 (decomposed over the 5 pooled rows per image) --------------------
    for j in range(5):
        y = jnp.dot(p2, f1_ref[j], preferred_element_type=jnp.float32)   # (r3, 128)
        if j == 0:
            zf_ref[...] = y
        else:
            yf_ref[...] = y
            n = r3 - j
            zf_ref[pl.ds(0, n), :] = (zf_ref[pl.ds(0, n), :]
                                      + yf_ref[pl.ds(j, n), :])
    h = jnp.maximum(zf_ref[...] + bf1_ref[...], 0.0).astype(jnp.bfloat16)

    # ---- fc2 -> relu -> fc3 ----------------------------------------------------
    h = jnp.dot(h, wf2_ref[...], preferred_element_type=jnp.float32)
    h = jnp.maximum(h + bf2_ref[...], 0.0).astype(jnp.bfloat16)
    h = jnp.dot(h, wf3_ref[...], preferred_element_type=jnp.float32)
    o_ref[...] = (h + bf3_ref[...]).astype(o_ref.dtype)       # logits at rows b*8


# ----------------------------------------------------------------------------
# Forward pass wrapper: one pallas_call for the whole net.
# ----------------------------------------------------------------------------
def net_forward(qparams, x):
    B = x.shape[0]
    # >=2 grid steps whenever B >= 2 (v7x megacore), tile capped for VMEM.
    n_tiles = max(_cdiv(B, TB_MAX), 2 if B >= 2 else 1)
    tb = _cdiv(B, n_tiles)
    b_pad = n_tiles * tb

    # Single cheap layout change: NCHW -> NHWC, bf16, rows=(b,h), cols=(w,c).
    x2 = jnp.transpose(x, (0, 2, 3, 1)).astype(jnp.bfloat16).reshape(B * 32, 96)
    if b_pad != B:
        x2 = jnp.pad(x2, ((0, (b_pad - B) * 32), (0, 0)))

    out = pl.pallas_call(
        _lenet_kernel,
        out_shape=jax.ShapeDtypeStruct((b_pad * 8, 128), jnp.float32),
        grid=(n_tiles,),
        in_specs=[
            pl.BlockSpec((tb * 32, 96), lambda i: (i, 0)),        # input tile
            pl.BlockSpec((5, 96, 256), lambda i: (0, 0, 0)),      # conv1 band
            pl.BlockSpec((1, 256), lambda i: (0, 0)),             # conv1 bias row
            pl.BlockSpec((5, 128, 256), lambda i: (0, 0, 0)),     # conv2 band
            pl.BlockSpec((1, 256), lambda i: (0, 0)),             # conv2 bias row
            pl.BlockSpec((5, 128, 128), lambda i: (0, 0, 0)),     # fc1 band
            pl.BlockSpec((1, 128), lambda i: (0, 0)),             # fc1 bias
            pl.BlockSpec((128, 128), lambda i: (0, 0)),           # fc2 weight
            pl.BlockSpec((1, 128), lambda i: (0, 0)),             # fc2 bias
            pl.BlockSpec((128, 128), lambda i: (0, 0)),           # fc3 weight
            pl.BlockSpec((1, 128), lambda i: (0, 0)),             # fc3 bias
        ],
        out_specs=pl.BlockSpec((tb * 8, 128), lambda i: (i, 0)),
        scratch_shapes=[
            pltpu.VMEM((tb * 32, 256), jnp.float32),   # y1 (conv1 tap result)
            pltpu.VMEM((tb * 32, 256), jnp.float32),   # z1 (conv1 accumulator)
            pltpu.VMEM((tb * 16, 256), jnp.float32),   # y2
            pltpu.VMEM((tb * 16, 256), jnp.float32),   # z2
            pltpu.VMEM((tb * 8, 128), jnp.float32),    # yf
            pltpu.VMEM((tb * 8, 128), jnp.float32),    # zf
        ],
        compiler_params=pltpu.CompilerParams(
            dimension_semantics=("parallel",),
            vmem_limit_bytes=VMEM_LIMIT,
        ),
    )(x2, qparams["w1_band"], qparams["b1_row"],
      qparams["w2_band"], qparams["b2_row"],
      qparams["f1_band"], qparams["bf1_row"],
      qparams["wf2"], qparams["bf2_row"],
      qparams["wf3"], qparams["bf3_row"])

    # Valid logits live at row 0 of each image's 8-row block, lanes :10 (tiny slice).
    return out.reshape(b_pad, 8, 128)[:B, 0, :10]


# ----------------------------------------------------------------------------
# Parameters: PyTorch-default-style init, then ONE-TIME conversion to the
# banded / lane-padded bf16 kernel layouts (outside the per-step hot path).
# ----------------------------------------------------------------------------
def init_params(key):
    def uni(k, shape, fan_in):
        bound = 1.0 / np.sqrt(fan_in)
        return jax.random.uniform(k, shape, jnp.float32, -bound, bound)

    ks = jax.random.split(key, 10)
    return {
        "w_conv1": uni(ks[0], (6, 3, 5, 5), 3 * 25),
        "b_conv1": uni(ks[1], (6,), 3 * 25),
        "w_conv2": uni(ks[2], (16, 6, 5, 5), 6 * 25),
        "b_conv2": uni(ks[3], (16,), 6 * 25),
        "w_fc1": uni(ks[4], (120, 400), 400),   # PyTorch Linear layout (out, in)
        "b_fc1": uni(ks[5], (120,), 400),
        "w_fc2": uni(ks[6], (84, 120), 120),
        "b_fc2": uni(ks[7], (84,), 120),
        "w_fc3": uni(ks[8], (10, 84), 84),
        "b_fc3": uni(ks[9], (10,), 84),
    }


def prepare_params(p):
    w1 = np.asarray(p["w_conv1"], np.float32)   # (6, 3, 5, 5)  (oc, c, kh, kw)
    w2 = np.asarray(p["w_conv2"], np.float32)   # (16, 6, 5, 5)
    wf1 = np.asarray(p["w_fc1"], np.float32)    # (120, 400), feature = c*25 + h*5 + w
    b1 = np.asarray(p["b_conv1"], np.float32)
    b2 = np.asarray(p["b_conv2"], np.float32)

    # conv1 band: src col = w_in*3 + c (96), dst col = (w_out%2)*128 + (w_out//2)*8 + oc
    # (even/odd output columns go to separate 128-lane halves so the w-pool is an
    #  aligned max of the two halves).
    w1_band = np.zeros((5, 96, 256), np.float32)
    b1_row = np.zeros((1, 256), np.float32)
    for wo in range(28):
        dst = (wo % 2) * 128 + (wo // 2) * 8
        b1_row[0, dst:dst + 6] = b1
        for dh in range(5):
            for dw in range(5):
                for c in range(3):
                    w1_band[dh, (wo + dw) * 3 + c, dst:dst + 6] = w1[:, c, dh, dw]

    # conv2 band: src col = pooled1 col pw*8 + c (128), dst = (w%2)*128 + (w//2)*16 + oc
    w2_band = np.zeros((5, 128, 256), np.float32)
    b2_row = np.zeros((1, 256), np.float32)
    for wo in range(10):
        dst = (wo % 2) * 128 + (wo // 2) * 16
        b2_row[0, dst:dst + 16] = b2
        for dh in range(5):
            for dw in range(5):
                for c in range(6):
                    w2_band[dh, (wo + dw) * 8 + c, dst:dst + 16] = w2[:, c, dh, dw]

    # fc1 band: j = pooled row (h), src col = pw*16 + oc, PyTorch feature = oc*25+j*5+pw
    f1_band = np.zeros((5, 128, 128), np.float32)
    for j in range(5):
        for pw in range(5):
            for oc in range(16):
                f1_band[j, pw * 16 + oc, :120] = wf1[:, oc * 25 + j * 5 + pw]

    wf2 = np.zeros((128, 128), np.float32)
    wf2[:120, :84] = np.asarray(p["w_fc2"], np.float32).T
    wf3 = np.zeros((128, 128), np.float32)
    wf3[:84, :10] = np.asarray(p["w_fc3"], np.float32).T
    bf1 = np.zeros((1, 128), np.float32); bf1[0, :120] = np.asarray(p["b_fc1"])
    bf2 = np.zeros((1, 128), np.float32); bf2[0, :84] = np.asarray(p["b_fc2"])
    bf3 = np.zeros((1, 128), np.float32); bf3[0, :10] = np.asarray(p["b_fc3"])

    tobf = lambda a: jnp.asarray(a, jnp.bfloat16)
    tof = lambda a: jnp.asarray(a, jnp.float32)
    return {
        "w1_band": tobf(w1_band), "b1_row": tof(b1_row),
        "w2_band": tobf(w2_band), "b2_row": tof(b2_row),
        "f1_band": tobf(f1_band), "bf1_row": tof(bf1),
        "wf2": tobf(wf2), "bf2_row": tof(bf2),
        "wf3": tobf(wf3), "bf3_row": tof(bf3),
    }


# Pure-JAX reference (mirrors the kernel's bf16 input/weight/activation rounding
# so the comparison is tight; accumulation everywhere in f32).
def reference_forward(p, x):
    bf = lambda a: a.astype(jnp.bfloat16).astype(jnp.float32)
    dn = ("NCHW", "OIHW", "NCHW")
    y = jax.lax.conv_general_dilated(bf(x), bf(p["w_conv1"]), (1, 1), "VALID",
                                     dimension_numbers=dn)
    y = jax.nn.relu(y + p["b_conv1"][None, :, None, None])
    y = jax.lax.reduce_window(y, -jnp.inf, jax.lax.max, (1, 1, 2, 2), (1, 1, 2, 2), "VALID")
    y = jax.lax.conv_general_dilated(bf(y), bf(p["w_conv2"]), (1, 1), "VALID",
                                     dimension_numbers=dn)
    y = jax.nn.relu(y + p["b_conv2"][None, :, None, None])
    y = jax.lax.reduce_window(y, -jnp.inf, jax.lax.max, (1, 1, 2, 2), (1, 1, 2, 2), "VALID")
    y = bf(y).reshape(x.shape[0], 400)
    y = jax.nn.relu(y @ bf(p["w_fc1"]).T + p["b_fc1"])
    y = jax.nn.relu(bf(y) @ bf(p["w_fc2"]).T + p["b_fc2"])
    return bf(y) @ bf(p["w_fc3"]).T + p["b_fc3"]


if __name__ == "__main__":
    key = jax.random.PRNGKey(0)
    k_param, k_input = jax.random.split(key)
    raw_params = init_params(k_param)
    params = prepare_params(raw_params)

    # fc1 (16*5*5 inputs) pins the spatial size to 32x32 (CIFAR-like); batch = 2.
    x = jax.random.normal(k_input, (2, 3, 32, 32), jnp.float32)

    fwd = jax.jit(net_forward)
    out = jax.block_until_ready(fwd(params, x))
    assert out.shape == (2, 10) and out.dtype == jnp.float32

    ref = jax.block_until_ready(reference_forward(raw_params, x))
    assert jnp.allclose(out, ref, rtol=2e-2, atol=2e-2), (
        f"mismatch vs reference: max abs err {float(jnp.max(jnp.abs(out - ref)))}")
    print("KERNEL_OK")
</pallas_src>

<mosaic_0001>
module attributes {stable_mosaic.version = 11 : i64} {
  func.func @_lenet_kernel(%arg0: i32, %arg1: memref<32x96xbf16, #tpu.memory_space<vmem>>, %arg2: memref<5x96x256xbf16, #tpu.memory_space<vmem>>, %arg3: memref<1x256xf32, #tpu.memory_space<vmem>>, %arg4: memref<5x128x256xbf16, #tpu.memory_space<vmem>>, %arg5: memref<1x256xf32, #tpu.memory_space<vmem>>, %arg6: memref<5x128x128xbf16, #tpu.memory_space<vmem>>, %arg7: memref<1x128xf32, #tpu.memory_space<vmem>>, %arg8: memref<128x128xbf16, #tpu.memory_space<vmem>>, %arg9: memref<1x128xf32, #tpu.memory_space<vmem>>, %arg10: memref<128x128xbf16, #tpu.memory_space<vmem>>, %arg11: memref<1x128xf32, #tpu.memory_space<vmem>>, %arg12: memref<8x128xf32, #tpu.memory_space<vmem>>, %arg13: memref<32x256xf32, #tpu.memory_space<vmem>>, %arg14: memref<32x256xf32, #tpu.memory_space<vmem>>, %arg15: memref<16x256xf32, #tpu.memory_space<vmem>>, %arg16: memref<16x256xf32, #tpu.memory_space<vmem>>, %arg17: memref<8x128xf32, #tpu.memory_space<vmem>>, %arg18: memref<8x128xf32, #tpu.memory_space<vmem>>) attributes {dimension_semantics = [#tpu.dimension_semantics<parallel>], iteration_bounds = array<i64: 2>, scalar_prefetch = 0 : i64, scratch_operands = 6 : i64, tpu.core_type = #tpu.core_type<tc>, window_params = [{transform_indices = @transform_0, window_bounds = array<i64: 32, 96>}, {pipeline_mode = #tpu.pipeline_mode<synchronous>, transform_indices = @transform_1, window_bounds = array<i64: 5, 96, 256>}, {pipeline_mode = #tpu.pipeline_mode<synchronous>, transform_indices = @transform_2, window_bounds = array<i64: 1, 256>}, {pipeline_mode = #tpu.pipeline_mode<synchronous>, transform_indices = @transform_3, window_bounds = array<i64: 5, 128, 256>}, {pipeline_mode = #tpu.pipeline_mode<synchronous>, transform_indices = @transform_4, window_bounds = array<i64: 1, 256>}, {pipeline_mode = #tpu.pipeline_mode<synchronous>, transform_indices = @transform_5, window_bounds = array<i64: 5, 128, 128>}, {pipeline_mode = #tpu.pipeline_mode<synchronous>, transform_indices = @transform_6, window_bounds = array<i64: 1, 128>}, {pipeline_mode = #tpu.pipeline_mode<synchronous>, transform_indices = @transform_7, window_bounds = array<i64: 128, 128>}, {pipeline_mode = #tpu.pipeline_mode<synchronous>, transform_indices = @transform_8, window_bounds = array<i64: 1, 128>}, {pipeline_mode = #tpu.pipeline_mode<synchronous>, transform_indices = @transform_9, window_bounds = array<i64: 128, 128>}, {pipeline_mode = #tpu.pipeline_mode<synchronous>, transform_indices = @transform_10, window_bounds = array<i64: 1, 128>}, {transform_indices = @transform_11, window_bounds = array<i64: 8, 128>}]} {
    %c0 = arith.constant 0 : index
    %c0_0 = arith.constant 0 : index
    %0 = vector.load %arg1[%c0, %c0_0] : memref<32x96xbf16, #tpu.memory_space<vmem>>, vector<32x96xbf16>
    %c0_1 = arith.constant 0 : index
    %c0_2 = arith.constant 0 : index
    %c0_3 = arith.constant 0 : index
    %1 = vector.load %arg2[%c0_1, %c0_2, %c0_3] : memref<5x96x256xbf16, #tpu.memory_space<vmem>>, vector<1x96x256xbf16>
    %2 = vector.shape_cast %1 : vector<1x96x256xbf16> to vector<96x256xbf16>
    %cst = arith.constant dense<0.000000e+00> : vector<32x256xf32>
    %3 = tpu.matmul %0, %2, %cst {dimension_numbers = #tpu.dot_dimension_numbers<[1], [0], [0], [1], [0, 0, 1, 1], [], []>} : vector<32x96xbf16>, vector<96x256xbf16>, vector<32x256xf32> -> vector<32x256xf32>
    %c0_4 = arith.constant 0 : index
    %c0_5 = arith.constant 0 : index
    %4 = vector.load %arg14[%c0_4, %c0_5] : memref<32x256xf32, #tpu.memory_space<vmem>>, vector<32x256xf32>
    tpu.vector_store %arg14[%c0_4, %c0_5], %3 {strides = array<i32>} : memref<32x256xf32, #tpu.memory_space<vmem>>, vector<32x256xf32>,
    %c1 = arith.constant 1 : index
    %c0_6 = arith.constant 0 : index
    %c0_7 = arith.constant 0 : index
    %5 = vector.load %arg2[%c1, %c0_6, %c0_7] : memref<5x96x256xbf16, #tpu.memory_space<vmem>>, vector<1x96x256xbf16>
    %6 = vector.shape_cast %5 : vector<1x96x256xbf16> to vector<96x256xbf16>
    %cst_8 = arith.constant dense<0.000000e+00> : vector<32x256xf32>
    %7 = tpu.matmul %0, %6, %cst_8 {dimension_numbers = #tpu.dot_dimension_numbers<[1], [0], [0], [1], [0, 0, 1, 1], [], []>} : vector<32x96xbf16>, vector<96x256xbf16>, vector<32x256xf32> -> vector<32x256xf32>
    %c0_9 = arith.constant 0 : index
    %c0_10 = arith.constant 0 : index
    %8 = vector.load %arg13[%c0_9, %c0_10] : memref<32x256xf32, #tpu.memory_space<vmem>>, vector<32x256xf32>
    tpu.vector_store %arg13[%c0_9, %c0_10], %7 {strides = array<i32>} : memref<32x256xf32, #tpu.memory_space<vmem>>, vector<32x256xf32>,
    %c0_11 = arith.constant 0 : index
    %c0_12 = arith.constant 0 : index
    %9 = vector.load %arg14[%c0_11, %c0_12] : memref<32x256xf32, #tpu.memory_space<vmem>>, vector<31x256xf32>
    %c1_13 = arith.constant 1 : index
    %c0_14 = arith.constant 0 : index
    %10 = vector.load %arg13[%c1_13, %c0_14] : memref<32x256xf32, #tpu.memory_space<vmem>>, vector<31x256xf32>
    %11 = arith.addf %9, %10 : vector<31x256xf32>
    %c0_15 = arith.constant 0 : index
    %c0_16 = arith.constant 0 : index
    %12 = vector.load %arg14[%c0_15, %c0_16] : memref<32x256xf32, #tpu.memory_space<vmem>>, vector<31x256xf32>
    tpu.vector_store %arg14[%c0_15, %c0_16], %11 {strides = array<i32>} : memref<32x256xf32, #tpu.memory_space<vmem>>, vector<31x256xf32>,
    %c2 = arith.constant 2 : index
    %c0_17 = arith.constant 0 : index
    %c0_18 = arith.constant 0 : index
    %13 = vector.load %arg2[%c2, %c0_17, %c0_18] : memref<5x96x256xbf16, #tpu.memory_space<vmem>>, vector<1x96x256xbf16>
    %14 = vector.shape_cast %13 : vector<1x96x256xbf16> to vector<96x256xbf16>
    %cst_19 = arith.constant dense<0.000000e+00> : vector<32x256xf32>
    %15 = tpu.matmul %0, %14, %cst_19 {dimension_numbers = #tpu.dot_dimension_numbers<[1], [0], [0], [1], [0, 0, 1, 1], [], []>} : vector<32x96xbf16>, vector<96x256xbf16>, vector<32x256xf32> -> vector<32x256xf32>
    %c0_20 = arith.constant 0 : index
    %c0_21 = arith.constant 0 : index
    %16 = vector.load %arg13[%c0_20, %c0_21] : memref<32x256xf32, #tpu.memory_space<vmem>>, vector<32x256xf32>
    tpu.vector_store %arg13[%c0_20, %c0_21], %15 {strides = array<i32>} : memref<32x256xf32, #tpu.memory_space<vmem>>, vector<32x256xf32>,
    %c0_22 = arith.constant 0 : index
    %c0_23 = arith.constant 0 : index
    %17 = vector.load %arg14[%c0_22, %c0_23] : memref<32x256xf32, #tpu.memory_space<vmem>>, vector<30x256xf32>
    %c2_24 = arith.constant 2 : index
    %c0_25 = arith.constant 0 : index
    %18 = vector.load %arg13[%c2_24, %c0_25] : memref<32x256xf32, #tpu.memory_space<vmem>>, vector<30x256xf32>
    %19 = arith.addf %17, %18 : vector<30x256xf32>
    %c0_26 = arith.constant 0 : index
    %c0_27 = arith.constant 0 : index
    %20 = vector.load %arg14[%c0_26, %c0_27] : memref<32x256xf32, #tpu.memory_space<vmem>>, vector<30x256xf32>
    tpu.vector_store %arg14[%c0_26, %c0_27], %19 {strides = array<i32>} : memref<32x256xf32, #tpu.memory_space<vmem>>, vector<30x256xf32>,
    %c3 = arith.constant 3 : index
    %c0_28 = arith.constant 0 : index
    %c0_29 = arith.constant 0 : index
    %21 = vector.load %arg2[%c3, %c0_28, %c0_29] : memref<5x96x256xbf16, #tpu.memory_space<vmem>>, vector<1x96x256xbf16>
    %22 = vector.shape_cast %21 : vector<1x96x256xbf16> to vector<96x256xbf16>
    %cst_30 = arith.constant dense<0.000000e+00> : vector<32x256xf32>
    %23 = tpu.matmul %0, %22, %cst_30 {dimension_numbers = #tpu.dot_dimension_numbers<[1], [0], [0], [1], [0, 0, 1, 1], [], []>} : vector<32x96xbf16>, vector<96x256xbf16>, vector<32x256xf32> -> vector<32x256xf32>
    %c0_31 = arith.constant 0 : index
    %c0_32 = arith.constant 0 : index
    %24 = vector.load %arg13[%c0_31, %c0_32] : memref<32x256xf32, #tpu.memory_space<vmem>>, vector<32x256xf32>
    tpu.vector_store %arg13[%c0_31, %c0_32], %23 {strides = array<i32>} : memref<32x256xf32, #tpu.memory_space<vmem>>, vector<32x256xf32>,
    %c0_33 = arith.constant 0 : index
    %c0_34 = arith.constant 0 : index
    %25 = vector.load %arg14[%c0_33, %c0_34] : memref<32x256xf32, #tpu.memory_space<vmem>>, vector<29x256xf32>
    %c3_35 = arith.constant 3 : index
    %c0_36 = arith.constant 0 : index
    %26 = vector.load %arg13[%c3_35, %c0_36] : memref<32x256xf32, #tpu.memory_space<vmem>>, vector<29x256xf32>
    %27 = arith.addf %25, %26 : vector<29x256xf32>
    %c0_37 = arith.constant 0 : index
    %c0_38 = arith.constant 0 : index
    %28 = vector.load %arg14[%c0_37, %c0_38] : memref<32x256xf32, #tpu.memory_space<vmem>>, vector<29x256xf32>
    tpu.vector_store %arg14[%c0_37, %c0_38], %27 {strides = array<i32>} : memref<32x256xf32, #tpu.memory_space<vmem>>, vector<29x256xf32>,
    %c4 = arith.constant 4 : index
    %c0_39 = arith.constant 0 : index
    %c0_40 = arith.constant 0 : index
    %29 = vector.load %arg2[%c4, %c0_39, %c0_40] : memref<5x96x256xbf16, #tpu.memory_space<vmem>>, vector<1x96x256xbf16>
    %30 = vector.shape_cast %29 : vector<1x96x256xbf16> to vector<96x256xbf16>
    %cst_41 = arith.constant dense<0.000000e+00> : vector<32x256xf32>
    %31 = tpu.matmul %0, %30, %cst_41 {dimension_numbers = #tpu.dot_dimension_numbers<[1], [0], [0], [1], [0, 0, 1, 1], [], []>} : vector<32x96xbf16>, vector<96x256xbf16>, vector<32x256xf32> -> vector<32x256xf32>
    %c0_42 = arith.constant 0 : index
    %c0_43 = arith.constant 0 : index
    %32 = vector.load %arg13[%c0_42, %c0_43] : memref<32x256xf32, #tpu.memory_space<vmem>>, vector<32x256xf32>
    tpu.vector_store %arg13[%c0_42, %c0_43], %31 {strides = array<i32>} : memref<32x256xf32, #tpu.memory_space<vmem>>, vector<32x256xf32>,
    %c0_44 = arith.constant 0 : index
    %c0_45 = arith.constant 0 : index
    %33 = vector.load %arg14[%c0_44, %c0_45] : memref<32x256xf32, #tpu.memory_space<vmem>>, vector<28x256xf32>
    %c4_46 = arith.constant 4 : index
    %c0_47 = arith.constant 0 : index
    %34 = vector.load %arg13[%c4_46, %c0_47] : memref<32x256xf32, #tpu.memory_space<vmem>>, vector<28x256xf32>
    %35 = arith.addf %33, %34 : vector<28x256xf32>
    %c0_48 = arith.constant 0 : index
    %c0_49 = arith.constant 0 : index
    %36 = vector.load %arg14[%c0_48, %c0_49] : memref<32x256xf32, #tpu.memory_space<vmem>>, vector<28x256xf32>
    tpu.vector_store %arg14[%c0_48, %c0_49], %35 {strides = array<i32>} : memref<32x256xf32, #tpu.memory_space<vmem>>, vector<28x256xf32>,
    %c0_50 = arith.constant 0 : index
    %c0_51 = arith.constant 0 : index
    %37 = vector.load %arg14[%c0_50, %c0_51] : memref<32x256xf32, #tpu.memory_space<vmem>>, vector<32x256xf32>
    %c0_52 = arith.constant 0 : index
    %c0_53 = arith.constant 0 : index
    %38 = vector.load %arg3[%c0_52, %c0_53] : memref<1x256xf32, #tpu.memory_space<vmem>>, vector<1x256xf32>
    %39 = vector.broadcast %38 : vector<1x256xf32> to vector<32x256xf32>
    %40 = arith.addf %37, %39 : vector<32x256xf32>
    %cst_54 = arith.constant 0.000000e+00 : f32
    %41 = vector.broadcast %cst_54 : f32 to vector<32x256xf32>
    %42 = arith.maximumf %40, %41 : vector<32x256xf32>
    %43 = vector.shape_cast %42 : vector<32x256xf32> to vector<16x2x256xf32>
    %cst_55 = arith.constant dense<0xFF800000> : vector<16x256xf32>
    %44 = vector.multi_reduction <maximumf>, %43, %cst_55 [1] : vector<16x2x256xf32> to vector<16x256xf32>
    %45 = vector.extract_strided_slice %44 {offsets = [0, 0], sizes = [16, 128], strides = [1, 1]} : vector<16x256xf32> to vector<16x128xf32>
    %46 = vector.extract_strided_slice %44 {offsets = [0, 128], sizes = [16, 128], strides = [1, 1]} : vector<16x256xf32> to vector<16x128xf32>
    %47 = arith.maximumf %45, %46 : vector<16x128xf32>
    %48 = arith.truncf %47 : vector<16x128xf32> to vector<16x128xbf16>
    %c0_56 = arith.constant 0 : index
    %c0_57 = arith.constant 0 : index
    %c0_58 = arith.constant 0 : index
    %49 = vector.load %arg4[%c0_56, %c0_57, %c0_58] : memref<5x128x256xbf16, #tpu.memory_space<vmem>>, vector<1x128x256xbf16>
    %50 = vector.shape_cast %49 : vector<1x128x256xbf16> to vector<128x256xbf16>
    %cst_59 = arith.constant dense<0.000000e+00> : vector<16x256xf32>
    %51 = tpu.matmul %48, %50, %cst_59 {dimension_numbers = #tpu.dot_dimension_numbers<[1], [0], [0], [1], [0, 0, 1, 1], [], []>} : vector<16x128xbf16>, vector<128x256xbf16>, vector<16x256xf32> -> vector<16x256xf32>
    %c0_60 = arith.constant 0 : index
    %c0_61 = arith.constant 0 : index
    %52 = vector.load %arg16[%c0_60, %c0_61] : memref<16x256xf32, #tpu.memory_space<vmem>>, vector<16x256xf32>
    tpu.vector_store %arg16[%c0_60, %c0_61], %51 {strides = array<i32>} : memref<16x256xf32, #tpu.memory_space<vmem>>, vector<16x256xf32>,
    %c1_62 = arith.constant 1 : index
    %c0_63 = arith.constant 0 : index
    %c0_64 = arith.constant 0 : index
    %53 = vector.load %arg4[%c1_62, %c0_63, %c0_64] : memref<5x128x256xbf16, #tpu.memory_space<vmem>>, vector<1x128x256xbf16>
    %54 = vector.shape_cast %53 : vector<1x128x256xbf16> to vector<128x256xbf16>
    %cst_65 = arith.constant dense<0.000000e+00> : vector<16x256xf32>
    %55 = tpu.matmul %48, %54, %cst_65 {dimension_numbers = #tpu.dot_dimension_numbers<[1], [0], [0], [1], [0, 0, 1, 1], [], []>} : vector<16x128xbf16>, vector<128x256xbf16>, vector<16x256xf32> -> vector<16x256xf32>
    %c0_66 = arith.constant 0 : index
    %c0_67 = arith.constant 0 : index
    %56 = vector.load %arg15[%c0_66, %c0_67] : memref<16x256xf32, #tpu.memory_space<vmem>>, vector<16x256xf32>
    tpu.vector_store %arg15[%c0_66, %c0_67], %55 {strides = array<i32>} : memref<16x256xf32, #tpu.memory_space<vmem>>, vector<16x256xf32>,
    %c0_68 = arith.constant 0 : index
    %c0_69 = arith.constant 0 : index
    %57 = vector.load %arg16[%c0_68, %c0_69] : memref<16x256xf32, #tpu.memory_space<vmem>>, vector<15x256xf32>
    %c1_70 = arith.constant 1 : index
    %c0_71 = arith.constant 0 : index
    %58 = vector.load %arg15[%c1_70, %c0_71] : memref<16x256xf32, #tpu.memory_space<vmem>>, vector<15x256xf32>
    %59 = arith.addf %57, %58 : vector<15x256xf32>
    %c0_72 = arith.constant 0 : index
    %c0_73 = arith.constant 0 : index
    %60 = vector.load %arg16[%c0_72, %c0_73] : memref<16x256xf32, #tpu.memory_space<vmem>>, vector<15x256xf32>
    tpu.vector_store %arg16[%c0_72, %c0_73], %59 {strides = array<i32>} : memref<16x256xf32, #tpu.memory_space<vmem>>, vector<15x256xf32>,
    %c2_74 = arith.constant 2 : index
    %c0_75 = arith.constant 0 : index
    %c0_76 = arith.constant 0 : index
    %61 = vector.load %arg4[%c2_74, %c0_75, %c0_76] : memref<5x128x256xbf16, #tpu.memory_space<vmem>>, vector<1x128x256xbf16>
    %62 = vector.shape_cast %61 : vector<1x128x256xbf16> to vector<128x256xbf16>
    %cst_77 = arith.constant dense<0.000000e+00> : vector<16x256xf32>
    %63 = tpu.matmul %48, %62, %cst_77 {dimension_numbers = #tpu.dot_dimension_numbers<[1], [0], [0], [1], [0, 0, 1, 1], [], []>} : vector<16x128xbf16>, vector<128x256xbf16>, vector<16x256xf32> -> vector<16x256xf32>
    %c0_78 = arith.constant 0 : index
    %c0_79 = arith.constant 0 : index
    %64 = vector.load %arg15[%c0_78, %c0_79] : memref<16x256xf32, #tpu.memory_space<vmem>>, vector<16x256xf32>
    tpu.vector_store %arg15[%c0_78, %c0_79], %63 {strides = array<i32>} : memref<16x256xf32, #tpu.memory_space<vmem>>, vector<16x256xf32>,
    %c0_80 = arith.constant 0 : index
    %c0_81 = arith.constant 0 : index
    %65 = vector.load %arg16[%c0_80, %c0_81] : memref<16x256xf32, #tpu.memory_space<vmem>>, vector<14x256xf32>
    %c2_82 = arith.constant 2 : index
    %c0_83 = arith.constant 0 : index
    %66 = vector.load %arg15[%c2_82, %c0_83] : memref<16x256xf32, #tpu.memory_space<vmem>>, vector<14x256xf32>
    %67 = arith.addf %65, %66 : vector<14x256xf32>
    %c0_84 = arith.constant 0 : index
    %c0_85 = arith.constant 0 : index
    %68 = vector.load %arg16[%c0_84, %c0_85] : memref<16x256xf32, #tpu.memory_space<vmem>>, vector<14x256xf32>
    tpu.vector_store %arg16[%c0_84, %c0_85], %67 {strides = array<i32>} : memref<16x256xf32, #tpu.memory_space<vmem>>, vector<14x256xf32>,
    %c3_86 = arith.constant 3 : index
    %c0_87 = arith.constant 0 : index
    %c0_88 = arith.constant 0 : index
    %69 = vector.load %arg4[%c3_86, %c0_87, %c0_88] : memref<5x128x256xbf16, #tpu.memory_space<vmem>>, vector<1x128x256xbf16>
    %70 = vector.shape_cast %69 : vector<1x128x256xbf16> to vector<128x256xbf16>
    %cst_89 = arith.constant dense<0.000000e+00> : vector<16x256xf32>
    %71 = tpu.matmul %48, %70, %cst_89 {dimension_numbers = #tpu.dot_dimension_numbers<[1], [0], [0], [1], [0, 0, 1, 1], [], []>} : vector<16x128xbf16>, vector<128x256xbf16>, vector<16x256xf32> -> vector<16x256xf32>
    %c0_90 = arith.constant 0 : index
    %c0_91 = arith.constant 0 : index
    %72 = vector.load %arg15[%c0_90, %c0_91] : memref<16x256xf32, #tpu.memory_space<vmem>>, vector<16x256xf32>
    tpu.vector_store %arg15[%c0_90, %c0_91], %71 {strides = array<i32>} : memref<16x256xf32, #tpu.memory_space<vmem>>, vector<16x256xf32>,
    %c0_92 = arith.constant 0 : index
    %c0_93 = arith.constant 0 : index
    %73 = vector.load %arg16[%c0_92, %c0_93] : memref<16x256xf32, #tpu.memory_space<vmem>>, vector<13x256xf32>
    %c3_94 = arith.constant 3 : index
    %c0_95 = arith.constant 0 : index
    %74 = vector.load %arg15[%c3_94, %c0_95] : memref<16x256xf32, #tpu.memory_space<vmem>>, vector<13x256xf32>
    %75 = arith.addf %73, %74 : vector<13x256xf32>
    %c0_96 = arith.constant 0 : index
    %c0_97 = arith.constant 0 : index
    %76 = vector.load %arg16[%c0_96, %c0_97] : memref<16x256xf32, #tpu.memory_space<vmem>>, vector<13x256xf32>
    tpu.vector_store %arg16[%c0_96, %c0_97], %75 {strides = array<i32>} : memref<16x256xf32, #tpu.memory_space<vmem>>, vector<13x256xf32>,
    %c4_98 = arith.constant 4 : index
    %c0_99 = arith.constant 0 : index
    %c0_100 = arith.constant 0 : index
    %77 = vector.load %arg4[%c4_98, %c0_99, %c0_100] : memref<5x128x256xbf16, #tpu.memory_space<vmem>>, vector<1x128x256xbf16>
    %78 = vector.shape_cast %77 : vector<1x128x256xbf16> to vector<128x256xbf16>
    %cst_101 = arith.constant dense<0.000000e+00> : vector<16x256xf32>
    %79 = tpu.matmul %48, %78, %cst_101 {dimension_numbers = #tpu.dot_dimension_numbers<[1], [0], [0], [1], [0, 0, 1, 1], [], []>} : vector<16x128xbf16>, vector<128x256xbf16>, vector<16x256xf32> -> vector<16x256xf32>
    %c0_102 = arith.constant 0 : index
    %c0_103 = arith.constant 0 : index
    %80 = vector.load %arg15[%c0_102, %c0_103] : memref<16x256xf32, #tpu.memory_space<vmem>>, vector<16x256xf32>
    tpu.vector_store %arg15[%c0_102, %c0_103], %79 {strides = array<i32>} : memref<16x256xf32, #tpu.memory_space<vmem>>, vector<16x256xf32>,
    %c0_104 = arith.constant 0 : index
    %c0_105 = arith.constant 0 : index
    %81 = vector.load %arg16[%c0_104, %c0_105] : memref<16x256xf32, #tpu.memory_space<vmem>>, vector<12x256xf32>
    %c4_106 = arith.constant 4 : index
    %c0_107 = arith.constant 0 : index
    %82 = vector.load %arg15[%c4_106, %c0_107] : memref<16x256xf32, #tpu.memory_space<vmem>>, vector<12x256xf32>
    %83 = arith.addf %81, %82 : vector<12x256xf32>
    %c0_108 = arith.constant 0 : index
    %c0_109 = arith.constant 0 : index
    %84 = vector.load %arg16[%c0_108, %c0_109] : memref<16x256xf32, #tpu.memory_space<vmem>>, vector<12x256xf32>
    tpu.vector_store %arg16[%c0_108, %c0_109], %83 {strides = array<i32>} : memref<16x256xf32, #tpu.memory_space<vmem>>, vector<12x256xf32>,
    %c0_110 = arith.constant 0 : index
    %c0_111 = arith.constant 0 : index
    %85 = vector.load %arg16[%c0_110, %c0_111] : memref<16x256xf32, #tpu.memory_space<vmem>>, vector<16x256xf32>
    %c0_112 = arith.constant 0 : index
    %c0_113 = arith.constant 0 : index
    %86 = vector.load %arg5[%c0_112, %c0_113] : memref<1x256xf32, #tpu.memory_space<vmem>>, vector<1x256xf32>
    %87 = vector.broadcast %86 : vector<1x256xf32> to vector<16x256xf32>
    %88 = arith.addf %85, %87 : vector<16x256xf32>
    %cst_114 = arith.constant 0.000000e+00 : f32
    %89 = vector.broadcast %cst_114 : f32 to vector<16x256xf32>
    %90 = arith.maximumf %88, %89 : vector<16x256xf32>
    %91 = vector.shape_cast %90 : vector<16x256xf32> to vector<8x2x256xf32>
    %cst_115 = arith.constant dense<0xFF800000> : vector<8x256xf32>
    %92 = vector.multi_reduction <maximumf>, %91, %cst_115 [1] : vector<8x2x256xf32> to vector<8x256xf32>
    %93 = vector.extract_strided_slice %92 {offsets = [0, 0], sizes = [8, 128], strides = [1, 1]} : vector<8x256xf32> to vector<8x128xf32>
    %94 = vector.extract_strided_slice %92 {offsets = [0, 128], sizes = [8, 128], strides = [1, 1]} : vector<8x256xf32> to vector<8x128xf32>
    %95 = arith.maximumf %93, %94 : vector<8x128xf32>
    %96 = arith.truncf %95 : vector<8x128xf32> to vector<8x128xbf16>
    %c0_116 = arith.constant 0 : index
    %c0_117 = arith.constant 0 : index
    %c0_118 = arith.constant 0 : index
    %97 = vector.load %arg6[%c0_116, %c0_117, %c0_118] : memref<5x128x128xbf16, #tpu.memory_space<vmem>>, vector<1x128x128xbf16>
    %98 = vector.shape_cast %97 : vector<1x128x128xbf16> to vector<128x128xbf16>
    %cst_119 = arith.constant dense<0.000000e+00> : vector<8x128xf32>
    %99 = tpu.matmul %96, %98, %cst_119 {dimension_numbers = #tpu.dot_dimension_numbers<[1], [0], [0], [1], [0, 0, 1, 1], [], []>} : vector<8x128xbf16>, vector<128x128xbf16>, vector<8x128xf32> -> vector<8x128xf32>
    %c0_120 = arith.constant 0 : index
    %c0_121 = arith.constant 0 : index
    %100 = vector.load %arg18[%c0_120, %c0_121] : memref<8x128xf32, #tpu.memory_space<vmem>>, vector<8x128xf32>
    tpu.vector_store %arg18[%c0_120, %c0_121], %99 {strides = array<i32>} : memref<8x128xf32, #tpu.memory_space<vmem>>, vector<8x128xf32>,
    %c1_122 = arith.constant 1 : index
    %c0_123 = arith.constant 0 : index
    %c0_124 = arith.constant 0 : index
    %101 = vector.load %arg6[%c1_122, %c0_123, %c0_124] : memref<5x128x128xbf16, #tpu.memory_space<vmem>>, vector<1x128x128xbf16>
    %102 = vector.shape_cast %101 : vector<1x128x128xbf16> to vector<128x128xbf16>
    %cst_125 = arith.constant dense<0.000000e+00> : vector<8x128xf32>
    %103 = tpu.matmul %96, %102, %cst_125 {dimension_numbers = #tpu.dot_dimension_numbers<[1], [0], [0], [1], [0, 0, 1, 1], [], []>} : vector<8x128xbf16>, vector<128x128xbf16>, vector<8x128xf32> -> vector<8x128xf32>
    %c0_126 = arith.constant 0 : index
    %c0_127 = arith.constant 0 : index
    %104 = vector.load %arg17[%c0_126, %c0_127] : memref<8x128xf32, #tpu.memory_space<vmem>>, vector<8x128xf32>
    tpu.vector_store %arg17[%c0_126, %c0_127], %103 {strides = array<i32>} : memref<8x128xf32, #tpu.memory_space<vmem>>, vector<8x128xf32>,
    %c0_128 = arith.constant 0 : index
    %c0_129 = arith.constant 0 : index
    %105 = vector.load %arg18[%c0_128, %c0_129] : memref<8x128xf32, #tpu.memory_space<vmem>>, vector<7x128xf32>
    %c1_130 = arith.constant 1 : index
    %c0_131 = arith.constant 0 : index
    %106 = vector.load %arg17[%c1_130, %c0_131] : memref<8x128xf32, #tpu.memory_space<vmem>>, vector<7x128xf32>
    %107 = arith.addf %105, %106 : vector<7x128xf32>
    %c0_132 = arith.constant 0 : index
    %c0_133 = arith.constant 0 : index
    %108 = vector.load %arg18[%c0_132, %c0_133] : memref<8x128xf32, #tpu.memory_space<vmem>>, vector<7x128xf32>
    tpu.vector_store %arg18[%c0_132, %c0_133], %107 {strides = array<i32>} : memref<8x128xf32, #tpu.memory_space<vmem>>, vector<7x128xf32>,
    %c2_134 = arith.constant 2 : index
    %c0_135 = arith.constant 0 : index
    %c0_136 = arith.constant 0 : index
    %109 = vector.load %arg6[%c2_134, %c0_135, %c0_136] : memref<5x128x128xbf16, #tpu.memory_space<vmem>>, vector<1x128x128xbf16>
    %110 = vector.shape_cast %109 : vector<1x128x128xbf16> to vector<128x128xbf16>
    %cst_137 = arith.constant dense<0.000000e+00> : vector<8x128xf32>
    %111 = tpu.matmul %96, %110, %cst_137 {dimension_numbers = #tpu.dot_dimension_numbers<[1], [0], [0], [1], [0, 0, 1, 1], [], []>} : vector<8x128xbf16>, vector<128x128xbf16>, vector<8x128xf32> -> vector<8x128xf32>
    %c0_138 = arith.constant 0 : index
    %c0_139 = arith.constant 0 : index
    %112 = vector.load %arg17[%c0_138, %c0_139] : memref<8x128xf32, #tpu.memory_space<vmem>>, vector<8x128xf32>
    tpu.vector_store %arg17[%c0_138, %c0_139], %111 {strides = array<i32>} : memref<8x128xf32, #tpu.memory_space<vmem>>, vector<8x128xf32>,
    %c0_140 = arith.constant 0 : index
    %c0_141 = arith.constant 0 : index
    %113 = vector.load %arg18[%c0_140, %c0_141] : memref<8x128xf32, #tpu.memory_space<vmem>>, vector<6x128xf32>
    %c2_142 = arith.constant 2 : index
    %c0_143 = arith.constant 0 : index
    %114 = vector.load %arg17[%c2_142, %c0_143] : memref<8x128xf32, #tpu.memory_space<vmem>>, vector<6x128xf32>
    %115 = arith.addf %113, %114 : vector<6x128xf32>
    %c0_144 = arith.constant 0 : index
    %c0_145 = arith.constant 0 : index
    %116 = vector.load %arg18[%c0_144, %c0_145] : memref<8x128xf32, #tpu.memory_space<vmem>>, vector<6x128xf32>
    tpu.vector_store %arg18[%c0_144, %c0_145], %115 {strides = array<i32>} : memref<8x128xf32, #tpu.memory_space<vmem>>, vector<6x128xf32>,
    %c3_146 = arith.constant 3 : index
    %c0_147 = arith.constant 0 : index
    %c0_148 = arith.constant 0 : index
    %117 = vector.load %arg6[%c3_146, %c0_147, %c0_148] : memref<5x128x128xbf16, #tpu.memory_space<vmem>>, vector<1x128x128xbf16>
    %118 = vector.shape_cast %117 : vector<1x128x128xbf16> to vector<128x128xbf16>
    %cst_149 = arith.constant dense<0.000000e+00> : vector<8x128xf32>
    %119 = tpu.matmul %96, %118, %cst_149 {dimension_numbers = #tpu.dot_dimension_numbers<[1], [0], [0], [1], [0, 0, 1, 1], [], []>} : vector<8x128xbf16>, vector<128x128xbf16>, vector<8x128xf32> -> vector<8x128xf32>
    %c0_150 = arith.constant 0 : index
    %c0_151 = arith.constant 0 : index
    %120 = vector.load %arg17[%c0_150, %c0_151] : memref<8x128xf32, #tpu.memory_space<vmem>>, vector<8x128xf32>
    tpu.vector_store %arg17[%c0_150, %c0_151], %119 {strides = array<i32>} : memref<8x128xf32, #tpu.memory_space<vmem>>, vector<8x128xf32>,
    %c0_152 = arith.constant 0 : index
    %c0_153 = arith.constant 0 : index
    %121 = vector.load %arg18[%c0_152, %c0_153] : memref<8x128xf32, #tpu.memory_space<vmem>>, vector<5x128xf32>
    %c3_154 = arith.constant 3 : index
    %c0_155 = arith.constant 0 : index
    %122 = vector.load %arg17[%c3_154, %c0_155] : memref<8x128xf32, #tpu.memory_space<vmem>>, vector<5x128xf32>
    %123 = arith.addf %121, %122 : vector<5x128xf32>
    %c0_156 = arith.constant 0 : index
    %c0_157 = arith.constant 0 : index
    %124 = vector.load %arg18[%c0_156, %c0_157] : memref<8x128xf32, #tpu.memory_space<vmem>>, vector<5x128xf32>
    tpu.vector_store %arg18[%c0_156, %c0_157], %123 {strides = array<i32>} : memref<8x128xf32, #tpu.memory_space<vmem>>, vector<5x128xf32>,
    %c4_158 = arith.constant 4 : index
    %c0_159 = arith.constant 0 : index
    %c0_160 = arith.constant 0 : index
    %125 = vector.load %arg6[%c4_158, %c0_159, %c0_160] : memref<5x128x128xbf16, #tpu.memory_space<vmem>>, vector<1x128x128xbf16>
    %126 = vector.shape_cast %125 : vector<1x128x128xbf16> to vector<128x128xbf16>
    %cst_161 = arith.constant dense<0.000000e+00> : vector<8x128xf32>
    %127 = tpu.matmul %96, %126, %cst_161 {dimension_numbers = #tpu.dot_dimension_numbers<[1], [0], [0], [1], [0, 0, 1, 1], [], []>} : vector<8x128xbf16>, vector<128x128xbf16>, vector<8x128xf32> -> vector<8x128xf32>
    %c0_162 = arith.constant 0 : index
    %c0_163 = arith.constant 0 : index
    %128 = vector.load %arg17[%c0_162, %c0_163] : memref<8x128xf32, #tpu.memory_space<vmem>>, vector<8x128xf32>
    tpu.vector_store %arg17[%c0_162, %c0_163], %127 {strides = array<i32>} : memref<8x128xf32, #tpu.memory_space<vmem>>, vector<8x128xf32>,
    %c0_164 = arith.constant 0 : index
    %c0_165 = arith.constant 0 : index
    %129 = vector.load %arg18[%c0_164, %c0_165] : memref<8x128xf32, #tpu.memory_space<vmem>>, vector<4x128xf32>
    %c4_166 = arith.constant 4 : index
    %c0_167 = arith.constant 0 : index
    %130 = vector.load %arg17[%c4_166, %c0_167] : memref<8x128xf32, #tpu.memory_space<vmem>>, vector<4x128xf32>
    %131 = arith.addf %129, %130 : vector<4x128xf32>
    %c0_168 = arith.constant 0 : index
    %c0_169 = arith.constant 0 : index
    %132 = vector.load %arg18[%c0_168, %c0_169] : memref<8x128xf32, #tpu.memory_space<vmem>>, vector<4x128xf32>
    tpu.vector_store %arg18[%c0_168, %c0_169], %131 {strides = array<i32>} : memref<8x128xf32, #tpu.memory_space<vmem>>, vector<4x128xf32>,
    %c0_170 = arith.constant 0 : index
    %c0_171 = arith.constant 0 : index
    %133 = vector.load %arg18[%c0_170, %c0_171] : memref<8x128xf32, #tpu.memory_space<vmem>>, vector<8x128xf32>
    %c0_172 = arith.constant 0 : index
    %c0_173 = arith.constant 0 : index
    %134 = vector.load %arg7[%c0_172, %c0_173] : memref<1x128xf32, #tpu.memory_space<vmem>>, vector<1x128xf32>
    %135 = vector.broadcast %134 : vector<1x128xf32> to vector<8x128xf32>
    %136 = arith.addf %133, %135 : vector<8x128xf32>
    %cst_174 = arith.constant 0.000000e+00 : f32
    %137 = vector.broadcast %cst_174 : f32 to vector<8x128xf32>
    %138 = arith.maximumf %136, %137 : vector<8x128xf32>
    %139 = arith.truncf %138 : vector<8x128xf32> to vector<8x128xbf16>
    %c0_175 = arith.constant 0 : index
    %c0_176 = arith.constant 0 : index
    %140 = vector.load %arg8[%c0_175, %c0_176] : memref<128x128xbf16, #tpu.memory_space<vmem>>, vector<128x128xbf16>
    %cst_177 = arith.constant dense<0.000000e+00> : vector<8x128xf32>
    %141 = tpu.matmul %139, %140, %cst_177 {dimension_numbers = #tpu.dot_dimension_numbers<[1], [0], [0], [1], [0, 0, 1, 1], [], []>} : vector<8x128xbf16>, vector<128x128xbf16>, vector<8x128xf32> -> vector<8x128xf32>
    %c0_178 = arith.constant 0 : index
    %c0_179 = arith.constant 0 : index
    %142 = vector.load %arg9[%c0_178, %c0_179] : memref<1x128xf32, #tpu.memory_space<vmem>>, vector<1x128xf32>
    %143 = vector.broadcast %142 : vector<1x128xf32> to vector<8x128xf32>
    %144 = arith.addf %141, %143 : vector<8x128xf32>
    %cst_180 = arith.constant 0.000000e+00 : f32
    %145 = vector.broadcast %cst_180 : f32 to vector<8x128xf32>
    %146 = arith.maximumf %144, %145 : vector<8x128xf32>
    %147 = arith.truncf %146 : vector<8x128xf32> to vector<8x128xbf16>
    %c0_181 = arith.constant 0 : index
    %c0_182 = arith.constant 0 : index
    %148 = vector.load %arg10[%c0_181, %c0_182] : memref<128x128xbf16, #tpu.memory_space<vmem>>, vector<128x128xbf16>
    %cst_183 = arith.constant dense<0.000000e+00> : vector<8x128xf32>
    %149 = tpu.matmul %147, %148, %cst_183 {dimension_numbers = #tpu.dot_dimension_numbers<[1], [0], [0], [1], [0, 0, 1, 1], [], []>} : vector<8x128xbf16>, vector<128x128xbf16>, vector<8x128xf32> -> vector<8x128xf32>
    %c0_184 = arith.constant 0 : index
    %c0_185 = arith.constant 0 : index
    %150 = vector.load %arg11[%c0_184, %c0_185] : memref<1x128xf32, #tpu.memory_space<vmem>>, vector<1x128xf32>
    %151 = vector.broadcast %150 : vector<1x128xf32> to vector<8x128xf32>
    %152 = arith.addf %149, %151 : vector<8x128xf32>
    %c0_186 = arith.constant 0 : index
    %c0_187 = arith.constant 0 : index
    %153 = vector.load %arg12[%c0_186, %c0_187] : memref<8x128xf32, #tpu.memory_space<vmem>>, vector<8x128xf32>
    tpu.vector_store %arg12[%c0_186, %c0_187], %152 {strides = array<i32>} : memref<8x128xf32, #tpu.memory_space<vmem>>, vector<8x128xf32>,
    return
  }
  func.func @transform_0(%arg0: i32) -> (i32, i32) {
    %c0_i32 = arith.constant 0 : i32
    %c0_i32_0 = arith.constant 0 : i32
    return %arg0, %c0_i32 : i32, i32
  }
  func.func @transform_1(%arg0: i32) -> (i32, i32, i32) {
    %c0_i32 = arith.constant 0 : i32
    %c0_i32_0 = arith.constant 0 : i32
    %c0_i32_1 = arith.constant 0 : i32
    %c0_i32_2 = arith.constant 0 : i32
    return %c0_i32, %c0_i32_0, %c0_i32_1 : i32, i32, i32
  }
  func.func @transform_2(%arg0: i32) -> (i32, i32) {
    %c0_i32 = arith.constant 0 : i32
    %c0_i32_0 = arith.constant 0 : i32
    %c0_i32_1 = arith.constant 0 : i32
    return %c0_i32, %c0_i32_0 : i32, i32
  }
  func.func @transform_3(%arg0: i32) -> (i32, i32, i32) {
    %c0_i32 = arith.constant 0 : i32
    %c0_i32_0 = arith.constant 0 : i32
    %c0_i32_1 = arith.constant 0 : i32
    %c0_i32_2 = arith.constant 0 : i32
    return %c0_i32, %c0_i32_0, %c0_i32_1 : i32, i32, i32
  }
  func.func @transform_4(%arg0: i32) -> (i32, i32) {
    %c0_i32 = arith.constant 0 : i32
    %c0_i32_0 = arith.constant 0 : i32
    %c0_i32_1 = arith.constant 0 : i32
    return %c0_i32, %c0_i32_0 : i32, i32
  }
  func.func @transform_5(%arg0: i32) -> (i32, i32, i32) {
    %c0_i32 = arith.constant 0 : i32
    %c0_i32_0 = arith.constant 0 : i32
    %c0_i32_1 = arith.constant 0 : i32
    %c0_i32_2 = arith.constant 0 : i32
    return %c0_i32, %c0_i32_0, %c0_i32_1 : i32, i32, i32
  }
  func.func @transform_6(%arg0: i32) -> (i32, i32) {
    %c0_i32 = arith.constant 0 : i32
    %c0_i32_0 = arith.constant 0 : i32
    %c0_i32_1 = arith.constant 0 : i32
    return %c0_i32, %c0_i32_0 : i32, i32
  }
  func.func @transform_7(%arg0: i32) -> (i32, i32) {
    %c0_i32 = arith.constant 0 : i32
    %c0_i32_0 = arith.constant 0 : i32
    %c0_i32_1 = arith.constant 0 : i32
    return %c0_i32, %c0_i32_0 : i32, i32
  }
  func.func @transform_8(%arg0: i32) -> (i32, i32) {
    %c0_i32 = arith.constant 0 : i32
    %c0_i32_0 = arith.constant 0 : i32
    %c0_i32_1 = arith.constant 0 : i32
    return %c0_i32, %c0_i32_0 : i32, i32
  }
  func.func @transform_9(%arg0: i32) -> (i32, i32) {
    %c0_i32 = arith.constant 0 : i32
    %c0_i32_0 = arith.constant 0 : i32
    %c0_i32_1 = arith.constant 0 : i32
    return %c0_i32, %c0_i32_0 : i32, i32
  }
  func.func @transform_10(%arg0: i32) -> (i32, i32) {
    %c0_i32 = arith.constant 0 : i32
    %c0_i32_0 = arith.constant 0 : i32
    %c0_i32_1 = arith.constant 0 : i32
    return %c0_i32, %c0_i32_0 : i32, i32
  }
  func.func @transform_11(%arg0: i32) -> (i32, i32) {
    %c0_i32 = arith.constant 0 : i32
    %c0_i32_0 = arith.constant 0 : i32
    return %arg0, %c0_i32 : i32, i32
  }
}

</mosaic_0001>

<llo_original>
// kernel: net_forward.1
$region0: #{net_forward.1}
  #allocation0 [shape = 'u32[]', space=smem, size = 0x4, offset = 0x4, fixed_abs, tag = 'smem constant byte address 0x4 - core index']
  #allocation1 [shape = 'u32[72,128]{1,0:T(1,128)}', space=vmem, size = 0x9000, scoped, tag = 'internal scratch']
  #allocation2 [shape = 'f32[32,256]{1,0:T(8,128)}', space=vmem, size = 0x8000, scoped, tag = 'scratch operand']
  #allocation3 [shape = 'f32[32,256]{1,0:T(8,128)}', space=vmem, size = 0x8000, scoped, tag = 'scratch operand']
  #allocation4 [shape = 'f32[16,256]{1,0:T(8,128)}', space=vmem, size = 0x4000, scoped, tag = 'scratch operand']
  #allocation5 [shape = 'f32[16,256]{1,0:T(8,128)}', space=vmem, size = 0x4000, scoped, tag = 'scratch operand']
  #allocation6 [shape = 'f32[8,128]{1,0:T(8,128)}', space=vmem, size = 0x1000, scoped, tag = 'scratch operand']
  #allocation7 [shape = 'f32[8,128]{1,0:T(8,128)}', space=vmem, size = 0x1000, scoped, tag = 'scratch operand']
  %s0 = inlined_call_operand.vmem [shape: bf16[64,96], index: 0, kind: input, shape index: {}]
  %s1 = inlined_call_operand.hbm [shape: bf16[5,96,256], index: 1, kind: input, shape index: {}]
  %s2 = inlined_call_operand.vmem [shape: f32[1,256], index: 2, kind: input, shape index: {}]
  %s3 = inlined_call_operand.vmem [shape: bf16[5,128,256], index: 3, kind: input, shape index: {}]
  %s4 = inlined_call_operand.vmem [shape: f32[1,256], index: 4, kind: input, shape index: {}]
  %s5 = inlined_call_operand.hbm [shape: bf16[5,128,128], index: 5, kind: input, shape index: {}]
  %s6 = inlined_call_operand.vmem [shape: f32[1,128], index: 6, kind: input, shape index: {}]
  %s7 = inlined_call_operand.vmem [shape: bf16[128,128], index: 7, kind: input, shape index: {}]
  %s8 = inlined_call_operand.vmem [shape: f32[1,128], index: 8, kind: input, shape index: {}]
  %s9 = inlined_call_operand.hbm [shape: bf16[128,128], index: 9, kind: input, shape index: {}]
  %s10 = inlined_call_operand.hbm [shape: f32[1,128], index: 10, kind: input, shape index: {}]
  %s11 = inlined_call_operand.vmem [shape: f32[16,128], index: 11, kind: output, shape index: {}]
  %s12 = sld [smem:[#allocation0]]
  $region93: #{net_forward.1} parent=0
    _
  %s14 = ssub.s32 1, %s12
  %s15 = scalar_select 0, %s14, %s12
  $region1: #{net_forward.1} parent=0
    #allocation8 [shape = 'u8[245760]{0}', space=vmem, size = 0x3c000, scoped, tag = 'input window, operand 1, single buffered']
    #allocation9 [shape = 's32[2]{0}', space=sflag, size = 0x8, scoped, tag = 'scoped memory for net_forward.1']
    #allocation10 [shape = 'u8[163840]{0}', space=vmem, size = 0x28000, scoped, tag = 'input window, operand 5, single buffered']
    #allocation11 [shape = 's32[1]{0}', space=sflag, size = 0x4, scoped, tag = 'scoped memory for net_forward.1']
    #allocation12 [shape = 'u8[32768]{0}', space=vmem, size = 0x8000, scoped, tag = 'input window, operand 9, single buffered']
    #allocation13 [shape = 'u8[512]{0}', space=vmem, size = 0x400, scoped, tag = 'input window, operand 10, single buffered']
    #allocation14 [shape = 's32[1]{0}', space=sflag, size = 0x4, scoped, tag = 'scoped memory for net_forward.1']
    %16 = vsyncpa [#allocation9], 0
    %17 = vsyncpa [#allocation11], 0
    %18 = vsyncpa [#allocation14], 0
    loop: start=0, step=1, limit=4
    $region2: #{net_forward.1} parent=1 // loop_pre_header
      _
    $region3: #{net_forward.1} parent=1 // loop_header
      %s20 = sphi 0, %s24
      %p21 = scmp.ge.s32.totalorder %s20, 4
      %s30 = sphi 0, %s32
      %s33 = sphi 0, %s30
      %s34 = sphi 0, %s33
      %s50 = sphi 0, %s34
      %s54 = sphi 0, %s54
      %s56 = sphi 0, %s54
      %s57 = sphi 0, %s56
      %s71 = sphi 0, %s57
      %s75 = sphi 0, %s75
      %s77 = sphi 0, %s75
      %s78 = sphi 0, %s77
      %s92 = sphi 0, %s78
      %s96 = sphi 0, %s96
      %s98 = sphi 0, %s96
      %s99 = sphi 0, %s98
      %s113 = sphi 0, %s99
      %s117 = sphi 0, %s117
      %s119 = sphi 0, %s117
      %s120 = sphi 0, %s119
      %s134 = sphi 0, %s120
      %s138 = sphi 0, %s138
      %s140 = sphi 0, %s138
      %s141 = sphi 0, %s140
      %s155 = sphi 0, %s141
      %s159 = sphi 0, %s159
      %s161 = sphi 0, %s159
      %s162 = sphi 0, %s161
      %s176 = sphi 0, %s162
      %s180 = sphi 0, %s180
      %s182 = sphi 0, %s180
      %s183 = sphi 0, %s182
      %s197 = sphi 0, %s183
      %s201 = sphi 0, %s201
      %s203 = sphi 0, %s201
      %s204 = sphi 0, %s203
      %s218 = sphi 0, %s204
      %s222 = sphi 0, %s222
      %s224 = sphi 0, %s222
      %s225 = sphi 0, %s224
      %s239 = sphi 0, %s225
      %s243 = sphi 0, %s243
      %s245 = sphi 0, %s243
      %s246 = sphi 0, %s245
      %s260 = sphi 0, %s246
      %s266 = sphi 0, %s268
      %s269 = sphi 0, %s266
      %s270 = sphi 0, %s269
      %s286 = sphi 0, %s270
    $region4: #{net_forward.1} parent=1 // loop_header_branch
      %23 = sbr.rel (%p21) target = $region8
    $region5: #{net_forward.1} parent=1 // loop_body
      %s25 = ssub.s32 %s20, 1
      %s26 = ssub.s32 %s20, 2
      %s27 = sadd.s32 %s20, 1
      %s28 = ssub.s32 %s20, %s27
      %p29 = scmp.eq.s32.totalorder %s28, 0
      %s31 = sadd.s32 %s30, 1
      %s32 = scalar_select %p29, %s30, %s31
      %p35 = pneg %p29
      %p36 = scmp.eq.s32.totalorder %s20, 1
      %p37 = por %p35, %p36
      %p38 = scmp.ne.s32.totalorder %s30, %s33
      %p39 = scmp.eq.s32.totalorder %s20, 0
      %p40 = por %p38, %p39
      %p41 = scmp.ne.s32.totalorder %s30, %s33
      %p42 = scmp.eq.s32.totalorder %s25, 1
      %p43 = por %p41, %p42
      %p44 = scmp.ne.s32.totalorder %s33, %s34
      %p45 = scmp.eq.s32.totalorder %s25, 0
      %p46 = por %p44, %p45
      %p47 = scmp.ne.s32.totalorder %s33, %s34
      %p48 = scmp.eq.s32.totalorder %s26, 1
      %p49 = por %p47, %p48
      %p51 = scmp.ne.s32.totalorder %s34, %s50
      %p52 = scmp.eq.s32.totalorder %s26, 0
      %p53 = por %p51, %p52
      %s55 = sadd.s32 %s54, 1
      %p58 = scmp.eq.s32.totalorder %s20, 1
      %p59 = scmp.ne.s32.totalorder %s54, %s56
      %p60 = scmp.eq.s32.totalorder %s20, 0
      %p61 = por %p59, %p60
      %p62 = scmp.ne.s32.totalorder %s54, %s56
      %p63 = scmp.eq.s32.totalorder %s25, 1
      %p64 = por %p62, %p63
      %p65 = scmp.ne.s32.totalorder %s56, %s57
      %p66 = scmp.eq.s32.totalorder %s25, 0
      %p67 = por %p65, %p66
      %p68 = scmp.ne.s32.totalorder %s56, %s57
      %p69 = scmp.eq.s32.totalorder %s26, 1
      %p70 = por %p68, %p69
      %p72 = scmp.ne.s32.totalorder %s57, %s71
      %p73 = scmp.eq.s32.totalorder %s26, 0
      %p74 = por %p72, %p73
      %s76 = sadd.s32 %s75, 1
      %p79 = scmp.eq.s32.totalorder %s20, 1
      %p80 = scmp.ne.s32.totalorder %s75, %s77
      %p81 = scmp.eq.s32.totalorder %s20, 0
      %p82 = por %p80, %p81
      %p83 = scmp.ne.s32.totalorder %s75, %s77
      %p84 = scmp.eq.s32.totalorder %s25, 1
      %p85 = por %p83, %p84
      %p86 = scmp.ne.s32.totalorder %s77, %s78
      %p87 = scmp.eq.s32.totalorder %s25, 0
      %p88 = por %p86, %p87
      %p89 = scmp.ne.s32.totalorder %s77, %s78
      %p90 = scmp.eq.s32.totalorder %s26, 1
      %p91 = por %p89, %p90
      %p93 = scmp.ne.s32.totalorder %s78, %s92
      %p94 = scmp.eq.s32.totalorder %s26, 0
      %p95 = por %p93, %p94
      %s97 = sadd.s32 %s96, 1
      %p100 = scmp.eq.s32.totalorder %s20, 1
      %p101 = scmp.ne.s32.totalorder %s96, %s98
      %p102 = scmp.eq.s32.totalorder %s20, 0
      %p103 = por %p101, %p102
      %p104 = scmp.ne.s32.totalorder %s96, %s98
      %p105 = scmp.eq.s32.totalorder %s25, 1
      %p106 = por %p104, %p105
      %p107 = scmp.ne.s32.totalorder %s98, %s99
      %p108 = scmp.eq.s32.totalorder %s25, 0
      %p109 = por %p107, %p108
      %p110 = scmp.ne.s32.totalorder %s98, %s99
      %p111 = scmp.eq.s32.totalorder %s26, 1
      %p112 = por %p110, %p111
      %p114 = scmp.ne.s32.totalorder %s99, %s113
      %p115 = scmp.eq.s32.totalorder %s26, 0
      %p116 = por %p114, %p115
      %s118 = sadd.s32 %s117, 1
      %p121 = scmp.eq.s32.totalorder %s20, 1
      %p122 = scmp.ne.s32.totalorder %s117, %s119
      %p123 = scmp.eq.s32.totalorder %s20, 0
      %p124 = por %p122, %p123
      %p125 = scmp.ne.s32.totalorder %s117, %s119
      %p126 = scmp.eq.s32.totalorder %s25, 1
      %p127 = por %p125, %p126
      %p128 = scmp.ne.s32.totalorder %s119, %s120
      %p129 = scmp.eq.s32.totalorder %s25, 0
      %p130 = por %p128, %p129
      %p131 = scmp.ne.s32.totalorder %s119, %s120
      %p132 = scmp.eq.s32.totalorder %s26, 1
      %p133 = por %p131, %p132
      %p135 = scmp.ne.s32.totalorder %s120, %s134
      %p136 = scmp.eq.s32.totalorder %s26, 0
      %p137 = por %p135, %p136
      %s139 = sadd.s32 %s138, 1
      %p142 = scmp.eq.s32.totalorder %s20, 1
      %p143 = scmp.ne.s32.totalorder %s138, %s140
      %p144 = scmp.eq.s32.totalorder %s20, 0
      %p145 = por %p143, %p144
      %p146 = scmp.ne.s32.totalorder %s138, %s140
      %p147 = scmp.eq.s32.totalorder %s25, 1
      %p148 = por %p146, %p147
      %p149 = scmp.ne.s32.totalorder %s140, %s141
      %p150 = scmp.eq.s32.totalorder %s25, 0
      %p151 = por %p149, %p150
      %p152 = scmp.ne.s32.totalorder %s140, %s141
      %p153 = scmp.eq.s32.totalorder %s26, 1
      %p154 = por %p152, %p153
      %p156 = scmp.ne.s32.totalorder %s141, %s155
      %p157 = scmp.eq.s32.totalorder %s26, 0
      %p158 = por %p156, %p157
      %s160 = sadd.s32 %s159, 1
      %p163 = scmp.eq.s32.totalorder %s20, 1
      %p164 = scmp.ne.s32.totalorder %s159, %s161
      %p165 = scmp.eq.s32.totalorder %s20, 0
      %p166 = por %p164, %p165
      %p167 = scmp.ne.s32.totalorder %s159, %s161
      %p168 = scmp.eq.s32.totalorder %s25, 1
      %p169 = por %p167, %p168
      %p170 = scmp.ne.s32.totalorder %s161, %s162
      %p171 = scmp.eq.s32.totalorder %s25, 0
      %p172 = por %p170, %p171
      %p173 = scmp.ne.s32.totalorder %s161, %s162
      %p174 = scmp.eq.s32.totalorder %s26, 1
      %p175 = por %p173, %p174
      %p177 = scmp.ne.s32.totalorder %s162, %s176
      %p178 = scmp.eq.s32.totalorder %s26, 0
      %p179 = por %p177, %p178
      %s181 = sadd.s32 %s180, 1
      %p184 = scmp.eq.s32.totalorder %s20, 1
      %p185 = scmp.ne.s32.totalorder %s180, %s182
      %p186 = scmp.eq.s32.totalorder %s20, 0
      %p187 = por %p185, %p186
      %p188 = scmp.ne.s32.totalorder %s180, %s182
      %p189 = scmp.eq.s32.totalorder %s25, 1
      %p190 = por %p188, %p189
      %p191 = scmp.ne.s32.totalorder %s182, %s183
      %p192 = scmp.eq.s32.totalorder %s25, 0
      %p193 = por %p191, %p192
      %p194 = scmp.ne.s32.totalorder %s182, %s183
      %p195 = scmp.eq.s32.totalorder %s26, 1
      %p196 = por %p194, %p195
      %p198 = scmp.ne.s32.totalorder %s183, %s197
      %p199 = scmp.eq.s32.totalorder %s26, 0
      %p200 = por %p198, %p199
      %s202 = sadd.s32 %s201, 1
      %p205 = scmp.eq.s32.totalorder %s20, 1
      %p206 = scmp.ne.s32.totalorder %s201, %s203
      %p207 = scmp.eq.s32.totalorder %s20, 0
      %p208 = por %p206, %p207
      %p209 = scmp.ne.s32.totalorder %s201, %s203
      %p210 = scmp.eq.s32.totalorder %s25, 1
      %p211 = por %p209, %p210
      %p212 = scmp.ne.s32.totalorder %s203, %s204
      %p213 = scmp.eq.s32.totalorder %s25, 0
      %p214 = por %p212, %p213
      %p215 = scmp.ne.s32.totalorder %s203, %s204
      %p216 = scmp.eq.s32.totalorder %s26, 1
      %p217 = por %p215, %p216
      %p219 = scmp.ne.s32.totalorder %s204, %s218
      %p220 = scmp.eq.s32.totalorder %s26, 0
      %p221 = por %p219, %p220
      %s223 = sadd.s32 %s222, 1
      %p226 = scmp.eq.s32.totalorder %s20, 1
      %p227 = scmp.ne.s32.totalorder %s222, %s224
      %p228 = scmp.eq.s32.totalorder %s20, 0
      %p229 = por %p227, %p228
      %p230 = scmp.ne.s32.totalorder %s222, %s224
      %p231 = scmp.eq.s32.totalorder %s25, 1
      %p232 = por %p230, %p231
      %p233 = scmp.ne.s32.totalorder %s224, %s225
      %p234 = scmp.eq.s32.totalorder %s25, 0
      %p235 = por %p233, %p234
      %p236 = scmp.ne.s32.totalorder %s224, %s225
      %p237 = scmp.eq.s32.totalorder %s26, 1
      %p238 = por %p236, %p237
      %p240 = scmp.ne.s32.totalorder %s225, %s239
      %p241 = scmp.eq.s32.totalorder %s26, 0
      %p242 = por %p240, %p241
      %s244 = sadd.s32 %s243, 1
      %p247 = scmp.eq.s32.totalorder %s20, 1
      %p248 = scmp.ne.s32.totalorder %s243, %s245
      %p249 = scmp.eq.s32.totalorder %s20, 0
      %p250 = por %p248, %p249
      %p251 = scmp.ne.s32.totalorder %s243, %s245
      %p252 = scmp.eq.s32.totalorder %s25, 1
      %p253 = por %p251, %p252
      %p254 = scmp.ne.s32.totalorder %s245, %s246
      %p255 = scmp.eq.s32.totalorder %s25, 0
      %p256 = por %p254, %p255
      %p257 = scmp.ne.s32.totalorder %s245, %s246
      %p258 = scmp.eq.s32.totalorder %s26, 1
      %p259 = por %p257, %p258
      %p261 = scmp.ne.s32.totalorder %s246, %s260
      %p262 = scmp.eq.s32.totalorder %s26, 0
      %p263 = por %p261, %p262
      %s264 = ssub.s32 %s20, %s27
      %p265 = scmp.eq.s32.totalorder %s264, 0
      %s267 = sadd.s32 %s266, 1
      %s268 = scalar_select %p265, %s266, %s267
      %p271 = pneg %p265
      %p272 = scmp.eq.s32.totalorder %s20, 1
      %p273 = por %p271, %p272
      %p274 = scmp.ne.s32.totalorder %s266, %s269
      %p275 = scmp.eq.s32.totalorder %s20, 0
      %p276 = por %p274, %p275
      %p277 = scmp.ne.s32.totalorder %s266, %s269
      %p278 = scmp.eq.s32.totalorder %s25, 1
      %p279 = por %p277, %p278
      %p280 = scmp.ne.s32.totalorder %s269, %s270
      %p281 = scmp.eq.s32.totalorder %s25, 0
      %p282 = por %p280, %p281
      %p283 = scmp.ne.s32.totalorder %s269, %s270
      %p284 = scmp.eq.s32.totalorder %s26, 1
      %p285 = por %p283, %p284
      %p287 = scmp.ne.s32.totalorder %s270, %s286
      %p288 = scmp.eq.s32.totalorder %s26, 0
      %p289 = por %p287, %p288
      %p290 = scmp.le.s32.totalorder 1, %s20
      %p291 = scmp.lt.s32.totalorder %s20, 3
      %p292 = pnand %p290, %p291
      %p293 = pneg %p292
      // Predicated region
      $region9: #{net_forward.1} parent=5 // pred_check
        _
      $region10: #{net_forward.1} parent=5 // pred_check_branch
        %295 = sbr.rel (%p292) target = $region12
      $region11: #{net_forward.1} parent=5 // pred_region
        %s296 = ssub.s32 %s20, 1
        // Predicated region
        $region13: #{net_forward.1} parent=11 // pred_check
          %p297 = pneg %p67
        $region14: #{net_forward.1} parent=11 // pred_check_branch
          %299 = sbr.rel (%p297) target = $region16
        $region15: #{net_forward.1} parent=11 // pred_region
          %301 = vsyncadd [#allocation9], 0
          %s302 = sshll.u32 %s1, 4
          %s303 = int_to_ptr.hbm [resolvable:$true] %s302
          %s304 = sshll.u32 [#allocation8], 4
          %s305 = int_to_ptr.vmem [resolvable:$true] %s304
          %310 = dma.hbm_to_vmem [thread:$0]  %s303, 7680, %s305, [#allocation9], 128, 128, 8
        $region16: #{net_forward.1} parent=11 // pred_fallthru
          _
        // Predicated region
        $region17: #{net_forward.1} parent=11 // pred_check
          %p311 = pneg %p88
        $region18: #{net_forward.1} parent=11 // pred_check_branch
          %313 = sbr.rel (%p311) target = $region20
        $region19: #{net_forward.1} parent=11 // pred_region
          _
        $region20: #{net_forward.1} parent=11 // pred_fallthru
          _
        // Predicated region
        $region21: #{net_forward.1} parent=11 // pred_check
          %p314 = pneg %p109
        $region22: #{net_forward.1} parent=11 // pred_check_branch
          %316 = sbr.rel (%p314) target = $region24
        $region23: #{net_forward.1} parent=11 // pred_region
          _
        $region24: #{net_forward.1} parent=11 // pred_fallthru
          _
        // Predicated region
        $region25: #{net_forward.1} parent=11 // pred_check
          %p317 = pneg %p130
        $region26: #{net_forward.1} parent=11 // pred_check_branch
          %319 = sbr.rel (%p317) target = $region28
        $region27: #{net_forward.1} parent=11 // pred_region
          _
        $region28: #{net_forward.1} parent=11 // pred_fallthru
          _
        // Predicated region
        $region29: #{net_forward.1} parent=11 // pred_check
          %p320 = pneg %p151
        $region30: #{net_forward.1} parent=11 // pred_check_branch
          %322 = sbr.rel (%p320) target = $region32
        $region31: #{net_forward.1} parent=11 // pred_region
          %324 = vsyncadd [#allocation11], 0
          %s325 = sshll.u32 %s5, 4
          %s326 = int_to_ptr.hbm [resolvable:$true] %s325
          %s327 = sshll.u32 [#allocation10], 4
          %s328 = int_to_ptr.vmem [resolvable:$true] %s327
          %333 = dma.hbm_to_vmem [thread:$0]  %s326, 5120, %s328, [#allocation11], 64, 64, 4
        $region32: #{net_forward.1} parent=11 // pred_fallthru
          _
        // Predicated region
        $region33: #{net_forward.1} parent=11 // pred_check
          %p334 = pneg %p172
        $region34: #{net_forward.1} parent=11 // pred_check_branch
          %336 = sbr.rel (%p334) target = $region36
        $region35: #{net_forward.1} parent=11 // pred_region
          _
        $region36: #{net_forward.1} parent=11 // pred_fallthru
          _
        // Predicated region
        $region37: #{net_forward.1} parent=11 // pred_check
          %p337 = pneg %p193
        $region38: #{net_forward.1} parent=11 // pred_check_branch
          %339 = sbr.rel (%p337) target = $region40
        $region39: #{net_forward.1} parent=11 // pred_region
          _
        $region40: #{net_forward.1} parent=11 // pred_fallthru
          _
        // Predicated region
        $region41: #{net_forward.1} parent=11 // pred_check
          %p340 = pneg %p214
        $region42: #{net_forward.1} parent=11 // pred_check_branch
          %342 = sbr.rel (%p340) target = $region44
        $region43: #{net_forward.1} parent=11 // pred_region
          _
        $region44: #{net_forward.1} parent=11 // pred_fallthru
          _
        // Predicated region
        $region45: #{net_forward.1} parent=11 // pred_check
          %p343 = pneg %p235
        $region46: #{net_forward.1} parent=11 // pred_check_branch
          %345 = sbr.rel (%p343) target = $region48
        $region47: #{net_forward.1} parent=11 // pred_region
          %347 = vsyncadd [#allocation11], 0
          %s348 = sshll.u32 %s9, 4
          %s349 = int_to_ptr.hbm [resolvable:$true] %s348
          %s350 = sshll.u32 [#allocation12], 4
          %s351 = int_to_ptr.vmem [resolvable:$true] %s350
          %356 = dma.hbm_to_vmem [thread:$0]  %s349, 1024, %s351, [#allocation11], 64, 64, 4
        $region48: #{net_forward.1} parent=11 // pred_fallthru
          _
        // Predicated region
        $region49: #{net_forward.1} parent=11 // pred_check
          %p357 = pneg %p256
        $region50: #{net_forward.1} parent=11 // pred_check_branch
          %359 = sbr.rel (%p357) target = $region52
        $region51: #{net_forward.1} parent=11 // pred_region
          %361 = vsyncadd [#allocation14], 0
          %s363 = sshll.u32 %s10, 4
          %s364 = int_to_ptr.hbm [resolvable:$true] %s363
          %s365 = sshll.u32 [#allocation13], 4
          %s366 = int_to_ptr.vmem [resolvable:$true] %s365
          %368 = dma.hbm_to_vmem [thread:$0]  %s364, 16, %s366, [#allocation14]
        $region52: #{net_forward.1} parent=11 // pred_fallthru
          _
      $region12: #{net_forward.1} parent=5 // pred_fallthru
        _
      %p369 = scmp.lt.s32.totalorder %s20, 2
      // Predicated region
      $region53: #{net_forward.1} parent=5 // pred_check
        %p370 = pneg %p369
      $region54: #{net_forward.1} parent=5 // pred_check_branch
        %372 = sbr.rel (%p370) target = $region56
      $region55: #{net_forward.1} parent=5 // pred_region
        // Predicated region
        $region57: #{net_forward.1} parent=55 // pred_check
          %p373 = pneg %p40
        $region58: #{net_forward.1} parent=55 // pred_check_branch
          %375 = sbr.rel (%p373) target = $region60
        $region59: #{net_forward.1} parent=55 // pred_region
          %s376 = smul.u32 4, %s20
          %p377 = scmp.lt.s32.totalorder %s376, 7
          %s378 = scalar_select %p377, %s376, 7
          %s379 = smul.addr %s378, 4
          %s380 = scalar_lea.vmem %s0, %s379
          %s381 = smul.u32 4, %s20
        $region60: #{net_forward.1} parent=55 // pred_fallthru
          _
      $region56: #{net_forward.1} parent=5 // pred_fallthru
        _
      %p382 = scmp.le.s32.totalorder 1, %s20
      %p383 = scmp.lt.s32.totalorder %s20, 3
      %p384 = pnand %p382, %p383
      %p385 = pneg %p384
      // Predicated region
      $region61: #{net_forward.1} parent=5 // pred_check
        _
      $region62: #{net_forward.1} parent=5 // pred_check_branch
        %387 = sbr.rel (%p384) target = $region64
      $region63: #{net_forward.1} parent=5 // pred_region
        %s388 = ssub.s32 %s20, 1
        // Predicated region
        $region65: #{net_forward.1} parent=63 // pred_check
          %p389 = pneg %p67
        $region66: #{net_forward.1} parent=63 // pred_check_branch
          %391 = sbr.rel (%p389) target = $region68
        $region67: #{net_forward.1} parent=63 // pred_region
          %393 = dma.done [#allocation9], 7680
        $region68: #{net_forward.1} parent=63 // pred_fallthru
          _
        // Predicated region
        $region69: #{net_forward.1} parent=63 // pred_check
          %p394 = pneg %p151
        $region70: #{net_forward.1} parent=63 // pred_check_branch
          %396 = sbr.rel (%p394) target = $region72
        $region71: #{net_forward.1} parent=63 // pred_region
          %398 = dma.done [#allocation11], 5120
        $region72: #{net_forward.1} parent=63 // pred_fallthru
          _
        // Predicated region
        $region73: #{net_forward.1} parent=63 // pred_check
          %p399 = pneg %p235
        $region74: #{net_forward.1} parent=63 // pred_check_branch
          %401 = sbr.rel (%p399) target = $region76
        $region75: #{net_forward.1} parent=63 // pred_region
          %403 = dma.done [#allocation11], 1024
        $region76: #{net_forward.1} parent=63 // pred_fallthru
          _
        // Predicated region
        $region77: #{net_forward.1} parent=63 // pred_check
          %p404 = pneg %p256
        $region78: #{net_forward.1} parent=63 // pred_check_branch
          %406 = sbr.rel (%p404) target = $region80
        $region79: #{net_forward.1} parent=63 // pred_region
          %408 = dma.done [#allocation14], 16
        $region80: #{net_forward.1} parent=63 // pred_fallthru
          _
        %s409 = smul.u32 4, %s25
        %p410 = scmp.lt.s32.totalorder %s409, 7
        %s411 = scalar_select %p410, %s409, 7
        %s412 = smul.addr %s411, 4
        %s413 = scalar_lea.vmem %s0, %s412
        %p414 = pneg %p46
        %p415 = pneg %p43
        %p416 = pneg %p67
        %p417 = pneg %p64
        %p418 = pneg %p88
        %p419 = pneg %p85
        %p420 = pneg %p109
        %p421 = pneg %p106
        %p422 = pneg %p130
        %p423 = pneg %p127
        %p424 = pneg %p151
        %p425 = pneg %p148
        %p426 = pneg %p172
        %p427 = pneg %p169
        %p428 = pneg %p193
        %p429 = pneg %p190
        %p430 = pneg %p214
        %p431 = pneg %p211
        %p432 = pneg %p235
        %p433 = pneg %p232
        %p434 = pneg %p256
        %p435 = pneg %p253
        %p436 = pneg %p282
        %p437 = pneg %p279
        %p438 = scmp.lt.s32.totalorder %s25, 1
        %s439 = scalar_select %p438, %s25, 1
        %s440 = smul.addr %s439, 8
        %s441 = scalar_lea.vmem %s11, %s440
        %s442 = smul.u32 4, %s25
        %p443 = scmp.lt.s32.totalorder %s442, 7
        %s444 = scalar_select %p443, %s442, 7
        %s445 = smul.addr %s444, 4
        %s446 = scalar_lea.vmem %s0, %s445
        %s447 = smul.u32 4, %s25
        %p448 = scmp.lt.s32.totalorder %s25, 1
        %s449 = scalar_select %p448, %s25, 1
        %s450 = smul.addr %s449, 8
        %s451 = scalar_lea.vmem %s11, %s450
        %v453 = vld [vmem:[%s446] sm:$0xf]
        %v454 = vld [vmem:[%s446 + $0x4] sm:$0xf]
        %v455 = vld [vmem:[%s446 + $0x8] sm:$0xf]
        %v456 = vld [vmem:[%s446 + $0xc] sm:$0xf]
        %v457 = vld [vmem:[#allocation8] sm:$0xff]
        %v458 = vld [vmem:[#allocation8 + $0x8] sm:$0xff]
        %v459 = vld [vmem:[#allocation8 + $0x10] sm:$0xff]
        %v460 = vld [vmem:[#allocation8 + $0x18] sm:$0xff]
        %v461 = vld [vmem:[#allocation8 + $0x20] sm:$0xff]
        %v462 = vld [vmem:[#allocation8 + $0x28] sm:$0xff]
        %v463 = vld [vmem:[#allocation8 + $0x30] sm:$0xff]
        %v464 = vld [vmem:[#allocation8 + $0x38] sm:$0xff]
        %v465 = vld [vmem:[#allocation8 + $0x40] sm:$0xff]
        %v466 = vld [vmem:[#allocation8 + $0x48] sm:$0xff]
        %v467 = vld [vmem:[#allocation8 + $0x50] sm:$0xff]
        %v468 = vld [vmem:[#allocation8 + $0x58] sm:$0xff]
        %v473 = vunpack.c.l.b16 %v453
        %v474 = vunpack.c.l.b16 %v454
        %v475 = vunpack.c.l.b16 %v455
        %v476 = vunpack.c.l.b16 %v456
        %v477 = vpack.c.b16 %v474, %v473
        %v478 = vpack.c.b16 %v476, %v475
        %v491 = vunpack.c.l.b16 %v457
        %v492 = vunpack.c.h.b16 %v457
        %v493 = vunpack.c.l.b16 %v458
        %v494 = vunpack.c.h.b16 %v458
        %v495 = vunpack.c.l.b16 %v459
        %v496 = vunpack.c.h.b16 %v459
        %v497 = vunpack.c.l.b16 %v460
        %v498 = vunpack.c.h.b16 %v460
        %v499 = vunpack.c.l.b16 %v461
        %v500 = vunpack.c.h.b16 %v461
        %v501 = vunpack.c.l.b16 %v462
        %v502 = vunpack.c.h.b16 %v462
        %v503 = vunpack.c.l.b16 %v463
        %v504 = vunpack.c.h.b16 %v463
        %v505 = vunpack.c.l.b16 %v464
        %v506 = vunpack.c.h.b16 %v464
        %v507 = vunpack.c.l.b16 %v465
        %v508 = vunpack.c.h.b16 %v465
        %v509 = vunpack.c.l.b16 %v466
        %v510 = vunpack.c.h.b16 %v466
        %v511 = vunpack.c.l.b16 %v467
        %v512 = vunpack.c.h.b16 %v467
        %v513 = vunpack.c.l.b16 %v468
        %v514 = vunpack.c.h.b16 %v468
        %v515 = vpack.c.b16 %v493, %v491
        %v516 = vpack.c.b16 %v494, %v492
        %v517 = vpack.c.b16 %v497, %v495
        %v518 = vpack.c.b16 %v498, %v496
        %v519 = vpack.c.b16 %v501, %v499
        %v520 = vpack.c.b16 %v502, %v500
        %v521 = vpack.c.b16 %v505, %v503
        %v522 = vpack.c.b16 %v506, %v504
        %v523 = vpack.c.b16 %v509, %v507
        %v524 = vpack.c.b16 %v510, %v508
        %v525 = vpack.c.b16 %v513, %v511
        %v526 = vpack.c.b16 %v514, %v512
        %vm539 = vcmask 785408
        %v541 = vsel %vm539, %v477, 0
        %v544 = vsel %vm539, %v478, 0
        %546 = vmatpush.bf16.msra.mxu0 0
        %547 = vmatpush.bf16.msra.mxu0 0
        %548 = vmatpush.bf16.msra.mxu0 %v525
        %549 = vmatpush.bf16.msra.mxu0 %v523
        %550 = vmatpush.bf16.msra.mxu0 %v521
        %551 = vmatpush.bf16.msra.mxu0 %v519
        %552 = vmatpush.bf16.msra.mxu0 %v517
        %553 = vmatpush.bf16.msra.mxu0 %v515
        %554 = vmatmul.bf16.gmra.mxu0 %v541
        %v555 = vpop.f32.mrf.mxu0
        %v556 = vadd.f32 0.0, %v555
        %v557 = vpop.f32.mrf.mxu0
        %v558 = vadd.f32 0.0, %v557
        %559 = vmatmul.bf16.gmra.mxu0 %v544
        %v560 = vpop.f32.mrf.mxu0
        %v561 = vadd.f32 0.0, %v560
        %v562 = vpop.f32.mrf.mxu0
        %v563 = vadd.f32 0.0, %v562
        %564 = vdwg.mxu0
        %565 = vmatpush.bf16.msra.mxu0 0
        %566 = vmatpush.bf16.msra.mxu0 0
        %567 = vmatpush.bf16.msra.mxu0 %v526
        %568 = vmatpush.bf16.msra.mxu0 %v524
        %569 = vmatpush.bf16.msra.mxu0 %v522
        %570 = vmatpush.bf16.msra.mxu0 %v520
        %571 = vmatpush.bf16.msra.mxu0 %v518
        %572 = vmatpush.bf16.msra.mxu0 %v516
        %573 = vmatmul.bf16.gmra.mxu0 %v541
        %v574 = vpop.f32.mrf.mxu0
        %v575 = vadd.f32 0.0, %v574
        %v576 = vpop.f32.mrf.mxu0
        %v577 = vadd.f32 0.0, %v576
        %578 = vmatmul.bf16.gmra.mxu0 %v544
        %v579 = vpop.f32.mrf.mxu0
        %v580 = vadd.f32 0.0, %v579
        %v581 = vpop.f32.mrf.mxu0
        %v582 = vadd.f32 0.0, %v581
        %583 = vdwg.mxu0
        %584 = vst [vmem:[#allocation3] sm:$0xff] %v556
        %585 = vst [vmem:[#allocation3 + $0x8] sm:$0xff] %v575
        %586 = vst [vmem:[#allocation3 + $0x10] sm:$0xff] %v558
        %587 = vst [vmem:[#allocation3 + $0x18] sm:$0xff] %v577
        %588 = vst [vmem:[#allocation3 + $0x20] sm:$0xff] %v561
        %589 = vst [vmem:[#allocation3 + $0x28] sm:$0xff] %v580
        %590 = vst [vmem:[#allocation3 + $0x30] sm:$0xff] %v563
        %591 = vst [vmem:[#allocation3 + $0x38] sm:$0xff] %v582
        %s592 = scalar_lea.vmem [#allocation8], 96
        %v593 = vld [vmem:[%s592] sm:$0xff]
        %v594 = vld [vmem:[%s592 + $0x8] sm:$0xff]
        %v595 = vld [vmem:[%s592 + $0x10] sm:$0xff]
        %v596 = vld [vmem:[%s592 + $0x18] sm:$0xff]
        %v597 = vld [vmem:[%s592 + $0x20] sm:$0xff]
        %v598 = vld [vmem:[%s592 + $0x28] sm:$0xff]
        %v599 = vld [vmem:[%s592 + $0x30] sm:$0xff]
        %v600 = vld [vmem:[%s592 + $0x38] sm:$0xff]
        %v601 = vld [vmem:[%s592 + $0x40] sm:$0xff]
        %v602 = vld [vmem:[%s592 + $0x48] sm:$0xff]
        %v603 = vld [vmem:[%s592 + $0x50] sm:$0xff]
        %v604 = vld [vmem:[%s592 + $0x58] sm:$0xff]
        %v617 = vunpack.c.l.b16 %v593
        %v618 = vunpack.c.h.b16 %v593
        %v619 = vunpack.c.l.b16 %v594
        %v620 = vunpack.c.h.b16 %v594
        %v621 = vunpack.c.l.b16 %v595
        %v622 = vunpack.c.h.b16 %v595
        %v623 = vunpack.c.l.b16 %v596
        %v624 = vunpack.c.h.b16 %v596
        %v625 = vunpack.c.l.b16 %v597
        %v626 = vunpack.c.h.b16 %v597
        %v627 = vunpack.c.l.b16 %v598
        %v628 = vunpack.c.h.b16 %v598
        %v629 = vunpack.c.l.b16 %v599
        %v630 = vunpack.c.h.b16 %v599
        %v631 = vunpack.c.l.b16 %v600
        %v632 = vunpack.c.h.b16 %v600
        %v633 = vunpack.c.l.b16 %v601
        %v634 = vunpack.c.h.b16 %v601
        %v635 = vunpack.c.l.b16 %v602
        %v636 = vunpack.c.h.b16 %v602
        %v637 = vunpack.c.l.b16 %v603
        %v638 = vunpack.c.h.b16 %v603
        %v639 = vunpack.c.l.b16 %v604
        %v640 = vunpack.c.h.b16 %v604
        %v641 = vpack.c.b16 %v619, %v617
        %v642 = vpack.c.b16 %v620, %v618
        %v643 = vpack.c.b16 %v623, %v621
        %v644 = vpack.c.b16 %v624, %v622
        %v645 = vpack.c.b16 %v627, %v625
        %v646 = vpack.c.b16 %v628, %v626
        %v647 = vpack.c.b16 %v631, %v629
        %v648 = vpack.c.b16 %v632, %v630
        %v649 = vpack.c.b16 %v635, %v633
        %v650 = vpack.c.b16 %v636, %v634
        %v651 = vpack.c.b16 %v639, %v637
        %v652 = vpack.c.b16 %v640, %v638
        %665 = vmatpush.bf16.msra.mxu0 0
        %666 = vmatpush.bf16.msra.mxu0 0
        %667 = vmatpush.bf16.msra.mxu0 %v651
        %668 = vmatpush.bf16.msra.mxu0 %v649
        %669 = vmatpush.bf16.msra.mxu0 %v647
        %670 = vmatpush.bf16.msra.mxu0 %v645
        %671 = vmatpush.bf16.msra.mxu0 %v643
        %672 = vmatpush.bf16.msra.mxu0 %v641
        %673 = vmatmul.bf16.gmra.mxu0 %v541
        %v674 = vpop.f32.mrf.mxu0
        %v675 = vadd.f32 0.0, %v674
        %v676 = vpop.f32.mrf.mxu0
        %v677 = vadd.f32 0.0, %v676
        %678 = vmatmul.bf16.gmra.mxu0 %v544
        %v679 = vpop.f32.mrf.mxu0
        %v680 = vadd.f32 0.0, %v679
        %v681 = vpop.f32.mrf.mxu0
        %v682 = vadd.f32 0.0, %v681
        %683 = vdwg.mxu0
        %684 = vmatpush.bf16.msra.mxu0 0
        %685 = vmatpush.bf16.msra.mxu0 0
        %686 = vmatpush.bf16.msra.mxu0 %v652
        %687 = vmatpush.bf16.msra.mxu0 %v650
        %688 = vmatpush.bf16.msra.mxu0 %v648
        %689 = vmatpush.bf16.msra.mxu0 %v646
        %690 = vmatpush.bf16.msra.mxu0 %v644
        %691 = vmatpush.bf16.msra.mxu0 %v642
        %692 = vmatmul.bf16.gmra.mxu0 %v541
        %v693 = vpop.f32.mrf.mxu0
        %v694 = vadd.f32 0.0, %v693
        %v695 = vpop.f32.mrf.mxu0
        %v696 = vadd.f32 0.0, %v695
        %697 = vmatmul.bf16.gmra.mxu0 %v544
        %v698 = vpop.f32.mrf.mxu0
        %v699 = vadd.f32 0.0, %v698
        %v700 = vpop.f32.mrf.mxu0
        %v701 = vadd.f32 0.0, %v700
        %702 = vdwg.mxu0
        %703 = vst [vmem:[#allocation2] sm:$0xff] %v675
        %704 = vst [vmem:[#allocation2 + $0x8] sm:$0xff] %v694
        %705 = vst [vmem:[#allocation2 + $0x10] sm:$0xff] %v677
        %706 = vst [vmem:[#allocation2 + $0x18] sm:$0xff] %v696
        %707 = vst [vmem:[#allocation2 + $0x20] sm:$0xff] %v680
        %708 = vst [vmem:[#allocation2 + $0x28] sm:$0xff] %v699
        %709 = vst [vmem:[#allocation2 + $0x30] sm:$0xff] %v682
        %710 = vst [vmem:[#allocation2 + $0x38] sm:$0xff] %v701
        %v711 = vld [vmem:[#allocation3] sm:$0xff]
        %v712 = vld [vmem:[#allocation3 + $0x8] sm:$0xff]
        %v713 = vld [vmem:[#allocation3 + $0x10] sm:$0xff]
        %v714 = vld [vmem:[#allocation3 + $0x18] sm:$0xff]
        %v715 = vld [vmem:[#allocation3 + $0x20] sm:$0xff]
        %v716 = vld [vmem:[#allocation3 + $0x28] sm:$0xff]
        %v717 = vld [vmem:[#allocation3 + $0x30] sm:$0x7f]
        %v718 = vld [vmem:[#allocation3 + $0x38] sm:$0x7f]
        %v719 = vld [vmem:[#allocation2] sm:$0xfe]
        %v720 = vld [vmem:[#allocation2 + $0x8] sm:$0xfe]
        %v721 = vld [vmem:[#allocation2 + $0x10] sm:$0xff]
        %v722 = vld [vmem:[#allocation2 + $0x18] sm:$0xff]
        %v723 = vld [vmem:[#allocation2 + $0x20] sm:$0xff]
        %v724 = vld [vmem:[#allocation2 + $0x28] sm:$0xff]
        %v725 = vld [vmem:[#allocation2 + $0x30] sm:$0xff]
        %v726 = vld [vmem:[#allocation2 + $0x38] sm:$0xff]
        %vm735 = vcmask 1046528
        %v736 = vrot.slane %v719, 1
        %v737 = vrot.slane %v721, 1
        %v738 = vsel %vm735, %v736, %v737
        %v739 = vrot.slane %v720, 1
        %v740 = vrot.slane %v722, 1
        %v741 = vsel %vm735, %v739, %v740
        %v742 = vrot.slane %v723, 1
        %v743 = vsel %vm735, %v737, %v742
        %v744 = vrot.slane %v724, 1
        %v745 = vsel %vm735, %v740, %v744
        %v746 = vrot.slane %v725, 1
        %v747 = vsel %vm735, %v742, %v746
        %v748 = vrot.slane %v726, 1
        %v749 = vsel %vm735, %v744, %v748
        %v758 = vadd.f32 %v711, %v738
        %v759 = vadd.f32 %v712, %v741
        %v760 = vadd.f32 %v713, %v743
        %v761 = vadd.f32 %v714, %v745
        %v762 = vadd.f32 %v715, %v747
        %v763 = vadd.f32 %v716, %v749
        %v764 = vadd.f32 %v717, %v746
        %v765 = vadd.f32 %v718, %v748
        %766 = vst [vmem:[#allocation3] sm:$0xff] %v758
        %767 = vst [vmem:[#allocation3 + $0x8] sm:$0xff] %v759
        %768 = vst [vmem:[#allocation3 + $0x10] sm:$0xff] %v760
        %769 = vst [vmem:[#allocation3 + $0x18] sm:$0xff] %v761
        %770 = vst [vmem:[#allocation3 + $0x20] sm:$0xff] %v762
        %771 = vst [vmem:[#allocation3 + $0x28] sm:$0xff] %v763
        %772 = vst [vmem:[#allocation3 + $0x30] sm:$0x7f] %v764
        %773 = vst [vmem:[#allocation3 + $0x38] sm:$0x7f] %v765
        %s774 = scalar_lea.vmem [#allocation8], 192
        %v775 = vld [vmem:[%s774] sm:$0xff]
        %v776 = vld [vmem:[%s774 + $0x8] sm:$0xff]
        %v777 = vld [vmem:[%s774 + $0x10] sm:$0xff]
        %v778 = vld [vmem:[%s774 + $0x18] sm:$0xff]
        %v779 = vld [vmem:[%s774 + $0x20] sm:$0xff]
        %v780 = vld [vmem:[%s774 + $0x28] sm:$0xff]
        %v781 = vld [vmem:[%s774 + $0x30] sm:$0xff]
        %v782 = vld [vmem:[%s774 + $0x38] sm:$0xff]
        %v783 = vld [vmem:[%s774 + $0x40] sm:$0xff]
        %v784 = vld [vmem:[%s774 + $0x48] sm:$0xff]
        %v785 = vld [vmem:[%s774 + $0x50] sm:$0xff]
        %v786 = vld [vmem:[%s774 + $0x58] sm:$0xff]
        %v799 = vunpack.c.l.b16 %v775
        %v800 = vunpack.c.h.b16 %v775
        %v801 = vunpack.c.l.b16 %v776
        %v802 = vunpack.c.h.b16 %v776
        %v803 = vunpack.c.l.b16 %v777
        %v804 = vunpack.c.h.b16 %v777
        %v805 = vunpack.c.l.b16 %v778
        %v806 = vunpack.c.h.b16 %v778
        %v807 = vunpack.c.l.b16 %v779
        %v808 = vunpack.c.h.b16 %v779
        %v809 = vunpack.c.l.b16 %v780
        %v810 = vunpack.c.h.b16 %v780
        %v811 = vunpack.c.l.b16 %v781
        %v812 = vunpack.c.h.b16 %v781
        %v813 = vunpack.c.l.b16 %v782
        %v814 = vunpack.c.h.b16 %v782
        %v815 = vunpack.c.l.b16 %v783
        %v816 = vunpack.c.h.b16 %v783
        %v817 = vunpack.c.l.b16 %v784
        %v818 = vunpack.c.h.b16 %v784
        %v819 = vunpack.c.l.b16 %v785
        %v820 = vunpack.c.h.b16 %v785
        %v821 = vunpack.c.l.b16 %v786
        %v822 = vunpack.c.h.b16 %v786
        %v823 = vpack.c.b16 %v801, %v799
        %v824 = vpack.c.b16 %v802, %v800
        %v825 = vpack.c.b16 %v805, %v803
        %v826 = vpack.c.b16 %v806, %v804
        %v827 = vpack.c.b16 %v809, %v807
        %v828 = vpack.c.b16 %v810, %v808
        %v829 = vpack.c.b16 %v813, %v811
        %v830 = vpack.c.b16 %v814, %v812
        %v831 = vpack.c.b16 %v817, %v815
        %v832 = vpack.c.b16 %v818, %v816
        %v833 = vpack.c.b16 %v821, %v819
        %v834 = vpack.c.b16 %v822, %v820
        %847 = vmatpush.bf16.msra.mxu0 0
        %848 = vmatpush.bf16.msra.mxu0 0
        %849 = vmatpush.bf16.msra.mxu0 %v833
        %850 = vmatpush.bf16.msra.mxu0 %v831
        %851 = vmatpush.bf16.msra.mxu0 %v829
        %852 = vmatpush.bf16.msra.mxu0 %v827
        %853 = vmatpush.bf16.msra.mxu0 %v825
        %854 = vmatpush.bf16.msra.mxu0 %v823
        %855 = vmatmul.bf16.gmra.mxu0 %v541
        %v856 = vpop.f32.mrf.mxu0
        %v857 = vadd.f32 0.0, %v856
        %v858 = vpop.f32.mrf.mxu0
        %v859 = vadd.f32 0.0, %v858
        %860 = vmatmul.bf16.gmra.mxu0 %v544
        %v861 = vpop.f32.mrf.mxu0
        %v862 = vadd.f32 0.0, %v861
        %v863 = vpop.f32.mrf.mxu0
        %v864 = vadd.f32 0.0, %v863
        %865 = vdwg.mxu0
        %866 = vmatpush.bf16.msra.mxu0 0
        %867 = vmatpush.bf16.msra.mxu0 0
        %868 = vmatpush.bf16.msra.mxu0 %v834
        %869 = vmatpush.bf16.msra.mxu0 %v832
        %870 = vmatpush.bf16.msra.mxu0 %v830
        %871 = vmatpush.bf16.msra.mxu0 %v828
        %872 = vmatpush.bf16.msra.mxu0 %v826
        %873 = vmatpush.bf16.msra.mxu0 %v824
        %874 = vmatmul.bf16.gmra.mxu0 %v541
        %v875 = vpop.f32.mrf.mxu0
        %v876 = vadd.f32 0.0, %v875
        %v877 = vpop.f32.mrf.mxu0
        %v878 = vadd.f32 0.0, %v877
        %879 = vmatmul.bf16.gmra.mxu0 %v544
        %v880 = vpop.f32.mrf.mxu0
        %v881 = vadd.f32 0.0, %v880
        %v882 = vpop.f32.mrf.mxu0
        %v883 = vadd.f32 0.0, %v882
        %884 = vdwg.mxu0
        %885 = vst [vmem:[#allocation2] sm:$0xff] %v857
        %886 = vst [vmem:[#allocation2 + $0x8] sm:$0xff] %v876
        %887 = vst [vmem:[#allocation2 + $0x10] sm:$0xff] %v859
        %888 = vst [vmem:[#allocation2 + $0x18] sm:$0xff] %v878
        %889 = vst [vmem:[#allocation2 + $0x20] sm:$0xff] %v862
        %890 = vst [vmem:[#allocation2 + $0x28] sm:$0xff] %v881
        %891 = vst [vmem:[#allocation2 + $0x30] sm:$0xff] %v864
        %892 = vst [vmem:[#allocation2 + $0x38] sm:$0xff] %v883
        %v893 = vld [vmem:[#allocation3] sm:$0xff]
        %v894 = vld [vmem:[#allocation3 + $0x8] sm:$0xff]
        %v895 = vld [vmem:[#allocation3 + $0x10] sm:$0xff]
        %v896 = vld [vmem:[#allocation3 + $0x18] sm:$0xff]
        %v897 = vld [vmem:[#allocation3 + $0x20] sm:$0xff]
        %v898 = vld [vmem:[#allocation3 + $0x28] sm:$0xff]
        %v899 = vld [vmem:[#allocation3 + $0x30] sm:$0x3f]
        %v900 = vld [vmem:[#allocation3 + $0x38] sm:$0x3f]
        %v901 = vld [vmem:[#allocation2] sm:$0xfc]
        %v902 = vld [vmem:[#allocation2 + $0x8] sm:$0xfc]
        %v903 = vld [vmem:[#allocation2 + $0x10] sm:$0xff]
        %v904 = vld [vmem:[#allocation2 + $0x18] sm:$0xff]
        %v905 = vld [vmem:[#allocation2 + $0x20] sm:$0xff]
        %v906 = vld [vmem:[#allocation2 + $0x28] sm:$0xff]
        %v907 = vld [vmem:[#allocation2 + $0x30] sm:$0xff]
        %v908 = vld [vmem:[#allocation2 + $0x38] sm:$0xff]
        %vm917 = vcmask 1045504
        %v918 = vrot.slane %v901, 2
        %v919 = vrot.slane %v903, 2
        %v920 = vsel %vm917, %v918, %v919
        %v921 = vrot.slane %v902, 2
        %v922 = vrot.slane %v904, 2
        %v923 = vsel %vm917, %v921, %v922
        %v924 = vrot.slane %v905, 2
        %v925 = vsel %vm917, %v919, %v924
        %v926 = vrot.slane %v906, 2
        %v927 = vsel %vm917, %v922, %v926
        %v928 = vrot.slane %v907, 2
        %v929 = vsel %vm917, %v924, %v928
        %v930 = vrot.slane %v908, 2
        %v931 = vsel %vm917, %v926, %v930
        %v940 = vadd.f32 %v893, %v920
        %v941 = vadd.f32 %v894, %v923
        %v942 = vadd.f32 %v895, %v925
        %v943 = vadd.f32 %v896, %v927
        %v944 = vadd.f32 %v897, %v929
        %v945 = vadd.f32 %v898, %v931
        %v946 = vadd.f32 %v899, %v928
        %v947 = vadd.f32 %v900, %v930
        %948 = vst [vmem:[#allocation3] sm:$0xff] %v940
        %949 = vst [vmem:[#allocation3 + $0x8] sm:$0xff] %v941
        %950 = vst [vmem:[#allocation3 + $0x10] sm:$0xff] %v942
        %951 = vst [vmem:[#allocation3 + $0x18] sm:$0xff] %v943
        %952 = vst [vmem:[#allocation3 + $0x20] sm:$0xff] %v944
        %953 = vst [vmem:[#allocation3 + $0x28] sm:$0xff] %v945
        %954 = vst [vmem:[#allocation3 + $0x30] sm:$0x3f] %v946
        %955 = vst [vmem:[#allocation3 + $0x38] sm:$0x3f] %v947
        %s956 = scalar_lea.vmem [#allocation8], 288
        %v957 = vld [vmem:[%s956] sm:$0xff]
        %v958 = vld [vmem:[%s956 + $0x8] sm:$0xff]
        %v959 = vld [vmem:[%s956 + $0x10] sm:$0xff]
        %v960 = vld [vmem:[%s956 + $0x18] sm:$0xff]
        %v961 = vld [vmem:[%s956 + $0x20] sm:$0xff]
        %v962 = vld [vmem:[%s956 + $0x28] sm:$0xff]
        %v963 = vld [vmem:[%s956 + $0x30] sm:$0xff]
        %v964 = vld [vmem:[%s956 + $0x38] sm:$0xff]
        %v965 = vld [vmem:[%s956 + $0x40] sm:$0xff]
        %v966 = vld [vmem:[%s956 + $0x48] sm:$0xff]
        %v967 = vld [vmem:[%s956 + $0x50] sm:$0xff]
        %v968 = vld [vmem:[%s956 + $0x58] sm:$0xff]
        %v981 = vunpack.c.l.b16 %v957
        %v982 = vunpack.c.h.b16 %v957
        %v983 = vunpack.c.l.b16 %v958
        %v984 = vunpack.c.h.b16 %v958
        %v985 = vunpack.c.l.b16 %v959
        %v986 = vunpack.c.h.b16 %v959
        %v987 = vunpack.c.l.b16 %v960
        %v988 = vunpack.c.h.b16 %v960
        %v989 = vunpack.c.l.b16 %v961
        %v990 = vunpack.c.h.b16 %v961
        %v991 = vunpack.c.l.b16 %v962
        %v992 = vunpack.c.h.b16 %v962
        %v993 = vunpack.c.l.b16 %v963
        %v994 = vunpack.c.h.b16 %v963
        %v995 = vunpack.c.l.b16 %v964
        %v996 = vunpack.c.h.b16 %v964
        %v997 = vunpack.c.l.b16 %v965
        %v998 = vunpack.c.h.b16 %v965
        %v999 = vunpack.c.l.b16 %v966
        %v1000 = vunpack.c.h.b16 %v966
        %v1001 = vunpack.c.l.b16 %v967
        %v1002 = vunpack.c.h.b16 %v967
        %v1003 = vunpack.c.l.b16 %v968
        %v1004 = vunpack.c.h.b16 %v968
        %v1005 = vpack.c.b16 %v983, %v981
        %v1006 = vpack.c.b16 %v984, %v982
        %v1007 = vpack.c.b16 %v987, %v985
        %v1008 = vpack.c.b16 %v988, %v986
        %v1009 = vpack.c.b16 %v991, %v989
        %v1010 = vpack.c.b16 %v992, %v990
        %v1011 = vpack.c.b16 %v995, %v993
        %v1012 = vpack.c.b16 %v996, %v994
        %v1013 = vpack.c.b16 %v999, %v997
        %v1014 = vpack.c.b16 %v1000, %v998
        %v1015 = vpack.c.b16 %v1003, %v1001
        %v1016 = vpack.c.b16 %v1004, %v1002
        %1029 = vmatpush.bf16.msra.mxu0 0
        %1030 = vmatpush.bf16.msra.mxu0 0
        %1031 = vmatpush.bf16.msra.mxu0 %v1015
        %1032 = vmatpush.bf16.msra.mxu0 %v1013
        %1033 = vmatpush.bf16.msra.mxu0 %v1011
        %1034 = vmatpush.bf16.msra.mxu0 %v1009
        %1035 = vmatpush.bf16.msra.mxu0 %v1007
        %1036 = vmatpush.bf16.msra.mxu0 %v1005
        %1037 = vmatmul.bf16.gmra.mxu0 %v541
        %v1038 = vpop.f32.mrf.mxu0
        %v1039 = vadd.f32 0.0, %v1038
        %v1040 = vpop.f32.mrf.mxu0
        %v1041 = vadd.f32 0.0, %v1040
        %1042 = vmatmul.bf16.gmra.mxu0 %v544
        %v1043 = vpop.f32.mrf.mxu0
        %v1044 = vadd.f32 0.0, %v1043
        %v1045 = vpop.f32.mrf.mxu0
        %v1046 = vadd.f32 0.0, %v1045
        %1047 = vdwg.mxu0
        %1048 = vmatpush.bf16.msra.mxu0 0
        %1049 = vmatpush.bf16.msra.mxu0 0
        %1050 = vmatpush.bf16.msra.mxu0 %v1016
        %1051 = vmatpush.bf16.msra.mxu0 %v1014
        %1052 = vmatpush.bf16.msra.mxu0 %v1012
        %1053 = vmatpush.bf16.msra.mxu0 %v1010
        %1054 = vmatpush.bf16.msra.mxu0 %v1008
        %1055 = vmatpush.bf16.msra.mxu0 %v1006
        %1056 = vmatmul.bf16.gmra.mxu0 %v541
        %v1057 = vpop.f32.mrf.mxu0
        %v1058 = vadd.f32 0.0, %v1057
        %v1059 = vpop.f32.mrf.mxu0
        %v1060 = vadd.f32 0.0, %v1059
        %1061 = vmatmul.bf16.gmra.mxu0 %v544
        %v1062 = vpop.f32.mrf.mxu0
        %v1063 = vadd.f32 0.0, %v1062
        %v1064 = vpop.f32.mrf.mxu0
        %v1065 = vadd.f32 0.0, %v1064
        %1066 = vdwg.mxu0
        %1067 = vst [vmem:[#allocation2] sm:$0xff] %v1039
        %1068 = vst [vmem:[#allocation2 + $0x8] sm:$0xff] %v1058
        %1069 = vst [vmem:[#allocation2 + $0x10] sm:$0xff] %v1041
        %1070 = vst [vmem:[#allocation2 + $0x18] sm:$0xff] %v1060
        %1071 = vst [vmem:[#allocation2 + $0x20] sm:$0xff] %v1044
        %1072 = vst [vmem:[#allocation2 + $0x28] sm:$0xff] %v1063
        %1073 = vst [vmem:[#allocation2 + $0x30] sm:$0xff] %v1046
        %1074 = vst [vmem:[#allocation2 + $0x38] sm:$0xff] %v1065
        %v1075 = vld [vmem:[#allocation3] sm:$0xff]
        %v1076 = vld [vmem:[#allocation3 + $0x8] sm:$0xff]
        %v1077 = vld [vmem:[#allocation3 + $0x10] sm:$0xff]
        %v1078 = vld [vmem:[#allocation3 + $0x18] sm:$0xff]
        %v1079 = vld [vmem:[#allocation3 + $0x20] sm:$0xff]
        %v1080 = vld [vmem:[#allocation3 + $0x28] sm:$0xff]
        %v1081 = vld [vmem:[#allocation3 + $0x30] sm:$0x1f]
        %v1082 = vld [vmem:[#allocation3 + $0x38] sm:$0x1f]
        %v1083 = vld [vmem:[#allocation2] sm:$0xf8]
        %v1084 = vld [vmem:[#allocation2 + $0x8] sm:$0xf8]
        %v1085 = vld [vmem:[#allocation2 + $0x10] sm:$0xff]
        %v1086 = vld [vmem:[#allocation2 + $0x18] sm:$0xff]
        %v1087 = vld [vmem:[#allocation2 + $0x20] sm:$0xff]
        %v1088 = vld [vmem:[#allocation2 + $0x28] sm:$0xff]
        %v1089 = vld [vmem:[#allocation2 + $0x30] sm:$0xff]
        %v1090 = vld [vmem:[#allocation2 + $0x38] sm:$0xff]
        %vm1099 = vcmask 1044480
        %v1100 = vrot.slane %v1083, 3
        %v1101 = vrot.slane %v1085, 3
        %v1102 = vsel %vm1099, %v1100, %v1101
        %v1103 = vrot.slane %v1084, 3
        %v1104 = vrot.slane %v1086, 3
        %v1105 = vsel %vm1099, %v1103, %v1104
        %v1106 = vrot.slane %v1087, 3
        %v1107 = vsel %vm1099, %v1101, %v1106
        %v1108 = vrot.slane %v1088, 3
        %v1109 = vsel %vm1099, %v1104, %v1108
        %v1110 = vrot.slane %v1089, 3
        %v1111 = vsel %vm1099, %v1106, %v1110
        %v1112 = vrot.slane %v1090, 3
        %v1113 = vsel %vm1099, %v1108, %v1112
        %v1122 = vadd.f32 %v1075, %v1102
        %v1123 = vadd.f32 %v1076, %v1105
        %v1124 = vadd.f32 %v1077, %v1107
        %v1125 = vadd.f32 %v1078, %v1109
        %v1126 = vadd.f32 %v1079, %v1111
        %v1127 = vadd.f32 %v1080, %v1113
        %v1128 = vadd.f32 %v1081, %v1110
        %v1129 = vadd.f32 %v1082, %v1112
        %1130 = vst [vmem:[#allocation3] sm:$0xff] %v1122
        %1131 = vst [vmem:[#allocation3 + $0x8] sm:$0xff] %v1123
        %1132 = vst [vmem:[#allocation3 + $0x10] sm:$0xff] %v1124
        %1133 = vst [vmem:[#allocation3 + $0x18] sm:$0xff] %v1125
        %1134 = vst [vmem:[#allocation3 + $0x20] sm:$0xff] %v1126
        %1135 = vst [vmem:[#allocation3 + $0x28] sm:$0xff] %v1127
        %1136 = vst [vmem:[#allocation3 + $0x30] sm:$0x1f] %v1128
        %1137 = vst [vmem:[#allocation3 + $0x38] sm:$0x1f] %v1129
        %s1138 = scalar_lea.vmem [#allocation8], 384
        %v1139 = vld [vmem:[%s1138] sm:$0xff]
        %v1140 = vld [vmem:[%s1138 + $0x8] sm:$0xff]
        %v1141 = vld [vmem:[%s1138 + $0x10] sm:$0xff]
        %v1142 = vld [vmem:[%s1138 + $0x18] sm:$0xff]
        %v1143 = vld [vmem:[%s1138 + $0x20] sm:$0xff]
        %v1144 = vld [vmem:[%s1138 + $0x28] sm:$0xff]
        %v1145 = vld [vmem:[%s1138 + $0x30] sm:$0xff]
        %v1146 = vld [vmem:[%s1138 + $0x38] sm:$0xff]
        %v1147 = vld [vmem:[%s1138 + $0x40] sm:$0xff]
        %v1148 = vld [vmem:[%s1138 + $0x48] sm:$0xff]
        %v1149 = vld [vmem:[%s1138 + $0x50] sm:$0xff]
        %v1150 = vld [vmem:[%s1138 + $0x58] sm:$0xff]
        %v1163 = vunpack.c.l.b16 %v1139
        %v1164 = vunpack.c.h.b16 %v1139
        %v1165 = vunpack.c.l.b16 %v1140
        %v1166 = vunpack.c.h.b16 %v1140
        %v1167 = vunpack.c.l.b16 %v1141
        %v1168 = vunpack.c.h.b16 %v1141
        %v1169 = vunpack.c.l.b16 %v1142
        %v1170 = vunpack.c.h.b16 %v1142
        %v1171 = vunpack.c.l.b16 %v1143
        %v1172 = vunpack.c.h.b16 %v1143
        %v1173 = vunpack.c.l.b16 %v1144
        %v1174 = vunpack.c.h.b16 %v1144
        %v1175 = vunpack.c.l.b16 %v1145
        %v1176 = vunpack.c.h.b16 %v1145
        %v1177 = vunpack.c.l.b16 %v1146
        %v1178 = vunpack.c.h.b16 %v1146
        %v1179 = vunpack.c.l.b16 %v1147
        %v1180 = vunpack.c.h.b16 %v1147
        %v1181 = vunpack.c.l.b16 %v1148
        %v1182 = vunpack.c.h.b16 %v1148
        %v1183 = vunpack.c.l.b16 %v1149
        %v1184 = vunpack.c.h.b16 %v1149
        %v1185 = vunpack.c.l.b16 %v1150
        %v1186 = vunpack.c.h.b16 %v1150
        %v1187 = vpack.c.b16 %v1165, %v1163
        %v1188 = vpack.c.b16 %v1166, %v1164
        %v1189 = vpack.c.b16 %v1169, %v1167
        %v1190 = vpack.c.b16 %v1170, %v1168
        %v1191 = vpack.c.b16 %v1173, %v1171
        %v1192 = vpack.c.b16 %v1174, %v1172
        %v1193 = vpack.c.b16 %v1177, %v1175
        %v1194 = vpack.c.b16 %v1178, %v1176
        %v1195 = vpack.c.b16 %v1181, %v1179
        %v1196 = vpack.c.b16 %v1182, %v1180
        %v1197 = vpack.c.b16 %v1185, %v1183
        %v1198 = vpack.c.b16 %v1186, %v1184
        %1211 = vmatpush.bf16.msra.mxu0 0
        %1212 = vmatpush.bf16.msra.mxu0 0
        %1213 = vmatpush.bf16.msra.mxu0 %v1197
        %1214 = vmatpush.bf16.msra.mxu0 %v1195
        %1215 = vmatpush.bf16.msra.mxu0 %v1193
        %1216 = vmatpush.bf16.msra.mxu0 %v1191
        %1217 = vmatpush.bf16.msra.mxu0 %v1189
        %1218 = vmatpush.bf16.msra.mxu0 %v1187
        %1219 = vmatmul.bf16.gmra.mxu0 %v541
        %v1220 = vpop.f32.mrf.mxu0
        %v1221 = vadd.f32 0.0, %v1220
        %v1222 = vpop.f32.mrf.mxu0
        %v1223 = vadd.f32 0.0, %v1222
        %1224 = vmatmul.bf16.gmra.mxu0 %v544
        %v1225 = vpop.f32.mrf.mxu0
        %v1226 = vadd.f32 0.0, %v1225
        %v1227 = vpop.f32.mrf.mxu0
        %v1228 = vadd.f32 0.0, %v1227
        %1229 = vdwg.mxu0
        %1230 = vmatpush.bf16.msra.mxu0 0
        %1231 = vmatpush.bf16.msra.mxu0 0
        %1232 = vmatpush.bf16.msra.mxu0 %v1198
        %1233 = vmatpush.bf16.msra.mxu0 %v1196
        %1234 = vmatpush.bf16.msra.mxu0 %v1194
        %1235 = vmatpush.bf16.msra.mxu0 %v1192
        %1236 = vmatpush.bf16.msra.mxu0 %v1190
        %1237 = vmatpush.bf16.msra.mxu0 %v1188
        %1238 = vmatmul.bf16.gmra.mxu0 %v541
        %v1239 = vpop.f32.mrf.mxu0
        %v1240 = vadd.f32 0.0, %v1239
        %v1241 = vpop.f32.mrf.mxu0
        %v1242 = vadd.f32 0.0, %v1241
        %1243 = vmatmul.bf16.gmra.mxu0 %v544
        %v1244 = vpop.f32.mrf.mxu0
        %v1245 = vadd.f32 0.0, %v1244
        %v1246 = vpop.f32.mrf.mxu0
        %v1247 = vadd.f32 0.0, %v1246
        %1248 = vdwg.mxu0
        %1249 = vst [vmem:[#allocation2] sm:$0xff] %v1221
        %1250 = vst [vmem:[#allocation2 + $0x8] sm:$0xff] %v1240
        %1251 = vst [vmem:[#allocation2 + $0x10] sm:$0xff] %v1223
        %1252 = vst [vmem:[#allocation2 + $0x18] sm:$0xff] %v1242
        %1253 = vst [vmem:[#allocation2 + $0x20] sm:$0xff] %v1226
        %1254 = vst [vmem:[#allocation2 + $0x28] sm:$0xff] %v1245
        %1255 = vst [vmem:[#allocation2 + $0x30] sm:$0xff] %v1228
        %1256 = vst [vmem:[#allocation2 + $0x38] sm:$0xff] %v1247
        %v1257 = vld [vmem:[#allocation3] sm:$0xff]
        %v1258 = vld [vmem:[#allocation3 + $0x8] sm:$0xff]
        %v1259 = vld [vmem:[#allocation3 + $0x10] sm:$0xff]
        %v1260 = vld [vmem:[#allocation3 + $0x18] sm:$0xff]
        %v1261 = vld [vmem:[#allocation3 + $0x20] sm:$0xff]
        %v1262 = vld [vmem:[#allocation3 + $0x28] sm:$0xff]
        %v1263 = vld [vmem:[#allocation3 + $0x30] sm:$0xf]
        %v1264 = vld [vmem:[#allocation3 + $0x38] sm:$0xf]
        %v1265 = vld [vmem:[#allocation2] sm:$0xf0]
        %v1266 = vld [vmem:[#allocation2 + $0x8] sm:$0xf0]
        %v1267 = vld [vmem:[#allocation2 + $0x10] sm:$0xff]
        %v1268 = vld [vmem:[#allocation2 + $0x18] sm:$0xff]
        %v1269 = vld [vmem:[#allocation2 + $0x20] sm:$0xff]
        %v1270 = vld [vmem:[#allocation2 + $0x28] sm:$0xff]
        %v1271 = vld [vmem:[#allocation2 + $0x30] sm:$0xff]
        %v1272 = vld [vmem:[#allocation2 + $0x38] sm:$0xff]
        %vm1281 = vcmask 1043456
        %v1282 = vrot.slane %v1265, 4
        %v1283 = vrot.slane %v1267, 4
        %v1284 = vsel %vm1281, %v1282, %v1283
        %v1285 = vrot.slane %v1266, 4
        %v1286 = vrot.slane %v1268, 4
        %v1287 = vsel %vm1281, %v1285, %v1286
        %v1288 = vrot.slane %v1269, 4
        %v1289 = vsel %vm1281, %v1283, %v1288
        %v1290 = vrot.slane %v1270, 4
        %v1291 = vsel %vm1281, %v1286, %v1290
        %v1292 = vrot.slane %v1271, 4
        %v1293 = vsel %vm1281, %v1288, %v1292
        %v1294 = vrot.slane %v1272, 4
        %v1295 = vsel %vm1281, %v1290, %v1294
        %v1304 = vadd.f32 %v1257, %v1284
        %v1305 = vadd.f32 %v1258, %v1287
        %v1306 = vadd.f32 %v1259, %v1289
        %v1307 = vadd.f32 %v1260, %v1291
        %v1308 = vadd.f32 %v1261, %v1293
        %v1309 = vadd.f32 %v1262, %v1295
        %v1310 = vadd.f32 %v1263, %v1292
        %v1311 = vadd.f32 %v1264, %v1294
        %1312 = vst [vmem:[#allocation3] sm:$0xff] %v1304
        %1313 = vst [vmem:[#allocation3 + $0x8] sm:$0xff] %v1305
        %1314 = vst [vmem:[#allocation3 + $0x10] sm:$0xff] %v1306
        %1315 = vst [vmem:[#allocation3 + $0x18] sm:$0xff] %v1307
        %1316 = vst [vmem:[#allocation3 + $0x20] sm:$0xff] %v1308
        %1317 = vst [vmem:[#allocation3 + $0x28] sm:$0xff] %v1309
        %1318 = vst [vmem:[#allocation3 + $0x30] sm:$0xf] %v1310
        %1319 = vst [vmem:[#allocation3 + $0x38] sm:$0xf] %v1311
        %v1320 = vld [vmem:[#allocation3] sm:$0xff]
        %v1321 = vld [vmem:[#allocation3 + $0x8] sm:$0xff]
        %v1322 = vld [vmem:[#allocation3 + $0x10] sm:$0xff]
        %v1323 = vld [vmem:[#allocation3 + $0x18] sm:$0xff]
        %v1324 = vld [vmem:[#allocation3 + $0x20] sm:$0xff]
        %v1325 = vld [vmem:[#allocation3 + $0x28] sm:$0xff]
        %v1326 = vld [vmem:[#allocation3 + $0x30] sm:$0xff]
        %v1327 = vld [vmem:[#allocation3 + $0x38] sm:$0xff]
        %v1328 = vld [vmem:[%s2] sm:$0x3]
        %v1330 = vperm.slane %v1328, 0
        %v1331 = vperm.slane %v1328, 1
        %v1334 = vadd.f32 %v1320, %v1330
        %v1335 = vadd.f32 %v1321, %v1331
        %v1336 = vadd.f32 %v1322, %v1330
        %v1337 = vadd.f32 %v1323, %v1331
        %v1338 = vadd.f32 %v1324, %v1330
        %v1339 = vadd.f32 %v1325, %v1331
        %v1340 = vadd.f32 %v1326, %v1330
        %v1341 = vadd.f32 %v1327, %v1331
        %v1342 = vmax.f32 %v1334, 0.0
        %v1343 = vmax.f32 %v1335, 0.0
        %v1344 = vmax.f32 %v1336, 0.0
        %v1345 = vmax.f32 %v1337, 0.0
        %v1346 = vmax.f32 %v1338, 0.0
        %v1347 = vmax.f32 %v1339, 0.0
        %v1348 = vmax.f32 %v1340, 0.0
        %v1349 = vmax.f32 %v1341, 0.0
        %v1358 = vrot.slane %v1343, 6
        %v1359 = vrot.slane %v1345, 6
        %v1360 = vrot.slane %v1347, 6
        %v1361 = vrot.slane %v1349, 6
        %vm1362 = vcmask 1041408
        %v1363 = vsel %vm1362, %v1342, %v1358
        %vm1364 = vcmask 1043458
        %v1365 = vsel %vm1364, %v1342, %v1358
        %v1366 = vrot.slane %v1365, 2
        %vm1367 = vcmask 1045508
        %v1368 = vsel %vm1367, %v1342, %v1358
        %v1369 = vrot.slane %v1368, 4
        %v1370 = vsel %vm917, %v1358, %v1342
        %v1371 = vrot.slane %v1370, 6
        %v1372 = vsel %vm1362, %v1344, %v1359
        %v1373 = vsel %vm1364, %v1344, %v1359
        %v1374 = vrot.slane %v1373, 2
        %v1375 = vsel %vm1367, %v1344, %v1359
        %v1376 = vrot.slane %v1375, 4
        %v1377 = vsel %vm917, %v1359, %v1344
        %v1378 = vrot.slane %v1377, 6
        %v1379 = vsel %vm1362, %v1346, %v1360
        %v1380 = vsel %vm1364, %v1346, %v1360
        %v1381 = vrot.slane %v1380, 2
        %v1382 = vsel %vm1367, %v1346, %v1360
        %v1383 = vrot.slane %v1382, 4
        %v1384 = vsel %vm917, %v1360, %v1346
        %v1385 = vrot.slane %v1384, 6
        %v1386 = vsel %vm1362, %v1348, %v1361
        %v1387 = vsel %vm1364, %v1348, %v1361
        %v1388 = vrot.slane %v1387, 2
        %v1389 = vsel %vm1367, %v1348, %v1361
        %v1390 = vrot.slane %v1389, 4
        %v1391 = vsel %vm917, %v1361, %v1348
        %v1392 = vrot.slane %v1391, 6
        %1393 = vst [vmem:[#allocation1] ss:$4 sm:$0xff] %v1363
        %v1394 = vld.sshfl [vmem:[#allocation1] sm:$0xff pattern:$0x73625140]
        %v1395 = vld.sshfl [vmem:[#allocation1 + $0x8] sm:$0xff pattern:$0x73625140]
        %s1396 = scalar_lea.vmem [#allocation1], 32
        %1397 = vst [vmem:[%s1396] ss:$4 sm:$0xff] %v1366
        %v1398 = vld.sshfl [vmem:[#allocation1 + $0x20] sm:$0xff pattern:$0x73625140]
        %v1399 = vld.sshfl [vmem:[#allocation1 + $0x28] sm:$0xff pattern:$0x73625140]
        %1400 = vst [vmem:[#allocation1] ss:$4 sm:$0xff] %v1369
        %v1401 = vld.sshfl [vmem:[#allocation1] sm:$0xff pattern:$0x73625140]
        %v1402 = vld.sshfl [vmem:[#allocation1 + $0x8] sm:$0xff pattern:$0x73625140]
        %1403 = vst [vmem:[%s1396] ss:$4 sm:$0xff] %v1371
        %v1404 = vld.sshfl [vmem:[#allocation1 + $0x20] sm:$0xff pattern:$0x73625140]
        %v1405 = vld.sshfl [vmem:[#allocation1 + $0x28] sm:$0xff pattern:$0x73625140]
        %1406 = vst [vmem:[#allocation1] ss:$4 sm:$0xff] %v1372
        %v1407 = vld.sshfl [vmem:[#allocation1] sm:$0xff pattern:$0x73625140]
        %v1408 = vld.sshfl [vmem:[#allocation1 + $0x8] sm:$0xff pattern:$0x73625140]
        %1409 = vst [vmem:[%s1396] ss:$4 sm:$0xff] %v1374
        %v1410 = vld.sshfl [vmem:[#allocation1 + $0x20] sm:$0xff pattern:$0x73625140]
        %v1411 = vld.sshfl [vmem:[#allocation1 + $0x28] sm:$0xff pattern:$0x73625140]
        %1412 = vst [vmem:[#allocation1] ss:$4 sm:$0xff] %v1376
        %v1413 = vld.sshfl [vmem:[#allocation1] sm:$0xff pattern:$0x73625140]
        %v1414 = vld.sshfl [vmem:[#allocation1 + $0x8] sm:$0xff pattern:$0x73625140]
        %1415 = vst [vmem:[%s1396] ss:$4 sm:$0xff] %v1378
        %v1416 = vld.sshfl [vmem:[#allocation1 + $0x20] sm:$0xff pattern:$0x73625140]
        %v1417 = vld.sshfl [vmem:[#allocation1 + $0x28] sm:$0xff pattern:$0x73625140]
        %1418 = vst [vmem:[#allocation1] ss:$4 sm:$0xff] %v1379
        %v1419 = vld.sshfl [vmem:[#allocation1] sm:$0xff pattern:$0x73625140]
        %v1420 = vld.sshfl [vmem:[#allocation1 + $0x8] sm:$0xff pattern:$0x73625140]
        %1421 = vst [vmem:[%s1396] ss:$4 sm:$0xff] %v1381
        %v1422 = vld.sshfl [vmem:[#allocation1 + $0x20] sm:$0xff pattern:$0x73625140]
        %v1423 = vld.sshfl [vmem:[#allocation1 + $0x28] sm:$0xff pattern:$0x73625140]
        %1424 = vst [vmem:[#allocation1] ss:$4 sm:$0xff] %v1383
        %v1425 = vld.sshfl [vmem:[#allocation1] sm:$0xff pattern:$0x73625140]
        %v1426 = vld.sshfl [vmem:[#allocation1 + $0x8] sm:$0xff pattern:$0x73625140]
        %1427 = vst [vmem:[%s1396] ss:$4 sm:$0xff] %v1385
        %v1428 = vld.sshfl [vmem:[#allocation1 + $0x20] sm:$0xff pattern:$0x73625140]
        %v1429 = vld.sshfl [vmem:[#allocation1 + $0x28] sm:$0xff pattern:$0x73625140]
        %1430 = vst [vmem:[#allocation1] ss:$4 sm:$0xff] %v1386
        %v1431 = vld.sshfl [vmem:[#allocation1] sm:$0xff pattern:$0x73625140]
        %v1432 = vld.sshfl [vmem:[#allocation1 + $0x8] sm:$0xff pattern:$0x73625140]
        %1433 = vst [vmem:[%s1396] ss:$4 sm:$0xff] %v1388
        %v1434 = vld.sshfl [vmem:[#allocation1 + $0x20] sm:$0xff pattern:$0x73625140]
        %v1435 = vld.sshfl [vmem:[#allocation1 + $0x28] sm:$0xff pattern:$0x73625140]
        %1436 = vst [vmem:[#allocation1] ss:$4 sm:$0xff] %v1390
        %v1437 = vld.sshfl [vmem:[#allocation1] sm:$0xff pattern:$0x73625140]
        %v1438 = vld.sshfl [vmem:[#allocation1 + $0x8] sm:$0xff pattern:$0x73625140]
        %1439 = vst [vmem:[%s1396] ss:$4 sm:$0xff] %v1392
        %v1440 = vld.sshfl [vmem:[#allocation1 + $0x20] sm:$0xff pattern:$0x73625140]
        %v1441 = vld.sshfl [vmem:[#allocation1 + $0x28] sm:$0xff pattern:$0x73625140]
        %v1474 = vsel %vm1362, %v1394, -inf
        %v1475 = vrot.slane %v1474, 4
        %v1476 = vmax.f32 %v1474, %v1475
        %v1477 = vrot.slane %v1476, 2
        %v1478 = vmax.f32 %v1476, %v1477
        %v1479 = vrot.slane %v1478, 1
        %v1480 = vmax.f32 %v1478, %v1479
        %v1481 = vsel %vm1362, %v1395, -inf
        %v1482 = vrot.slane %v1481, 4
        %v1483 = vmax.f32 %v1481, %v1482
        %v1484 = vrot.slane %v1483, 2
        %v1485 = vmax.f32 %v1483, %v1484
        %v1486 = vrot.slane %v1485, 1
        %v1487 = vmax.f32 %v1485, %v1486
        %v1488 = vsel %vm1362, %v1398, -inf
        %v1489 = vrot.slane %v1488, 4
        %v1490 = vmax.f32 %v1488, %v1489
        %v1491 = vrot.slane %v1490, 2
        %v1492 = vmax.f32 %v1490, %v1491
        %v1493 = vrot.slane %v1492, 1
        %v1494 = vmax.f32 %v1492, %v1493
        %v1495 = vsel %vm1362, %v1399, -inf
        %v1496 = vrot.slane %v1495, 4
        %v1497 = vmax.f32 %v1495, %v1496
        %v1498 = vrot.slane %v1497, 2
        %v1499 = vmax.f32 %v1497, %v1498
        %v1500 = vrot.slane %v1499, 1
        %v1501 = vmax.f32 %v1499, %v1500
        %v1502 = vsel %vm1362, %v1401, -inf
        %v1503 = vrot.slane %v1502, 4
        %v1504 = vmax.f32 %v1502, %v1503
        %v1505 = vrot.slane %v1504, 2
        %v1506 = vmax.f32 %v1504, %v1505
        %v1507 = vrot.slane %v1506, 1
        %v1508 = vmax.f32 %v1506, %v1507
        %v1509 = vsel %vm1362, %v1402, -inf
        %v1510 = vrot.slane %v1509, 4
        %v1511 = vmax.f32 %v1509, %v1510
        %v1512 = vrot.slane %v1511, 2
        %v1513 = vmax.f32 %v1511, %v1512
        %v1514 = vrot.slane %v1513, 1
        %v1515 = vmax.f32 %v1513, %v1514
        %v1516 = vsel %vm1362, %v1404, -inf
        %v1517 = vrot.slane %v1516, 4
        %v1518 = vmax.f32 %v1516, %v1517
        %v1519 = vrot.slane %v1518, 2
        %v1520 = vmax.f32 %v1518, %v1519
        %v1521 = vrot.slane %v1520, 1
        %v1522 = vmax.f32 %v1520, %v1521
        %v1523 = vsel %vm1362, %v1405, -inf
        %v1524 = vrot.slane %v1523, 4
        %v1525 = vmax.f32 %v1523, %v1524
        %v1526 = vrot.slane %v1525, 2
        %v1527 = vmax.f32 %v1525, %v1526
        %v1528 = vrot.slane %v1527, 1
        %v1529 = vmax.f32 %v1527, %v1528
        %v1530 = vsel %vm1362, %v1407, -inf
        %v1531 = vrot.slane %v1530, 4
        %v1532 = vmax.f32 %v1530, %v1531
        %v1533 = vrot.slane %v1532, 2
        %v1534 = vmax.f32 %v1532, %v1533
        %v1535 = vrot.slane %v1534, 1
        %v1536 = vmax.f32 %v1534, %v1535
        %v1537 = vsel %vm1362, %v1408, -inf
        %v1538 = vrot.slane %v1537, 4
        %v1539 = vmax.f32 %v1537, %v1538
        %v1540 = vrot.slane %v1539, 2
        %v1541 = vmax.f32 %v1539, %v1540
        %v1542 = vrot.slane %v1541, 1
        %v1543 = vmax.f32 %v1541, %v1542
        %v1544 = vsel %vm1362, %v1410, -inf
        %v1545 = vrot.slane %v1544, 4
        %v1546 = vmax.f32 %v1544, %v1545
        %v1547 = vrot.slane %v1546, 2
        %v1548 = vmax.f32 %v1546, %v1547
        %v1549 = vrot.slane %v1548, 1
        %v1550 = vmax.f32 %v1548, %v1549
        %v1551 = vsel %vm1362, %v1411, -inf
        %v1552 = vrot.slane %v1551, 4
        %v1553 = vmax.f32 %v1551, %v1552
        %v1554 = vrot.slane %v1553, 2
        %v1555 = vmax.f32 %v1553, %v1554
        %v1556 = vrot.slane %v1555, 1
        %v1557 = vmax.f32 %v1555, %v1556
        %v1558 = vsel %vm1362, %v1413, -inf
        %v1559 = vrot.slane %v1558, 4
        %v1560 = vmax.f32 %v1558, %v1559
        %v1561 = vrot.slane %v1560, 2
        %v1562 = vmax.f32 %v1560, %v1561
        %v1563 = vrot.slane %v1562, 1
        %v1564 = vmax.f32 %v1562, %v1563
        %v1565 = vsel %vm1362, %v1414, -inf
        %v1566 = vrot.slane %v1565, 4
        %v1567 = vmax.f32 %v1565, %v1566
        %v1568 = vrot.slane %v1567, 2
        %v1569 = vmax.f32 %v1567, %v1568
        %v1570 = vrot.slane %v1569, 1
        %v1571 = vmax.f32 %v1569, %v1570
        %v1572 = vsel %vm1362, %v1416, -inf
        %v1573 = vrot.slane %v1572, 4
        %v1574 = vmax.f32 %v1572, %v1573
        %v1575 = vrot.slane %v1574, 2
        %v1576 = vmax.f32 %v1574, %v1575
        %v1577 = vrot.slane %v1576, 1
        %v1578 = vmax.f32 %v1576, %v1577
        %v1579 = vsel %vm1362, %v1417, -inf
        %v1580 = vrot.slane %v1579, 4
        %v1581 = vmax.f32 %v1579, %v1580
        %v1582 = vrot.slane %v1581, 2
        %v1583 = vmax.f32 %v1581, %v1582
        %v1584 = vrot.slane %v1583, 1
        %v1585 = vmax.f32 %v1583, %v1584
        %v1586 = vsel %vm1362, %v1419, -inf
        %v1587 = vrot.slane %v1586, 4
        %v1588 = vmax.f32 %v1586, %v1587
        %v1589 = vrot.slane %v1588, 2
        %v1590 = vmax.f32 %v1588, %v1589
        %v1591 = vrot.slane %v1590, 1
        %v1592 = vmax.f32 %v1590, %v1591
        %v1593 = vsel %vm1362, %v1420, -inf
        %v1594 = vrot.slane %v1593, 4
        %v1595 = vmax.f32 %v1593, %v1594
        %v1596 = vrot.slane %v1595, 2
        %v1597 = vmax.f32 %v1595, %v1596
        %v1598 = vrot.slane %v1597, 1
        %v1599 = vmax.f32 %v1597, %v1598
        %v1600 = vsel %vm1362, %v1422, -inf
        %v1601 = vrot.slane %v1600, 4
        %v1602 = vmax.f32 %v1600, %v1601
        %v1603 = vrot.slane %v1602, 2
        %v1604 = vmax.f32 %v1602, %v1603
        %v1605 = vrot.slane %v1604, 1
        %v1606 = vmax.f32 %v1604, %v1605
        %v1607 = vsel %vm1362, %v1423, -inf
        %v1608 = vrot.slane %v1607, 4
        %v1609 = vmax.f32 %v1607, %v1608
        %v1610 = vrot.slane %v1609, 2
        %v1611 = vmax.f32 %v1609, %v1610
        %v1612 = vrot.slane %v1611, 1
        %v1613 = vmax.f32 %v1611, %v1612
        %v1614 = vsel %vm1362, %v1425, -inf
        %v1615 = vrot.slane %v1614, 4
        %v1616 = vmax.f32 %v1614, %v1615
        %v1617 = vrot.slane %v1616, 2
        %v1618 = vmax.f32 %v1616, %v1617
        %v1619 = vrot.slane %v1618, 1
        %v1620 = vmax.f32 %v1618, %v1619
        %v1621 = vsel %vm1362, %v1426, -inf
        %v1622 = vrot.slane %v1621, 4
        %v1623 = vmax.f32 %v1621, %v1622
        %v1624 = vrot.slane %v1623, 2
        %v1625 = vmax.f32 %v1623, %v1624
        %v1626 = vrot.slane %v1625, 1
        %v1627 = vmax.f32 %v1625, %v1626
        %v1628 = vsel %vm1362, %v1428, -inf
        %v1629 = vrot.slane %v1628, 4
        %v1630 = vmax.f32 %v1628, %v1629
        %v1631 = vrot.slane %v1630, 2
        %v1632 = vmax.f32 %v1630, %v1631
        %v1633 = vrot.slane %v1632, 1
        %v1634 = vmax.f32 %v1632, %v1633
        %v1635 = vsel %vm1362, %v1429, -inf
        %v1636 = vrot.slane %v1635, 4
        %v1637 = vmax.f32 %v1635, %v1636
        %v1638 = vrot.slane %v1637, 2
        %v1639 = vmax.f32 %v1637, %v1638
        %v1640 = vrot.slane %v1639, 1
        %v1641 = vmax.f32 %v1639, %v1640
        %v1642 = vsel %vm1362, %v1431, -inf
        %v1643 = vrot.slane %v1642, 4
        %v1644 = vmax.f32 %v1642, %v1643
        %v1645 = vrot.slane %v1644, 2
        %v1646 = vmax.f32 %v1644, %v1645
        %v1647 = vrot.slane %v1646, 1
        %v1648 = vmax.f32 %v1646, %v1647
        %v1649 = vsel %vm1362, %v1432, -inf
        %v1650 = vrot.slane %v1649, 4
        %v1651 = vmax.f32 %v1649, %v1650
        %v1652 = vrot.slane %v1651, 2
        %v1653 = vmax.f32 %v1651, %v1652
        %v1654 = vrot.slane %v1653, 1
        %v1655 = vmax.f32 %v1653, %v1654
        %v1656 = vsel %vm1362, %v1434, -inf
        %v1657 = vrot.slane %v1656, 4
        %v1658 = vmax.f32 %v1656, %v1657
        %v1659 = vrot.slane %v1658, 2
        %v1660 = vmax.f32 %v1658, %v1659
        %v1661 = vrot.slane %v1660, 1
        %v1662 = vmax.f32 %v1660, %v1661
        %v1663 = vsel %vm1362, %v1435, -inf
        %v1664 = vrot.slane %v1663, 4
        %v1665 = vmax.f32 %v1663, %v1664
        %v1666 = vrot.slane %v1665, 2
        %v1667 = vmax.f32 %v1665, %v1666
        %v1668 = vrot.slane %v1667, 1
        %v1669 = vmax.f32 %v1667, %v1668
        %v1670 = vsel %vm1362, %v1437, -inf
        %v1671 = vrot.slane %v1670, 4
        %v1672 = vmax.f32 %v1670, %v1671
        %v1673 = vrot.slane %v1672, 2
        %v1674 = vmax.f32 %v1672, %v1673
        %v1675 = vrot.slane %v1674, 1
        %v1676 = vmax.f32 %v1674, %v1675
        %v1677 = vsel %vm1362, %v1438, -inf
        %v1678 = vrot.slane %v1677, 4
        %v1679 = vmax.f32 %v1677, %v1678
        %v1680 = vrot.slane %v1679, 2
        %v1681 = vmax.f32 %v1679, %v1680
        %v1682 = vrot.slane %v1681, 1
        %v1683 = vmax.f32 %v1681, %v1682
        %v1684 = vsel %vm1362, %v1440, -inf
        %v1685 = vrot.slane %v1684, 4
        %v1686 = vmax.f32 %v1684, %v1685
        %v1687 = vrot.slane %v1686, 2
        %v1688 = vmax.f32 %v1686, %v1687
        %v1689 = vrot.slane %v1688, 1
        %v1690 = vmax.f32 %v1688, %v1689
        %v1691 = vsel %vm1362, %v1441, -inf
        %v1692 = vrot.slane %v1691, 4
        %v1693 = vmax.f32 %v1691, %v1692
        %v1694 = vrot.slane %v1693, 2
        %v1695 = vmax.f32 %v1693, %v1694
        %v1696 = vrot.slane %v1695, 1
        %v1697 = vmax.f32 %v1695, %v1696
        %v1698 = vmax.f32 %v1480, %v1487
        %v1699 = vmax.f32 %v1494, %v1501
        %v1700 = vmax.f32 %v1508, %v1515
        %v1701 = vmax.f32 %v1522, %v1529
        %v1702 = vmax.f32 %v1536, %v1543
        %v1703 = vmax.f32 %v1550, %v1557
        %v1704 = vmax.f32 %v1564, %v1571
        %v1705 = vmax.f32 %v1578, %v1585
        %v1706 = vmax.f32 %v1592, %v1599
        %v1707 = vmax.f32 %v1606, %v1613
        %v1708 = vmax.f32 %v1620, %v1627
        %v1709 = vmax.f32 %v1634, %v1641
        %v1710 = vmax.f32 %v1648, %v1655
        %v1711 = vmax.f32 %v1662, %v1669
        %v1712 = vmax.f32 %v1676, %v1683
        %v1713 = vmax.f32 %v1690, %v1697
        %v1714 = vpack.c.bf16 %v1698, %v1698
        %v1715 = vpack.c.bf16 %v1699, %v1699
        %v1716 = vpack.c.bf16 %v1700, %v1700
        %v1717 = vpack.c.bf16 %v1701, %v1701
        %v1718 = vpack.c.bf16 %v1702, %v1702
        %v1719 = vpack.c.bf16 %v1703, %v1703
        %v1720 = vpack.c.bf16 %v1704, %v1704
        %v1721 = vpack.c.bf16 %v1705, %v1705
        %v1722 = vpack.c.bf16 %v1706, %v1706
        %v1723 = vpack.c.bf16 %v1707, %v1707
        %v1724 = vpack.c.bf16 %v1708, %v1708
        %v1725 = vpack.c.bf16 %v1709, %v1709
        %v1726 = vpack.c.bf16 %v1710, %v1710
        %v1727 = vpack.c.bf16 %v1711, %v1711
        %v1728 = vpack.c.bf16 %v1712, %v1712
        %v1729 = vpack.c.bf16 %v1713, %v1713
        %v1730 = vld [vmem:[%s3] sm:$0xff]
        %v1731 = vld [vmem:[%s3 + $0x8] sm:$0xff]
        %v1732 = vld [vmem:[%s3 + $0x10] sm:$0xff]
        %v1733 = vld [vmem:[%s3 + $0x18] sm:$0xff]
        %v1734 = vld [vmem:[%s3 + $0x20] sm:$0xff]
        %v1735 = vld [vmem:[%s3 + $0x28] sm:$0xff]
        %v1736 = vld [vmem:[%s3 + $0x30] sm:$0xff]
        %v1737 = vld [vmem:[%s3 + $0x38] sm:$0xff]
        %v1738 = vld [vmem:[%s3 + $0x40] sm:$0xff]
        %v1739 = vld [vmem:[%s3 + $0x48] sm:$0xff]
        %v1740 = vld [vmem:[%s3 + $0x50] sm:$0xff]
        %v1741 = vld [vmem:[%s3 + $0x58] sm:$0xff]
        %v1742 = vld [vmem:[%s3 + $0x60] sm:$0xff]
        %v1743 = vld [vmem:[%s3 + $0x68] sm:$0xff]
        %v1744 = vld [vmem:[%s3 + $0x70] sm:$0xff]
        %v1745 = vld [vmem:[%s3 + $0x78] sm:$0xff]
        %v1762 = vunpack.c.l.b16 %v1714
        %v1763 = vunpack.c.l.b16 %v1715
        %v1764 = vunpack.c.l.b16 %v1716
        %v1765 = vunpack.c.l.b16 %v1717
        %v1766 = vunpack.c.l.b16 %v1718
        %v1767 = vunpack.c.l.b16 %v1719
        %v1768 = vunpack.c.l.b16 %v1720
        %v1769 = vunpack.c.l.b16 %v1721
        %v1770 = vunpack.c.l.b16 %v1722
        %v1771 = vunpack.c.l.b16 %v1723
        %v1772 = vunpack.c.l.b16 %v1724
        %v1773 = vunpack.c.l.b16 %v1725
        %v1774 = vunpack.c.l.b16 %v1726
        %v1775 = vunpack.c.l.b16 %v1727
        %v1776 = vunpack.c.l.b16 %v1728
        %v1777 = vunpack.c.l.b16 %v1729
        %vm1778 = vcmask 1041409
        %v1779 = vsel %vm1778, %v1763, %v1762
        %vm1780 = vcmask 1042434
        %v1781 = vsel %vm1780, %v1764, %v1779
        %vm1782 = vcmask 1043459
        %v1783 = vsel %vm1782, %v1765, %v1781
        %vm1784 = vcmask 1044484
        %v1785 = vsel %vm1784, %v1766, %v1783
        %vm1786 = vcmask 1045509
        %v1787 = vsel %vm1786, %v1767, %v1785
        %vm1788 = vcmask 1046534
        %v1789 = vsel %vm1788, %v1768, %v1787
        %vm1790 = vcmask 1047559
        %v1791 = vsel %vm1790, %v1769, %v1789
        %v1792 = vsel %vm1778, %v1771, %v1770
        %v1793 = vsel %vm1780, %v1772, %v1792
        %v1794 = vsel %vm1782, %v1773, %v1793
        %v1795 = vsel %vm1784, %v1774, %v1794
        %v1796 = vsel %vm1786, %v1775, %v1795
        %v1797 = vsel %vm1788, %v1776, %v1796
        %v1798 = vsel %vm1790, %v1777, %v1797
        %v1799 = vpack.c.b16 %v1798, %v1791
        %v1817 = vunpack.c.l.b16 %v1730
        %v1818 = vunpack.c.h.b16 %v1730
        %v1819 = vunpack.c.l.b16 %v1731
        %v1820 = vunpack.c.h.b16 %v1731
        %v1821 = vunpack.c.l.b16 %v1732
        %v1822 = vunpack.c.h.b16 %v1732
        %v1823 = vunpack.c.l.b16 %v1733
        %v1824 = vunpack.c.h.b16 %v1733
        %v1825 = vunpack.c.l.b16 %v1734
        %v1826 = vunpack.c.h.b16 %v1734
        %v1827 = vunpack.c.l.b16 %v1735
        %v1828 = vunpack.c.h.b16 %v1735
        %v1829 = vunpack.c.l.b16 %v1736
        %v1830 = vunpack.c.h.b16 %v1736
        %v1831 = vunpack.c.l.b16 %v1737
        %v1832 = vunpack.c.h.b16 %v1737
        %v1833 = vunpack.c.l.b16 %v1738
        %v1834 = vunpack.c.h.b16 %v1738
        %v1835 = vunpack.c.l.b16 %v1739
        %v1836 = vunpack.c.h.b16 %v1739
        %v1837 = vunpack.c.l.b16 %v1740
        %v1838 = vunpack.c.h.b16 %v1740
        %v1839 = vunpack.c.l.b16 %v1741
        %v1840 = vunpack.c.h.b16 %v1741
        %v1841 = vunpack.c.l.b16 %v1742
        %v1842 = vunpack.c.h.b16 %v1742
        %v1843 = vunpack.c.l.b16 %v1743
        %v1844 = vunpack.c.h.b16 %v1743
        %v1845 = vunpack.c.l.b16 %v1744
        %v1846 = vunpack.c.h.b16 %v1744
        %v1847 = vunpack.c.l.b16 %v1745
        %v1848 = vunpack.c.h.b16 %v1745
        %v1849 = vpack.c.b16 %v1819, %v1817
        %v1850 = vpack.c.b16 %v1820, %v1818
        %v1851 = vpack.c.b16 %v1823, %v1821
        %v1852 = vpack.c.b16 %v1824, %v1822
        %v1853 = vpack.c.b16 %v1827, %v1825
        %v1854 = vpack.c.b16 %v1828, %v1826
        %v1855 = vpack.c.b16 %v1831, %v1829
        %v1856 = vpack.c.b16 %v1832, %v1830
        %v1857 = vpack.c.b16 %v1835, %v1833
        %v1858 = vpack.c.b16 %v1836, %v1834
        %v1859 = vpack.c.b16 %v1839, %v1837
        %v1860 = vpack.c.b16 %v1840, %v1838
        %v1861 = vpack.c.b16 %v1843, %v1841
        %v1862 = vpack.c.b16 %v1844, %v1842
        %v1863 = vpack.c.b16 %v1847, %v1845
        %v1864 = vpack.c.b16 %v1848, %v1846
        %1881 = vmatpush.bf16.msra.mxu0 %v1863
        %1882 = vmatpush.bf16.msra.mxu0 %v1861
        %1883 = vmatpush.bf16.msra.mxu0 %v1859
        %1884 = vmatpush.bf16.msra.mxu0 %v1857
        %1885 = vmatpush.bf16.msra.mxu0 %v1855
        %1886 = vmatpush.bf16.msra.mxu0 %v1853
        %1887 = vmatpush.bf16.msra.mxu0 %v1851
        %1888 = vmatpush.bf16.msra.mxu0 %v1849
        %1889 = vmatmul.bf16.gmra.mxu0 %v1799
        %v1890 = vpop.f32.mrf.mxu0
        %v1891 = vadd.f32 0.0, %v1890
        %v1892 = vpop.f32.mrf.mxu0
        %v1893 = vadd.f32 0.0, %v1892
        %1894 = vdwg.mxu0
        %1895 = vmatpush.bf16.msra.mxu0 %v1864
        %1896 = vmatpush.bf16.msra.mxu0 %v1862
        %1897 = vmatpush.bf16.msra.mxu0 %v1860
        %1898 = vmatpush.bf16.msra.mxu0 %v1858
        %1899 = vmatpush.bf16.msra.mxu0 %v1856
        %1900 = vmatpush.bf16.msra.mxu0 %v1854
        %1901 = vmatpush.bf16.msra.mxu0 %v1852
        %1902 = vmatpush.bf16.msra.mxu0 %v1850
        %1903 = vmatmul.bf16.gmra.mxu0 %v1799
        %v1904 = vpop.f32.mrf.mxu0
        %v1905 = vadd.f32 0.0, %v1904
        %v1906 = vpop.f32.mrf.mxu0
        %v1907 = vadd.f32 0.0, %v1906
        %1908 = vdwg.mxu0
        %1909 = vst [vmem:[#allocation5] sm:$0xff] %v1891
        %1910 = vst [vmem:[#allocation5 + $0x8] sm:$0xff] %v1905
        %1911 = vst [vmem:[#allocation5 + $0x10] sm:$0xff] %v1893
        %1912 = vst [vmem:[#allocation5 + $0x18] sm:$0xff] %v1907
        %s1913 = scalar_lea.vmem %s3, 128
        %v1914 = vld [vmem:[%s1913] sm:$0xff]
        %v1915 = vld [vmem:[%s1913 + $0x8] sm:$0xff]
        %v1916 = vld [vmem:[%s1913 + $0x10] sm:$0xff]
        %v1917 = vld [vmem:[%s1913 + $0x18] sm:$0xff]
        %v1918 = vld [vmem:[%s1913 + $0x20] sm:$0xff]
        %v1919 = vld [vmem:[%s1913 + $0x28] sm:$0xff]
        %v1920 = vld [vmem:[%s1913 + $0x30] sm:$0xff]
        %v1921 = vld [vmem:[%s1913 + $0x38] sm:$0xff]
        %v1922 = vld [vmem:[%s1913 + $0x40] sm:$0xff]
        %v1923 = vld [vmem:[%s1913 + $0x48] sm:$0xff]
        %v1924 = vld [vmem:[%s1913 + $0x50] sm:$0xff]
        %v1925 = vld [vmem:[%s1913 + $0x58] sm:$0xff]
        %v1926 = vld [vmem:[%s1913 + $0x60] sm:$0xff]
        %v1927 = vld [vmem:[%s1913 + $0x68] sm:$0xff]
        %v1928 = vld [vmem:[%s1913 + $0x70] sm:$0xff]
        %v1929 = vld [vmem:[%s1913 + $0x78] sm:$0xff]
        %v1946 = vunpack.c.l.b16 %v1914
        %v1947 = vunpack.c.h.b16 %v1914
        %v1948 = vunpack.c.l.b16 %v1915
        %v1949 = vunpack.c.h.b16 %v1915
        %v1950 = vunpack.c.l.b16 %v1916
        %v1951 = vunpack.c.h.b16 %v1916
        %v1952 = vunpack.c.l.b16 %v1917
        %v1953 = vunpack.c.h.b16 %v1917
        %v1954 = vunpack.c.l.b16 %v1918
        %v1955 = vunpack.c.h.b16 %v1918
        %v1956 = vunpack.c.l.b16 %v1919
        %v1957 = vunpack.c.h.b16 %v1919
        %v1958 = vunpack.c.l.b16 %v1920
        %v1959 = vunpack.c.h.b16 %v1920
        %v1960 = vunpack.c.l.b16 %v1921
        %v1961 = vunpack.c.h.b16 %v1921
        %v1962 = vunpack.c.l.b16 %v1922
        %v1963 = vunpack.c.h.b16 %v1922
        %v1964 = vunpack.c.l.b16 %v1923
        %v1965 = vunpack.c.h.b16 %v1923
        %v1966 = vunpack.c.l.b16 %v1924
        %v1967 = vunpack.c.h.b16 %v1924
        %v1968 = vunpack.c.l.b16 %v1925
        %v1969 = vunpack.c.h.b16 %v1925
        %v1970 = vunpack.c.l.b16 %v1926
        %v1971 = vunpack.c.h.b16 %v1926
        %v1972 = vunpack.c.l.b16 %v1927
        %v1973 = vunpack.c.h.b16 %v1927
        %v1974 = vunpack.c.l.b16 %v1928
        %v1975 = vunpack.c.h.b16 %v1928
        %v1976 = vunpack.c.l.b16 %v1929
        %v1977 = vunpack.c.h.b16 %v1929
        %v1978 = vpack.c.b16 %v1948, %v1946
        %v1979 = vpack.c.b16 %v1949, %v1947
        %v1980 = vpack.c.b16 %v1952, %v1950
        %v1981 = vpack.c.b16 %v1953, %v1951
        %v1982 = vpack.c.b16 %v1956, %v1954
        %v1983 = vpack.c.b16 %v1957, %v1955
        %v1984 = vpack.c.b16 %v1960, %v1958
        %v1985 = vpack.c.b16 %v1961, %v1959
        %v1986 = vpack.c.b16 %v1964, %v1962
        %v1987 = vpack.c.b16 %v1965, %v1963
        %v1988 = vpack.c.b16 %v1968, %v1966
        %v1989 = vpack.c.b16 %v1969, %v1967
        %v1990 = vpack.c.b16 %v1972, %v1970
        %v1991 = vpack.c.b16 %v1973, %v1971
        %v1992 = vpack.c.b16 %v1976, %v1974
        %v1993 = vpack.c.b16 %v1977, %v1975
        %2010 = vmatpush.bf16.msra.mxu0 %v1992
        %2011 = vmatpush.bf16.msra.mxu0 %v1990
        %2012 = vmatpush.bf16.msra.mxu0 %v1988
        %2013 = vmatpush.bf16.msra.mxu0 %v1986
        %2014 = vmatpush.bf16.msra.mxu0 %v1984
        %2015 = vmatpush.bf16.msra.mxu0 %v1982
        %2016 = vmatpush.bf16.msra.mxu0 %v1980
        %2017 = vmatpush.bf16.msra.mxu0 %v1978
        %2018 = vmatmul.bf16.gmra.mxu0 %v1799
        %v2019 = vpop.f32.mrf.mxu0
        %v2020 = vadd.f32 0.0, %v2019
        %v2021 = vpop.f32.mrf.mxu0
        %v2022 = vadd.f32 0.0, %v2021
        %2023 = vdwg.mxu0
        %2024 = vmatpush.bf16.msra.mxu0 %v1993
        %2025 = vmatpush.bf16.msra.mxu0 %v1991
        %2026 = vmatpush.bf16.msra.mxu0 %v1989
        %2027 = vmatpush.bf16.msra.mxu0 %v1987
        %2028 = vmatpush.bf16.msra.mxu0 %v1985
        %2029 = vmatpush.bf16.msra.mxu0 %v1983
        %2030 = vmatpush.bf16.msra.mxu0 %v1981
        %2031 = vmatpush.bf16.msra.mxu0 %v1979
        %2032 = vmatmul.bf16.gmra.mxu0 %v1799
        %v2033 = vpop.f32.mrf.mxu0
        %v2034 = vadd.f32 0.0, %v2033
        %v2035 = vpop.f32.mrf.mxu0
        %v2036 = vadd.f32 0.0, %v2035
        %2037 = vdwg.mxu0
        %2038 = vst [vmem:[#allocation4] sm:$0xff] %v2020
        %2039 = vst [vmem:[#allocation4 + $0x8] sm:$0xff] %v2034
        %2040 = vst [vmem:[#allocation4 + $0x10] sm:$0xff] %v2022
        %2041 = vst [vmem:[#allocation4 + $0x18] sm:$0xff] %v2036
        %v2042 = vld [vmem:[#allocation5] sm:$0xff]
        %v2043 = vld [vmem:[#allocation5 + $0x8] sm:$0xff]
        %v2044 = vld [vmem:[#allocation5 + $0x10] sm:$0x7f]
        %v2045 = vld [vmem:[#allocation5 + $0x18] sm:$0x7f]
        %v2046 = vld [vmem:[#allocation4] sm:$0xfe]
        %v2047 = vld [vmem:[#allocation4 + $0x8] sm:$0xfe]
        %v2048 = vld [vmem:[#allocation4 + $0x10] sm:$0xff]
        %v2049 = vld [vmem:[#allocation4 + $0x18] sm:$0xff]
        %v2054 = vrot.slane %v2046, 1
        %v2055 = vrot.slane %v2048, 1
        %v2056 = vsel %vm735, %v2054, %v2055
        %v2057 = vrot.slane %v2047, 1
        %v2058 = vrot.slane %v2049, 1
        %v2059 = vsel %vm735, %v2057, %v2058
        %v2064 = vadd.f32 %v2042, %v2056
        %v2065 = vadd.f32 %v2043, %v2059
        %v2066 = vadd.f32 %v2044, %v2055
        %v2067 = vadd.f32 %v2045, %v2058
        %2068 = vst [vmem:[#allocation5] sm:$0xff] %v2064
        %2069 = vst [vmem:[#allocation5 + $0x8] sm:$0xff] %v2065
        %2070 = vst [vmem:[#allocation5 + $0x10] sm:$0x7f] %v2066
        %2071 = vst [vmem:[#allocation5 + $0x18] sm:$0x7f] %v2067
        %s2072 = scalar_lea.vmem %s3, 256
        %v2073 = vld [vmem:[%s2072] sm:$0xff]
        %v2074 = vld [vmem:[%s2072 + $0x8] sm:$0xff]
        %v2075 = vld [vmem:[%s2072 + $0x10] sm:$0xff]
        %v2076 = vld [vmem:[%s2072 + $0x18] sm:$0xff]
        %v2077 = vld [vmem:[%s2072 + $0x20] sm:$0xff]
        %v2078 = vld [vmem:[%s2072 + $0x28] sm:$0xff]
        %v2079 = vld [vmem:[%s2072 + $0x30] sm:$0xff]
        %v2080 = vld [vmem:[%s2072 + $0x38] sm:$0xff]
        %v2081 = vld [vmem:[%s2072 + $0x40] sm:$0xff]
        %v2082 = vld [vmem:[%s2072 + $0x48] sm:$0xff]
        %v2083 = vld [vmem:[%s2072 + $0x50] sm:$0xff]
        %v2084 = vld [vmem:[%s2072 + $0x58] sm:$0xff]
        %v2085 = vld [vmem:[%s2072 + $0x60] sm:$0xff]
        %v2086 = vld [vmem:[%s2072 + $0x68] sm:$0xff]
        %v2087 = vld [vmem:[%s2072 + $0x70] sm:$0xff]
        %v2088 = vld [vmem:[%s2072 + $0x78] sm:$0xff]
        %v2105 = vunpack.c.l.b16 %v2073
        %v2106 = vunpack.c.h.b16 %v2073
        %v2107 = vunpack.c.l.b16 %v2074
        %v2108 = vunpack.c.h.b16 %v2074
        %v2109 = vunpack.c.l.b16 %v2075
        %v2110 = vunpack.c.h.b16 %v2075
        %v2111 = vunpack.c.l.b16 %v2076
        %v2112 = vunpack.c.h.b16 %v2076
        %v2113 = vunpack.c.l.b16 %v2077
        %v2114 = vunpack.c.h.b16 %v2077
        %v2115 = vunpack.c.l.b16 %v2078
        %v2116 = vunpack.c.h.b16 %v2078
        %v2117 = vunpack.c.l.b16 %v2079
        %v2118 = vunpack.c.h.b16 %v2079
        %v2119 = vunpack.c.l.b16 %v2080
        %v2120 = vunpack.c.h.b16 %v2080
        %v2121 = vunpack.c.l.b16 %v2081
        %v2122 = vunpack.c.h.b16 %v2081
        %v2123 = vunpack.c.l.b16 %v2082
        %v2124 = vunpack.c.h.b16 %v2082
        %v2125 = vunpack.c.l.b16 %v2083
        %v2126 = vunpack.c.h.b16 %v2083
        %v2127 = vunpack.c.l.b16 %v2084
        %v2128 = vunpack.c.h.b16 %v2084
        %v2129 = vunpack.c.l.b16 %v2085
        %v2130 = vunpack.c.h.b16 %v2085
        %v2131 = vunpack.c.l.b16 %v2086
        %v2132 = vunpack.c.h.b16 %v2086
        %v2133 = vunpack.c.l.b16 %v2087
        %v2134 = vunpack.c.h.b16 %v2087
        %v2135 = vunpack.c.l.b16 %v2088
        %v2136 = vunpack.c.h.b16 %v2088
        %v2137 = vpack.c.b16 %v2107, %v2105
        %v2138 = vpack.c.b16 %v2108, %v2106
        %v2139 = vpack.c.b16 %v2111, %v2109
        %v2140 = vpack.c.b16 %v2112, %v2110
        %v2141 = vpack.c.b16 %v2115, %v2113
        %v2142 = vpack.c.b16 %v2116, %v2114
        %v2143 = vpack.c.b16 %v2119, %v2117
        %v2144 = vpack.c.b16 %v2120, %v2118
        %v2145 = vpack.c.b16 %v2123, %v2121
        %v2146 = vpack.c.b16 %v2124, %v2122
        %v2147 = vpack.c.b16 %v2127, %v2125
        %v2148 = vpack.c.b16 %v2128, %v2126
        %v2149 = vpack.c.b16 %v2131, %v2129
        %v2150 = vpack.c.b16 %v2132, %v2130
        %v2151 = vpack.c.b16 %v2135, %v2133
        %v2152 = vpack.c.b16 %v2136, %v2134
        %2169 = vmatpush.bf16.msra.mxu0 %v2151
        %2170 = vmatpush.bf16.msra.mxu0 %v2149
        %2171 = vmatpush.bf16.msra.mxu0 %v2147
        %2172 = vmatpush.bf16.msra.mxu0 %v2145
        %2173 = vmatpush.bf16.msra.mxu0 %v2143
        %2174 = vmatpush.bf16.msra.mxu0 %v2141
        %2175 = vmatpush.bf16.msra.mxu0 %v2139
        %2176 = vmatpush.bf16.msra.mxu0 %v2137
        %2177 = vmatmul.bf16.gmra.mxu0 %v1799
        %v2178 = vpop.f32.mrf.mxu0
        %v2179 = vadd.f32 0.0, %v2178
        %v2180 = vpop.f32.mrf.mxu0
        %v2181 = vadd.f32 0.0, %v2180
        %2182 = vdwg.mxu0
        %2183 = vmatpush.bf16.msra.mxu0 %v2152
        %2184 = vmatpush.bf16.msra.mxu0 %v2150
        %2185 = vmatpush.bf16.msra.mxu0 %v2148
        %2186 = vmatpush.bf16.msra.mxu0 %v2146
        %2187 = vmatpush.bf16.msra.mxu0 %v2144
        %2188 = vmatpush.bf16.msra.mxu0 %v2142
        %2189 = vmatpush.bf16.msra.mxu0 %v2140
        %2190 = vmatpush.bf16.msra.mxu0 %v2138
        %2191 = vmatmul.bf16.gmra.mxu0 %v1799
        %v2192 = vpop.f32.mrf.mxu0
        %v2193 = vadd.f32 0.0, %v2192
        %v2194 = vpop.f32.mrf.mxu0
        %v2195 = vadd.f32 0.0, %v2194
        %2196 = vdwg.mxu0
        %2197 = vst [vmem:[#allocation4] sm:$0xff] %v2179
        %2198 = vst [vmem:[#allocation4 + $0x8] sm:$0xff] %v2193
        %2199 = vst [vmem:[#allocation4 + $0x10] sm:$0xff] %v2181
        %2200 = vst [vmem:[#allocation4 + $0x18] sm:$0xff] %v2195
        %v2201 = vld [vmem:[#allocation5] sm:$0xff]
        %v2202 = vld [vmem:[#allocation5 + $0x8] sm:$0xff]
        %v2203 = vld [vmem:[#allocation5 + $0x10] sm:$0x3f]
        %v2204 = vld [vmem:[#allocation5 + $0x18] sm:$0x3f]
        %v2205 = vld [vmem:[#allocation4] sm:$0xfc]
        %v2206 = vld [vmem:[#allocation4 + $0x8] sm:$0xfc]
        %v2207 = vld [vmem:[#allocation4 + $0x10] sm:$0xff]
        %v2208 = vld [vmem:[#allocation4 + $0x18] sm:$0xff]
        %v2213 = vrot.slane %v2205, 2
        %v2214 = vrot.slane %v2207, 2
        %v2215 = vsel %vm917, %v2213, %v2214
        %v2216 = vrot.slane %v2206, 2
        %v2217 = vrot.slane %v2208, 2
        %v2218 = vsel %vm917, %v2216, %v2217
        %v2223 = vadd.f32 %v2201, %v2215
        %v2224 = vadd.f32 %v2202, %v2218
        %v2225 = vadd.f32 %v2203, %v2214
        %v2226 = vadd.f32 %v2204, %v2217
        %2227 = vst [vmem:[#allocation5] sm:$0xff] %v2223
        %2228 = vst [vmem:[#allocation5 + $0x8] sm:$0xff] %v2224
        %2229 = vst [vmem:[#allocation5 + $0x10] sm:$0x3f] %v2225
        %2230 = vst [vmem:[#allocation5 + $0x18] sm:$0x3f] %v2226
        %s2231 = scalar_lea.vmem %s3, 384
        %v2232 = vld [vmem:[%s2231] sm:$0xff]
        %v2233 = vld [vmem:[%s2231 + $0x8] sm:$0xff]
        %v2234 = vld [vmem:[%s2231 + $0x10] sm:$0xff]
        %v2235 = vld [vmem:[%s2231 + $0x18] sm:$0xff]
        %v2236 = vld [vmem:[%s2231 + $0x20] sm:$0xff]
        %v2237 = vld [vmem:[%s2231 + $0x28] sm:$0xff]
        %v2238 = vld [vmem:[%s2231 + $0x30] sm:$0xff]
        %v2239 = vld [vmem:[%s2231 + $0x38] sm:$0xff]
        %v2240 = vld [vmem:[%s2231 + $0x40] sm:$0xff]
        %v2241 = vld [vmem:[%s2231 + $0x48] sm:$0xff]
        %v2242 = vld [vmem:[%s2231 + $0x50] sm:$0xff]
        %v2243 = vld [vmem:[%s2231 + $0x58] sm:$0xff]
        %v2244 = vld [vmem:[%s2231 + $0x60] sm:$0xff]
        %v2245 = vld [vmem:[%s2231 + $0x68] sm:$0xff]
        %v2246 = vld [vmem:[%s2231 + $0x70] sm:$0xff]
        %v2247 = vld [vmem:[%s2231 + $0x78] sm:$0xff]
        %v2264 = vunpack.c.l.b16 %v2232
        %v2265 = vunpack.c.h.b16 %v2232
        %v2266 = vunpack.c.l.b16 %v2233
        %v2267 = vunpack.c.h.b16 %v2233
        %v2268 = vunpack.c.l.b16 %v2234
        %v2269 = vunpack.c.h.b16 %v2234
        %v2270 = vunpack.c.l.b16 %v2235
        %v2271 = vunpack.c.h.b16 %v2235
        %v2272 = vunpack.c.l.b16 %v2236
        %v2273 = vunpack.c.h.b16 %v2236
        %v2274 = vunpack.c.l.b16 %v2237
        %v2275 = vunpack.c.h.b16 %v2237
        %v2276 = vunpack.c.l.b16 %v2238
        %v2277 = vunpack.c.h.b16 %v2238
        %v2278 = vunpack.c.l.b16 %v2239
        %v2279 = vunpack.c.h.b16 %v2239
        %v2280 = vunpack.c.l.b16 %v2240
        %v2281 = vunpack.c.h.b16 %v2240
        %v2282 = vunpack.c.l.b16 %v2241
        %v2283 = vunpack.c.h.b16 %v2241
        %v2284 = vunpack.c.l.b16 %v2242
        %v2285 = vunpack.c.h.b16 %v2242
        %v2286 = vunpack.c.l.b16 %v2243
        %v2287 = vunpack.c.h.b16 %v2243
        %v2288 = vunpack.c.l.b16 %v2244
        %v2289 = vunpack.c.h.b16 %v2244
        %v2290 = vunpack.c.l.b16 %v2245
        %v2291 = vunpack.c.h.b16 %v2245
        %v2292 = vunpack.c.l.b16 %v2246
        %v2293 = vunpack.c.h.b16 %v2246
        %v2294 = vunpack.c.l.b16 %v2247
        %v2295 = vunpack.c.h.b16 %v2247
        %v2296 = vpack.c.b16 %v2266, %v2264
        %v2297 = vpack.c.b16 %v2267, %v2265
        %v2298 = vpack.c.b16 %v2270, %v2268
        %v2299 = vpack.c.b16 %v2271, %v2269
        %v2300 = vpack.c.b16 %v2274, %v2272
        %v2301 = vpack.c.b16 %v2275, %v2273
        %v2302 = vpack.c.b16 %v2278, %v2276
        %v2303 = vpack.c.b16 %v2279, %v2277
        %v2304 = vpack.c.b16 %v2282, %v2280
        %v2305 = vpack.c.b16 %v2283, %v2281
        %v2306 = vpack.c.b16 %v2286, %v2284
        %v2307 = vpack.c.b16 %v2287, %v2285
        %v2308 = vpack.c.b16 %v2290, %v2288
        %v2309 = vpack.c.b16 %v2291, %v2289
        %v2310 = vpack.c.b16 %v2294, %v2292
        %v2311 = vpack.c.b16 %v2295, %v2293
        %2328 = vmatpush.bf16.msra.mxu0 %v2310
        %2329 = vmatpush.bf16.msra.mxu0 %v2308
        %2330 = vmatpush.bf16.msra.mxu0 %v2306
        %2331 = vmatpush.bf16.msra.mxu0 %v2304
        %2332 = vmatpush.bf16.msra.mxu0 %v2302
        %2333 = vmatpush.bf16.msra.mxu0 %v2300
        %2334 = vmatpush.bf16.msra.mxu0 %v2298
        %2335 = vmatpush.bf16.msra.mxu0 %v2296
        %2336 = vmatmul.bf16.gmra.mxu0 %v1799
        %v2337 = vpop.f32.mrf.mxu0
        %v2338 = vadd.f32 0.0, %v2337
        %v2339 = vpop.f32.mrf.mxu0
        %v2340 = vadd.f32 0.0, %v2339
        %2341 = vdwg.mxu0
        %2342 = vmatpush.bf16.msra.mxu0 %v2311
        %2343 = vmatpush.bf16.msra.mxu0 %v2309
        %2344 = vmatpush.bf16.msra.mxu0 %v2307
        %2345 = vmatpush.bf16.msra.mxu0 %v2305
        %2346 = vmatpush.bf16.msra.mxu0 %v2303
        %2347 = vmatpush.bf16.msra.mxu0 %v2301
        %2348 = vmatpush.bf16.msra.mxu0 %v2299
        %2349 = vmatpush.bf16.msra.mxu0 %v2297
        %2350 = vmatmul.bf16.gmra.mxu0 %v1799
        %v2351 = vpop.f32.mrf.mxu0
        %v2352 = vadd.f32 0.0, %v2351
        %v2353 = vpop.f32.mrf.mxu0
        %v2354 = vadd.f32 0.0, %v2353
        %2355 = vdwg.mxu0
        %2356 = vst [vmem:[#allocation4] sm:$0xff] %v2338
        %2357 = vst [vmem:[#allocation4 + $0x8] sm:$0xff] %v2352
        %2358 = vst [vmem:[#allocation4 + $0x10] sm:$0xff] %v2340
        %2359 = vst [vmem:[#allocation4 + $0x18] sm:$0xff] %v2354
        %v2360 = vld [vmem:[#allocation5] sm:$0xff]
        %v2361 = vld [vmem:[#allocation5 + $0x8] sm:$0xff]
        %v2362 = vld [vmem:[#allocation5 + $0x10] sm:$0x1f]
        %v2363 = vld [vmem:[#allocation5 + $0x18] sm:$0x1f]
        %v2364 = vld [vmem:[#allocation4] sm:$0xf8]
        %v2365 = vld [vmem:[#allocation4 + $0x8] sm:$0xf8]
        %v2366 = vld [vmem:[#allocation4 + $0x10] sm:$0xff]
        %v2367 = vld [vmem:[#allocation4 + $0x18] sm:$0xff]
        %v2372 = vrot.slane %v2364, 3
        %v2373 = vrot.slane %v2366, 3
        %v2374 = vsel %vm1099, %v2372, %v2373
        %v2375 = vrot.slane %v2365, 3
        %v2376 = vrot.slane %v2367, 3
        %v2377 = vsel %vm1099, %v2375, %v2376
        %v2382 = vadd.f32 %v2360, %v2374
        %v2383 = vadd.f32 %v2361, %v2377
        %v2384 = vadd.f32 %v2362, %v2373
        %v2385 = vadd.f32 %v2363, %v2376
        %2386 = vst [vmem:[#allocation5] sm:$0xff] %v2382
        %2387 = vst [vmem:[#allocation5 + $0x8] sm:$0xff] %v2383
        %2388 = vst [vmem:[#allocation5 + $0x10] sm:$0x1f] %v2384
        %2389 = vst [vmem:[#allocation5 + $0x18] sm:$0x1f] %v2385
        %s2390 = scalar_lea.vmem %s3, 512
        %v2391 = vld [vmem:[%s2390] sm:$0xff]
        %v2392 = vld [vmem:[%s2390 + $0x8] sm:$0xff]
        %v2393 = vld [vmem:[%s2390 + $0x10] sm:$0xff]
        %v2394 = vld [vmem:[%s2390 + $0x18] sm:$0xff]
        %v2395 = vld [vmem:[%s2390 + $0x20] sm:$0xff]
        %v2396 = vld [vmem:[%s2390 + $0x28] sm:$0xff]
        %v2397 = vld [vmem:[%s2390 + $0x30] sm:$0xff]
        %v2398 = vld [vmem:[%s2390 + $0x38] sm:$0xff]
        %v2399 = vld [vmem:[%s2390 + $0x40] sm:$0xff]
        %v2400 = vld [vmem:[%s2390 + $0x48] sm:$0xff]
        %v2401 = vld [vmem:[%s2390 + $0x50] sm:$0xff]
        %v2402 = vld [vmem:[%s2390 + $0x58] sm:$0xff]
        %v2403 = vld [vmem:[%s2390 + $0x60] sm:$0xff]
        %v2404 = vld [vmem:[%s2390 + $0x68] sm:$0xff]
        %v2405 = vld [vmem:[%s2390 + $0x70] sm:$0xff]
        %v2406 = vld [vmem:[%s2390 + $0x78] sm:$0xff]
        %v2423 = vunpack.c.l.b16 %v2391
        %v2424 = vunpack.c.h.b16 %v2391
        %v2425 = vunpack.c.l.b16 %v2392
        %v2426 = vunpack.c.h.b16 %v2392
        %v2427 = vunpack.c.l.b16 %v2393
        %v2428 = vunpack.c.h.b16 %v2393
        %v2429 = vunpack.c.l.b16 %v2394
        %v2430 = vunpack.c.h.b16 %v2394
        %v2431 = vunpack.c.l.b16 %v2395
        %v2432 = vunpack.c.h.b16 %v2395
        %v2433 = vunpack.c.l.b16 %v2396
        %v2434 = vunpack.c.h.b16 %v2396
        %v2435 = vunpack.c.l.b16 %v2397
        %v2436 = vunpack.c.h.b16 %v2397
        %v2437 = vunpack.c.l.b16 %v2398
        %v2438 = vunpack.c.h.b16 %v2398
        %v2439 = vunpack.c.l.b16 %v2399
        %v2440 = vunpack.c.h.b16 %v2399
        %v2441 = vunpack.c.l.b16 %v2400
        %v2442 = vunpack.c.h.b16 %v2400
        %v2443 = vunpack.c.l.b16 %v2401
        %v2444 = vunpack.c.h.b16 %v2401
        %v2445 = vunpack.c.l.b16 %v2402
        %v2446 = vunpack.c.h.b16 %v2402
        %v2447 = vunpack.c.l.b16 %v2403
        %v2448 = vunpack.c.h.b16 %v2403
        %v2449 = vunpack.c.l.b16 %v2404
        %v2450 = vunpack.c.h.b16 %v2404
        %v2451 = vunpack.c.l.b16 %v2405
        %v2452 = vunpack.c.h.b16 %v2405
        %v2453 = vunpack.c.l.b16 %v2406
        %v2454 = vunpack.c.h.b16 %v2406
        %v2455 = vpack.c.b16 %v2425, %v2423
        %v2456 = vpack.c.b16 %v2426, %v2424
        %v2457 = vpack.c.b16 %v2429, %v2427
        %v2458 = vpack.c.b16 %v2430, %v2428
        %v2459 = vpack.c.b16 %v2433, %v2431
        %v2460 = vpack.c.b16 %v2434, %v2432
        %v2461 = vpack.c.b16 %v2437, %v2435
        %v2462 = vpack.c.b16 %v2438, %v2436
        %v2463 = vpack.c.b16 %v2441, %v2439
        %v2464 = vpack.c.b16 %v2442, %v2440
        %v2465 = vpack.c.b16 %v2445, %v2443
        %v2466 = vpack.c.b16 %v2446, %v2444
        %v2467 = vpack.c.b16 %v2449, %v2447
        %v2468 = vpack.c.b16 %v2450, %v2448
        %v2469 = vpack.c.b16 %v2453, %v2451
        %v2470 = vpack.c.b16 %v2454, %v2452
        %2487 = vmatpush.bf16.msra.mxu0 %v2469
        %2488 = vmatpush.bf16.msra.mxu0 %v2467
        %2489 = vmatpush.bf16.msra.mxu0 %v2465
        %2490 = vmatpush.bf16.msra.mxu0 %v2463
        %2491 = vmatpush.bf16.msra.mxu0 %v2461
        %2492 = vmatpush.bf16.msra.mxu0 %v2459
        %2493 = vmatpush.bf16.msra.mxu0 %v2457
        %2494 = vmatpush.bf16.msra.mxu0 %v2455
        %2495 = vmatmul.bf16.gmra.mxu0 %v1799
        %v2496 = vpop.f32.mrf.mxu0
        %v2497 = vadd.f32 0.0, %v2496
        %v2498 = vpop.f32.mrf.mxu0
        %v2499 = vadd.f32 0.0, %v2498
        %2500 = vdwg.mxu0
        %2501 = vmatpush.bf16.msra.mxu0 %v2470
        %2502 = vmatpush.bf16.msra.mxu0 %v2468
        %2503 = vmatpush.bf16.msra.mxu0 %v2466
        %2504 = vmatpush.bf16.msra.mxu0 %v2464
        %2505 = vmatpush.bf16.msra.mxu0 %v2462
        %2506 = vmatpush.bf16.msra.mxu0 %v2460
        %2507 = vmatpush.bf16.msra.mxu0 %v2458
        %2508 = vmatpush.bf16.msra.mxu0 %v2456
        %2509 = vmatmul.bf16.gmra.mxu0 %v1799
        %v2510 = vpop.f32.mrf.mxu0
        %v2511 = vadd.f32 0.0, %v2510
        %v2512 = vpop.f32.mrf.mxu0
        %v2513 = vadd.f32 0.0, %v2512
        %2514 = vdwg.mxu0
        %2515 = vst [vmem:[#allocation4] sm:$0xff] %v2497
        %2516 = vst [vmem:[#allocation4 + $0x8] sm:$0xff] %v2511
        %2517 = vst [vmem:[#allocation4 + $0x10] sm:$0xff] %v2499
        %2518 = vst [vmem:[#allocation4 + $0x18] sm:$0xff] %v2513
        %v2519 = vld [vmem:[#allocation5] sm:$0xff]
        %v2520 = vld [vmem:[#allocation5 + $0x8] sm:$0xff]
        %v2521 = vld [vmem:[#allocation5 + $0x10] sm:$0xf]
        %v2522 = vld [vmem:[#allocation5 + $0x18] sm:$0xf]
        %v2523 = vld [vmem:[#allocation4] sm:$0xf0]
        %v2524 = vld [vmem:[#allocation4 + $0x8] sm:$0xf0]
        %v2525 = vld [vmem:[#allocation4 + $0x10] sm:$0xff]
        %v2526 = vld [vmem:[#allocation4 + $0x18] sm:$0xff]
        %v2531 = vrot.slane %v2523, 4
        %v2532 = vrot.slane %v2525, 4
        %v2533 = vsel %vm1281, %v2531, %v2532
        %v2534 = vrot.slane %v2524, 4
        %v2535 = vrot.slane %v2526, 4
        %v2536 = vsel %vm1281, %v2534, %v2535
        %v2541 = vadd.f32 %v2519, %v2533
        %v2542 = vadd.f32 %v2520, %v2536
        %v2543 = vadd.f32 %v2521, %v2532
        %v2544 = vadd.f32 %v2522, %v2535
        %2545 = vst [vmem:[#allocation5] sm:$0xff] %v2541
        %2546 = vst [vmem:[#allocation5 + $0x8] sm:$0xff] %v2542
        %2547 = vst [vmem:[#allocation5 + $0x10] sm:$0xf] %v2543
        %2548 = vst [vmem:[#allocation5 + $0x18] sm:$0xf] %v2544
        %v2549 = vld [vmem:[#allocation5] sm:$0xff]
        %v2550 = vld [vmem:[#allocation5 + $0x8] sm:$0xff]
        %v2551 = vld [vmem:[#allocation5 + $0x10] sm:$0xff]
        %v2552 = vld [vmem:[#allocation5 + $0x18] sm:$0xff]
        %v2553 = vld [vmem:[%s4] sm:$0x3]
        %v2555 = vperm.slane %v2553, 0
        %v2556 = vperm.slane %v2553, 1
        %v2559 = vadd.f32 %v2549, %v2555
        %v2560 = vadd.f32 %v2550, %v2556
        %v2561 = vadd.f32 %v2551, %v2555
        %v2562 = vadd.f32 %v2552, %v2556
        %v2563 = vmax.f32 %v2559, 0.0
        %v2564 = vmax.f32 %v2560, 0.0
        %v2565 = vmax.f32 %v2561, 0.0
        %v2566 = vmax.f32 %v2562, 0.0
        %v2571 = vrot.slane %v2564, 6
        %v2572 = vrot.slane %v2566, 6
        %v2573 = vsel %vm1362, %v2563, %v2571
        %v2574 = vsel %vm1364, %v2563, %v2571
        %v2575 = vrot.slane %v2574, 2
        %v2576 = vsel %vm1367, %v2563, %v2571
        %v2577 = vrot.slane %v2576, 4
        %v2578 = vsel %vm917, %v2571, %v2563
        %v2579 = vrot.slane %v2578, 6
        %v2580 = vsel %vm1362, %v2565, %v2572
        %v2581 = vsel %vm1364, %v2565, %v2572
        %v2582 = vrot.slane %v2581, 2
        %v2583 = vsel %vm1367, %v2565, %v2572
        %v2584 = vrot.slane %v2583, 4
        %v2585 = vsel %vm917, %v2572, %v2565
        %v2586 = vrot.slane %v2585, 6
        %2587 = vst [vmem:[#allocation1] ss:$4 sm:$0xff] %v2573
        %v2588 = vld.sshfl [vmem:[#allocation1] sm:$0xff pattern:$0x73625140]
        %v2589 = vld.sshfl [vmem:[#allocation1 + $0x8] sm:$0xff pattern:$0x73625140]
        %s2590 = scalar_lea.vmem [#allocation1], 32
        %2591 = vst [vmem:[%s2590] ss:$4 sm:$0xff] %v2575
        %v2592 = vld.sshfl [vmem:[#allocation1 + $0x20] sm:$0xff pattern:$0x73625140]
        %v2593 = vld.sshfl [vmem:[#allocation1 + $0x28] sm:$0xff pattern:$0x73625140]
        %2594 = vst [vmem:[#allocation1] ss:$4 sm:$0xff] %v2577
        %v2595 = vld.sshfl [vmem:[#allocation1] sm:$0xff pattern:$0x73625140]
        %v2596 = vld.sshfl [vmem:[#allocation1 + $0x8] sm:$0xff pattern:$0x73625140]
        %2597 = vst [vmem:[%s2590] ss:$4 sm:$0xff] %v2579
        %v2598 = vld.sshfl [vmem:[#allocation1 + $0x20] sm:$0xff pattern:$0x73625140]
        %v2599 = vld.sshfl [vmem:[#allocation1 + $0x28] sm:$0xff pattern:$0x73625140]
        %2600 = vst [vmem:[#allocation1] ss:$4 sm:$0xff] %v2580
        %v2601 = vld.sshfl [vmem:[#allocation1] sm:$0xff pattern:$0x73625140]
        %v2602 = vld.sshfl [vmem:[#allocation1 + $0x8] sm:$0xff pattern:$0x73625140]
        %2603 = vst [vmem:[%s2590] ss:$4 sm:$0xff] %v2582
        %v2604 = vld.sshfl [vmem:[#allocation1 + $0x20] sm:$0xff pattern:$0x73625140]
        %v2605 = vld.sshfl [vmem:[#allocation1 + $0x28] sm:$0xff pattern:$0x73625140]
        %2606 = vst [vmem:[#allocation1] ss:$4 sm:$0xff] %v2584
        %v2607 = vld.sshfl [vmem:[#allocation1] sm:$0xff pattern:$0x73625140]
        %v2608 = vld.sshfl [vmem:[#allocation1 + $0x8] sm:$0xff pattern:$0x73625140]
        %2609 = vst [vmem:[%s2590] ss:$4 sm:$0xff] %v2586
        %v2610 = vld.sshfl [vmem:[#allocation1 + $0x20] sm:$0xff pattern:$0x73625140]
        %v2611 = vld.sshfl [vmem:[#allocation1 + $0x28] sm:$0xff pattern:$0x73625140]
        %v2628 = vsel %vm1362, %v2588, -inf
        %v2629 = vrot.slane %v2628, 4
        %v2630 = vmax.f32 %v2628, %v2629
        %v2631 = vrot.slane %v2630, 2
        %v2632 = vmax.f32 %v2630, %v2631
        %v2633 = vrot.slane %v2632, 1
        %v2634 = vmax.f32 %v2632, %v2633
        %v2635 = vsel %vm1362, %v2589, -inf
        %v2636 = vrot.slane %v2635, 4
        %v2637 = vmax.f32 %v2635, %v2636
        %v2638 = vrot.slane %v2637, 2
        %v2639 = vmax.f32 %v2637, %v2638
        %v2640 = vrot.slane %v2639, 1
        %v2641 = vmax.f32 %v2639, %v2640
        %v2642 = vsel %vm1362, %v2592, -inf
        %v2643 = vrot.slane %v2642, 4
        %v2644 = vmax.f32 %v2642, %v2643
        %v2645 = vrot.slane %v2644, 2
        %v2646 = vmax.f32 %v2644, %v2645
        %v2647 = vrot.slane %v2646, 1
        %v2648 = vmax.f32 %v2646, %v2647
        %v2649 = vsel %vm1362, %v2593, -inf
        %v2650 = vrot.slane %v2649, 4
        %v2651 = vmax.f32 %v2649, %v2650
        %v2652 = vrot.slane %v2651, 2
        %v2653 = vmax.f32 %v2651, %v2652
        %v2654 = vrot.slane %v2653, 1
        %v2655 = vmax.f32 %v2653, %v2654
        %v2656 = vsel %vm1362, %v2595, -inf
        %v2657 = vrot.slane %v2656, 4
        %v2658 = vmax.f32 %v2656, %v2657
        %v2659 = vrot.slane %v2658, 2
        %v2660 = vmax.f32 %v2658, %v2659
        %v2661 = vrot.slane %v2660, 1
        %v2662 = vmax.f32 %v2660, %v2661
        %v2663 = vsel %vm1362, %v2596, -inf
        %v2664 = vrot.slane %v2663, 4
        %v2665 = vmax.f32 %v2663, %v2664
        %v2666 = vrot.slane %v2665, 2
        %v2667 = vmax.f32 %v2665, %v2666
        %v2668 = vrot.slane %v2667, 1
        %v2669 = vmax.f32 %v2667, %v2668
        %v2670 = vsel %vm1362, %v2598, -inf
        %v2671 = vrot.slane %v2670, 4
        %v2672 = vmax.f32 %v2670, %v2671
        %v2673 = vrot.slane %v2672, 2
        %v2674 = vmax.f32 %v2672, %v2673
        %v2675 = vrot.slane %v2674, 1
        %v2676 = vmax.f32 %v2674, %v2675
        %v2677 = vsel %vm1362, %v2599, -inf
        %v2678 = vrot.slane %v2677, 4
        %v2679 = vmax.f32 %v2677, %v2678
        %v2680 = vrot.slane %v2679, 2
        %v2681 = vmax.f32 %v2679, %v2680
        %v2682 = vrot.slane %v2681, 1
        %v2683 = vmax.f32 %v2681, %v2682
        %v2684 = vsel %vm1362, %v2601, -inf
        %v2685 = vrot.slane %v2684, 4
        %v2686 = vmax.f32 %v2684, %v2685
        %v2687 = vrot.slane %v2686, 2
        %v2688 = vmax.f32 %v2686, %v2687
        %v2689 = vrot.slane %v2688, 1
        %v2690 = vmax.f32 %v2688, %v2689
        %v2691 = vsel %vm1362, %v2602, -inf
        %v2692 = vrot.slane %v2691, 4
        %v2693 = vmax.f32 %v2691, %v2692
        %v2694 = vrot.slane %v2693, 2
        %v2695 = vmax.f32 %v2693, %v2694
        %v2696 = vrot.slane %v2695, 1
        %v2697 = vmax.f32 %v2695, %v2696
        %v2698 = vsel %vm1362, %v2604, -inf
        %v2699 = vrot.slane %v2698, 4
        %v2700 = vmax.f32 %v2698, %v2699
        %v2701 = vrot.slane %v2700, 2
        %v2702 = vmax.f32 %v2700, %v2701
        %v2703 = vrot.slane %v2702, 1
        %v2704 = vmax.f32 %v2702, %v2703
        %v2705 = vsel %vm1362, %v2605, -inf
        %v2706 = vrot.slane %v2705, 4
        %v2707 = vmax.f32 %v2705, %v2706
        %v2708 = vrot.slane %v2707, 2
        %v2709 = vmax.f32 %v2707, %v2708
        %v2710 = vrot.slane %v2709, 1
        %v2711 = vmax.f32 %v2709, %v2710
        %v2712 = vsel %vm1362, %v2607, -inf
        %v2713 = vrot.slane %v2712, 4
        %v2714 = vmax.f32 %v2712, %v2713
        %v2715 = vrot.slane %v2714, 2
        %v2716 = vmax.f32 %v2714, %v2715
        %v2717 = vrot.slane %v2716, 1
        %v2718 = vmax.f32 %v2716, %v2717
        %v2719 = vsel %vm1362, %v2608, -inf
        %v2720 = vrot.slane %v2719, 4
        %v2721 = vmax.f32 %v2719, %v2720
        %v2722 = vrot.slane %v2721, 2
        %v2723 = vmax.f32 %v2721, %v2722
        %v2724 = vrot.slane %v2723, 1
        %v2725 = vmax.f32 %v2723, %v2724
        %v2726 = vsel %vm1362, %v2610, -inf
        %v2727 = vrot.slane %v2726, 4
        %v2728 = vmax.f32 %v2726, %v2727
        %v2729 = vrot.slane %v2728, 2
        %v2730 = vmax.f32 %v2728, %v2729
        %v2731 = vrot.slane %v2730, 1
        %v2732 = vmax.f32 %v2730, %v2731
        %v2733 = vsel %vm1362, %v2611, -inf
        %v2734 = vrot.slane %v2733, 4
        %v2735 = vmax.f32 %v2733, %v2734
        %v2736 = vrot.slane %v2735, 2
        %v2737 = vmax.f32 %v2735, %v2736
        %v2738 = vrot.slane %v2737, 1
        %v2739 = vmax.f32 %v2737, %v2738
        %v2740 = vmax.f32 %v2634, %v2641
        %v2741 = vmax.f32 %v2648, %v2655
        %v2742 = vmax.f32 %v2662, %v2669
        %v2743 = vmax.f32 %v2676, %v2683
        %v2744 = vmax.f32 %v2690, %v2697
        %v2745 = vmax.f32 %v2704, %v2711
        %v2746 = vmax.f32 %v2718, %v2725
        %v2747 = vmax.f32 %v2732, %v2739
        %v2748 = vpack.c.bf16 %v2740, %v2740
        %v2749 = vpack.c.bf16 %v2741, %v2741
        %v2750 = vpack.c.bf16 %v2742, %v2742
        %v2751 = vpack.c.bf16 %v2743, %v2743
        %v2752 = vpack.c.bf16 %v2744, %v2744
        %v2753 = vpack.c.bf16 %v2745, %v2745
        %v2754 = vpack.c.bf16 %v2746, %v2746
        %v2755 = vpack.c.bf16 %v2747, %v2747
        %v2756 = vld [vmem:[#allocation10] sm:$0xf]
        %v2757 = vld [vmem:[#allocation10 + $0x4] sm:$0xf]
        %v2758 = vld [vmem:[#allocation10 + $0x8] sm:$0xf]
        %v2759 = vld [vmem:[#allocation10 + $0xc] sm:$0xf]
        %v2760 = vld [vmem:[#allocation10 + $0x10] sm:$0xf]
        %v2761 = vld [vmem:[#allocation10 + $0x14] sm:$0xf]
        %v2762 = vld [vmem:[#allocation10 + $0x18] sm:$0xf]
        %v2763 = vld [vmem:[#allocation10 + $0x1c] sm:$0xf]
        %v2764 = vld [vmem:[#allocation10 + $0x20] sm:$0xf]
        %v2765 = vld [vmem:[#allocation10 + $0x24] sm:$0xf]
        %v2766 = vld [vmem:[#allocation10 + $0x28] sm:$0xf]
        %v2767 = vld [vmem:[#allocation10 + $0x2c] sm:$0xf]
        %v2768 = vld [vmem:[#allocation10 + $0x30] sm:$0xf]
        %v2769 = vld [vmem:[#allocation10 + $0x34] sm:$0xf]
        %v2770 = vld [vmem:[#allocation10 + $0x38] sm:$0xf]
        %v2771 = vld [vmem:[#allocation10 + $0x3c] sm:$0xf]
        %v2780 = vunpack.c.l.b16 %v2748
        %v2781 = vunpack.c.l.b16 %v2749
        %v2782 = vunpack.c.l.b16 %v2750
        %v2783 = vunpack.c.l.b16 %v2751
        %v2784 = vunpack.c.l.b16 %v2752
        %v2785 = vunpack.c.l.b16 %v2753
        %v2786 = vunpack.c.l.b16 %v2754
        %v2787 = vunpack.c.l.b16 %v2755
        %v2788 = vsel %vm1778, %v2781, %v2780
        %v2789 = vsel %vm1780, %v2782, %v2788
        %v2790 = vsel %vm1782, %v2783, %v2789
        %v2791 = vsel %vm1784, %v2784, %v2790
        %v2792 = vsel %vm1786, %v2785, %v2791
        %v2793 = vsel %vm1788, %v2786, %v2792
        %v2794 = vsel %vm1790, %v2787, %v2793
        %v2795 = vpack.c.b16 %v2794, %v2794
        %v2813 = vunpack.c.l.b16 %v2756
        %v2814 = vunpack.c.l.b16 %v2757
        %v2815 = vunpack.c.l.b16 %v2758
        %v2816 = vunpack.c.l.b16 %v2759
        %v2817 = vunpack.c.l.b16 %v2760
        %v2818 = vunpack.c.l.b16 %v2761
        %v2819 = vunpack.c.l.b16 %v2762
        %v2820 = vunpack.c.l.b16 %v2763
        %v2821 = vunpack.c.l.b16 %v2764
        %v2822 = vunpack.c.l.b16 %v2765
        %v2823 = vunpack.c.l.b16 %v2766
        %v2824 = vunpack.c.l.b16 %v2767
        %v2825 = vunpack.c.l.b16 %v2768
        %v2826 = vunpack.c.l.b16 %v2769
        %v2827 = vunpack.c.l.b16 %v2770
        %v2828 = vunpack.c.l.b16 %v2771
        %v2829 = vpack.c.b16 %v2814, %v2813
        %v2830 = vpack.c.b16 %v2816, %v2815
        %v2831 = vpack.c.b16 %v2818, %v2817
        %v2832 = vpack.c.b16 %v2820, %v2819
        %v2833 = vpack.c.b16 %v2822, %v2821
        %v2834 = vpack.c.b16 %v2824, %v2823
        %v2835 = vpack.c.b16 %v2826, %v2825
        %v2836 = vpack.c.b16 %v2828, %v2827
        %2845 = vmatpush.bf16.msra.mxu0 %v2836
        %2846 = vmatpush.bf16.msra.mxu0 %v2835
        %2847 = vmatpush.bf16.msra.mxu0 %v2834
        %2848 = vmatpush.bf16.msra.mxu0 %v2833
        %2849 = vmatpush.bf16.msra.mxu0 %v2832
        %2850 = vmatpush.bf16.msra.mxu0 %v2831
        %2851 = vmatpush.bf16.msra.mxu0 %v2830
        %2852 = vmatpush.bf16.msra.mxu0 %v2829
        %2853 = vmatmul.bf16.gmra.mxu0 %v2795
        %v2854 = vpop.f32.mrf.mxu0
        %v2855 = vadd.f32 0.0, %v2854
        %v2856 = vpop.f32.mrf.mxu0
        %2857 = vdwg.mxu0
        %2858 = vst [vmem:[#allocation7] sm:$0xff] %v2855
        %s2859 = scalar_lea.vmem [#allocation10], 64
        %v2860 = vld [vmem:[%s2859] sm:$0xf]
        %v2861 = vld [vmem:[%s2859 + $0x4] sm:$0xf]
        %v2862 = vld [vmem:[%s2859 + $0x8] sm:$0xf]
        %v2863 = vld [vmem:[%s2859 + $0xc] sm:$0xf]
        %v2864 = vld [vmem:[%s2859 + $0x10] sm:$0xf]
        %v2865 = vld [vmem:[%s2859 + $0x14] sm:$0xf]
        %v2866 = vld [vmem:[%s2859 + $0x18] sm:$0xf]
        %v2867 = vld [vmem:[%s2859 + $0x1c] sm:$0xf]
        %v2868 = vld [vmem:[%s2859 + $0x20] sm:$0xf]
        %v2869 = vld [vmem:[%s2859 + $0x24] sm:$0xf]
        %v2870 = vld [vmem:[%s2859 + $0x28] sm:$0xf]
        %v2871 = vld [vmem:[%s2859 + $0x2c] sm:$0xf]
        %v2872 = vld [vmem:[%s2859 + $0x30] sm:$0xf]
        %v2873 = vld [vmem:[%s2859 + $0x34] sm:$0xf]
        %v2874 = vld [vmem:[%s2859 + $0x38] sm:$0xf]
        %v2875 = vld [vmem:[%s2859 + $0x3c] sm:$0xf]
        %v2892 = vunpack.c.l.b16 %v2860
        %v2893 = vunpack.c.l.b16 %v2861
        %v2894 = vunpack.c.l.b16 %v2862
        %v2895 = vunpack.c.l.b16 %v2863
        %v2896 = vunpack.c.l.b16 %v2864
        %v2897 = vunpack.c.l.b16 %v2865
        %v2898 = vunpack.c.l.b16 %v2866
        %v2899 = vunpack.c.l.b16 %v2867
        %v2900 = vunpack.c.l.b16 %v2868
        %v2901 = vunpack.c.l.b16 %v2869
        %v2902 = vunpack.c.l.b16 %v2870
        %v2903 = vunpack.c.l.b16 %v2871
        %v2904 = vunpack.c.l.b16 %v2872
        %v2905 = vunpack.c.l.b16 %v2873
        %v2906 = vunpack.c.l.b16 %v2874
        %v2907 = vunpack.c.l.b16 %v2875
        %v2908 = vpack.c.b16 %v2893, %v2892
        %v2909 = vpack.c.b16 %v2895, %v2894
        %v2910 = vpack.c.b16 %v2897, %v2896
        %v2911 = vpack.c.b16 %v2899, %v2898
        %v2912 = vpack.c.b16 %v2901, %v2900
        %v2913 = vpack.c.b16 %v2903, %v2902
        %v2914 = vpack.c.b16 %v2905, %v2904
        %v2915 = vpack.c.b16 %v2907, %v2906
        %2924 = vmatpush.bf16.msra.mxu0 %v2915
        %2925 = vmatpush.bf16.msra.mxu0 %v2914
        %2926 = vmatpush.bf16.msra.mxu0 %v2913
        %2927 = vmatpush.bf16.msra.mxu0 %v2912
        %2928 = vmatpush.bf16.msra.mxu0 %v2911
        %2929 = vmatpush.bf16.msra.mxu0 %v2910
        %2930 = vmatpush.bf16.msra.mxu0 %v2909
        %2931 = vmatpush.bf16.msra.mxu0 %v2908
        %2932 = vmatmul.bf16.gmra.mxu0 %v2795
        %v2933 = vpop.f32.mrf.mxu0
        %v2934 = vadd.f32 0.0, %v2933
        %v2935 = vpop.f32.mrf.mxu0
        %2936 = vdwg.mxu0
        %2937 = vst [vmem:[#allocation6] sm:$0xff] %v2934
        %v2938 = vld [vmem:[#allocation7] sm:$0x7f]
        %v2939 = vld [vmem:[#allocation6 + $0x1] sm:$0x7f]
        %v2940 = vadd.f32 %v2938, %v2939
        %2941 = vst [vmem:[#allocation7] sm:$0x7f] %v2940
        %s2942 = scalar_lea.vmem [#allocation10], 128
        %v2943 = vld [vmem:[%s2942] sm:$0xf]
        %v2944 = vld [vmem:[%s2942 + $0x4] sm:$0xf]
        %v2945 = vld [vmem:[%s2942 + $0x8] sm:$0xf]
        %v2946 = vld [vmem:[%s2942 + $0xc] sm:$0xf]
        %v2947 = vld [vmem:[%s2942 + $0x10] sm:$0xf]
        %v2948 = vld [vmem:[%s2942 + $0x14] sm:$0xf]
        %v2949 = vld [vmem:[%s2942 + $0x18] sm:$0xf]
        %v2950 = vld [vmem:[%s2942 + $0x1c] sm:$0xf]
        %v2951 = vld [vmem:[%s2942 + $0x20] sm:$0xf]
        %v2952 = vld [vmem:[%s2942 + $0x24] sm:$0xf]
        %v2953 = vld [vmem:[%s2942 + $0x28] sm:$0xf]
        %v2954 = vld [vmem:[%s2942 + $0x2c] sm:$0xf]
        %v2955 = vld [vmem:[%s2942 + $0x30] sm:$0xf]
        %v2956 = vld [vmem:[%s2942 + $0x34] sm:$0xf]
        %v2957 = vld [vmem:[%s2942 + $0x38] sm:$0xf]
        %v2958 = vld [vmem:[%s2942 + $0x3c] sm:$0xf]
        %v2975 = vunpack.c.l.b16 %v2943
        %v2976 = vunpack.c.l.b16 %v2944
        %v2977 = vunpack.c.l.b16 %v2945
        %v2978 = vunpack.c.l.b16 %v2946
        %v2979 = vunpack.c.l.b16 %v2947
        %v2980 = vunpack.c.l.b16 %v2948
        %v2981 = vunpack.c.l.b16 %v2949
        %v2982 = vunpack.c.l.b16 %v2950
        %v2983 = vunpack.c.l.b16 %v2951
        %v2984 = vunpack.c.l.b16 %v2952
        %v2985 = vunpack.c.l.b16 %v2953
        %v2986 = vunpack.c.l.b16 %v2954
        %v2987 = vunpack.c.l.b16 %v2955
        %v2988 = vunpack.c.l.b16 %v2956
        %v2989 = vunpack.c.l.b16 %v2957
        %v2990 = vunpack.c.l.b16 %v2958
        %v2991 = vpack.c.b16 %v2976, %v2975
        %v2992 = vpack.c.b16 %v2978, %v2977
        %v2993 = vpack.c.b16 %v2980, %v2979
        %v2994 = vpack.c.b16 %v2982, %v2981
        %v2995 = vpack.c.b16 %v2984, %v2983
        %v2996 = vpack.c.b16 %v2986, %v2985
        %v2997 = vpack.c.b16 %v2988, %v2987
        %v2998 = vpack.c.b16 %v2990, %v2989
        %3007 = vmatpush.bf16.msra.mxu0 %v2998
        %3008 = vmatpush.bf16.msra.mxu0 %v2997
        %3009 = vmatpush.bf16.msra.mxu0 %v2996
        %3010 = vmatpush.bf16.msra.mxu0 %v2995
        %3011 = vmatpush.bf16.msra.mxu0 %v2994
        %3012 = vmatpush.bf16.msra.mxu0 %v2993
        %3013 = vmatpush.bf16.msra.mxu0 %v2992
        %3014 = vmatpush.bf16.msra.mxu0 %v2991
        %3015 = vmatmul.bf16.gmra.mxu0 %v2795
        %v3016 = vpop.f32.mrf.mxu0
        %v3017 = vadd.f32 0.0, %v3016
        %v3018 = vpop.f32.mrf.mxu0
        %3019 = vdwg.mxu0
        %3020 = vst [vmem:[#allocation6] sm:$0xff] %v3017
        %v3021 = vld [vmem:[#allocation7] sm:$0x3f]
        %v3022 = vld [vmem:[#allocation6 + $0x2] sm:$0x3f]
        %v3023 = vadd.f32 %v3021, %v3022
        %3024 = vst [vmem:[#allocation7] sm:$0x3f] %v3023
        %s3025 = scalar_lea.vmem [#allocation10], 192
        %v3026 = vld [vmem:[%s3025] sm:$0xf]
        %v3027 = vld [vmem:[%s3025 + $0x4] sm:$0xf]
        %v3028 = vld [vmem:[%s3025 + $0x8] sm:$0xf]
        %v3029 = vld [vmem:[%s3025 + $0xc] sm:$0xf]
        %v3030 = vld [vmem:[%s3025 + $0x10] sm:$0xf]
        %v3031 = vld [vmem:[%s3025 + $0x14] sm:$0xf]
        %v3032 = vld [vmem:[%s3025 + $0x18] sm:$0xf]
        %v3033 = vld [vmem:[%s3025 + $0x1c] sm:$0xf]
        %v3034 = vld [vmem:[%s3025 + $0x20] sm:$0xf]
        %v3035 = vld [vmem:[%s3025 + $0x24] sm:$0xf]
        %v3036 = vld [vmem:[%s3025 + $0x28] sm:$0xf]
        %v3037 = vld [vmem:[%s3025 + $0x2c] sm:$0xf]
        %v3038 = vld [vmem:[%s3025 + $0x30] sm:$0xf]
        %v3039 = vld [vmem:[%s3025 + $0x34] sm:$0xf]
        %v3040 = vld [vmem:[%s3025 + $0x38] sm:$0xf]
        %v3041 = vld [vmem:[%s3025 + $0x3c] sm:$0xf]
        %v3058 = vunpack.c.l.b16 %v3026
        %v3059 = vunpack.c.l.b16 %v3027
        %v3060 = vunpack.c.l.b16 %v3028
        %v3061 = vunpack.c.l.b16 %v3029
        %v3062 = vunpack.c.l.b16 %v3030
        %v3063 = vunpack.c.l.b16 %v3031
        %v3064 = vunpack.c.l.b16 %v3032
        %v3065 = vunpack.c.l.b16 %v3033
        %v3066 = vunpack.c.l.b16 %v3034
        %v3067 = vunpack.c.l.b16 %v3035
        %v3068 = vunpack.c.l.b16 %v3036
        %v3069 = vunpack.c.l.b16 %v3037
        %v3070 = vunpack.c.l.b16 %v3038
        %v3071 = vunpack.c.l.b16 %v3039
        %v3072 = vunpack.c.l.b16 %v3040
        %v3073 = vunpack.c.l.b16 %v3041
        %v3074 = vpack.c.b16 %v3059, %v3058
        %v3075 = vpack.c.b16 %v3061, %v3060
        %v3076 = vpack.c.b16 %v3063, %v3062
        %v3077 = vpack.c.b16 %v3065, %v3064
        %v3078 = vpack.c.b16 %v3067, %v3066
        %v3079 = vpack.c.b16 %v3069, %v3068
        %v3080 = vpack.c.b16 %v3071, %v3070
        %v3081 = vpack.c.b16 %v3073, %v3072
        %3090 = vmatpush.bf16.msra.mxu0 %v3081
        %3091 = vmatpush.bf16.msra.mxu0 %v3080
        %3092 = vmatpush.bf16.msra.mxu0 %v3079
        %3093 = vmatpush.bf16.msra.mxu0 %v3078
        %3094 = vmatpush.bf16.msra.mxu0 %v3077
        %3095 = vmatpush.bf16.msra.mxu0 %v3076
        %3096 = vmatpush.bf16.msra.mxu0 %v3075
        %3097 = vmatpush.bf16.msra.mxu0 %v3074
        %3098 = vmatmul.bf16.gmra.mxu0 %v2795
        %v3099 = vpop.f32.mrf.mxu0
        %v3100 = vadd.f32 0.0, %v3099
        %v3101 = vpop.f32.mrf.mxu0
        %3102 = vdwg.mxu0
        %3103 = vst [vmem:[#allocation6] sm:$0xff] %v3100
        %v3104 = vld [vmem:[#allocation7] sm:$0x1f]
        %v3105 = vld [vmem:[#allocation6 + $0x3] sm:$0x1f]
        %v3106 = vadd.f32 %v3104, %v3105
        %3107 = vst [vmem:[#allocation7] sm:$0x1f] %v3106
        %s3108 = scalar_lea.vmem [#allocation10], 256
        %v3109 = vld [vmem:[%s3108] sm:$0xf]
        %v3110 = vld [vmem:[%s3108 + $0x4] sm:$0xf]
        %v3111 = vld [vmem:[%s3108 + $0x8] sm:$0xf]
        %v3112 = vld [vmem:[%s3108 + $0xc] sm:$0xf]
        %v3113 = vld [vmem:[%s3108 + $0x10] sm:$0xf]
        %v3114 = vld [vmem:[%s3108 + $0x14] sm:$0xf]
        %v3115 = vld [vmem:[%s3108 + $0x18] sm:$0xf]
        %v3116 = vld [vmem:[%s3108 + $0x1c] sm:$0xf]
        %v3117 = vld [vmem:[%s3108 + $0x20] sm:$0xf]
        %v3118 = vld [vmem:[%s3108 + $0x24] sm:$0xf]
        %v3119 = vld [vmem:[%s3108 + $0x28] sm:$0xf]
        %v3120 = vld [vmem:[%s3108 + $0x2c] sm:$0xf]
        %v3121 = vld [vmem:[%s3108 + $0x30] sm:$0xf]
        %v3122 = vld [vmem:[%s3108 + $0x34] sm:$0xf]
        %v3123 = vld [vmem:[%s3108 + $0x38] sm:$0xf]
        %v3124 = vld [vmem:[%s3108 + $0x3c] sm:$0xf]
        %v3141 = vunpack.c.l.b16 %v3109
        %v3142 = vunpack.c.l.b16 %v3110
        %v3143 = vunpack.c.l.b16 %v3111
        %v3144 = vunpack.c.l.b16 %v3112
        %v3145 = vunpack.c.l.b16 %v3113
        %v3146 = vunpack.c.l.b16 %v3114
        %v3147 = vunpack.c.l.b16 %v3115
        %v3148 = vunpack.c.l.b16 %v3116
        %v3149 = vunpack.c.l.b16 %v3117
        %v3150 = vunpack.c.l.b16 %v3118
        %v3151 = vunpack.c.l.b16 %v3119
        %v3152 = vunpack.c.l.b16 %v3120
        %v3153 = vunpack.c.l.b16 %v3121
        %v3154 = vunpack.c.l.b16 %v3122
        %v3155 = vunpack.c.l.b16 %v3123
        %v3156 = vunpack.c.l.b16 %v3124
        %v3157 = vpack.c.b16 %v3142, %v3141
        %v3158 = vpack.c.b16 %v3144, %v3143
        %v3159 = vpack.c.b16 %v3146, %v3145
        %v3160 = vpack.c.b16 %v3148, %v3147
        %v3161 = vpack.c.b16 %v3150, %v3149
        %v3162 = vpack.c.b16 %v3152, %v3151
        %v3163 = vpack.c.b16 %v3154, %v3153
        %v3164 = vpack.c.b16 %v3156, %v3155
        %3173 = vmatpush.bf16.msra.mxu0 %v3164
        %3174 = vmatpush.bf16.msra.mxu0 %v3163
        %3175 = vmatpush.bf16.msra.mxu0 %v3162
        %3176 = vmatpush.bf16.msra.mxu0 %v3161
        %3177 = vmatpush.bf16.msra.mxu0 %v3160
        %3178 = vmatpush.bf16.msra.mxu0 %v3159
        %3179 = vmatpush.bf16.msra.mxu0 %v3158
        %3180 = vmatpush.bf16.msra.mxu0 %v3157
        %3181 = vmatmul.bf16.gmra.mxu0 %v2795
        %v3182 = vpop.f32.mrf.mxu0
        %v3183 = vadd.f32 0.0, %v3182
        %v3184 = vpop.f32.mrf.mxu0
        %3185 = vdwg.mxu0
        %3186 = vst [vmem:[#allocation6] sm:$0xff] %v3183
        %v3187 = vld [vmem:[#allocation7] sm:$0xf]
        %v3188 = vld [vmem:[#allocation6 + $0x4] sm:$0xf]
        %v3189 = vadd.f32 %v3187, %v3188
        %3190 = vst [vmem:[#allocation7] sm:$0xf] %v3189
        %v3191 = vld [vmem:[#allocation7] sm:$0xff]
        %v3192 = vld [vmem:[%s6] sm:$0x1]
        %v3194 = vperm.slane %v3192, 0
        %v3196 = vadd.f32 %v3191, %v3194
        %v3197 = vmax.f32 %v3196, 0.0
        %v3198 = vpack.c.bf16 %v3197, %v3197
        %v3199 = vld [vmem:[%s7] sm:$0xf]
        %v3200 = vld [vmem:[%s7 + $0x4] sm:$0xf]
        %v3201 = vld [vmem:[%s7 + $0x8] sm:$0xf]
        %v3202 = vld [vmem:[%s7 + $0xc] sm:$0xf]
        %v3203 = vld [vmem:[%s7 + $0x10] sm:$0xf]
        %v3204 = vld [vmem:[%s7 + $0x14] sm:$0xf]
        %v3205 = vld [vmem:[%s7 + $0x18] sm:$0xf]
        %v3206 = vld [vmem:[%s7 + $0x1c] sm:$0xf]
        %v3207 = vld [vmem:[%s7 + $0x20] sm:$0xf]
        %v3208 = vld [vmem:[%s7 + $0x24] sm:$0xf]
        %v3209 = vld [vmem:[%s7 + $0x28] sm:$0xf]
        %v3210 = vld [vmem:[%s7 + $0x2c] sm:$0xf]
        %v3211 = vld [vmem:[%s7 + $0x30] sm:$0xf]
        %v3212 = vld [vmem:[%s7 + $0x34] sm:$0xf]
        %v3213 = vld [vmem:[%s7 + $0x38] sm:$0xf]
        %v3214 = vld [vmem:[%s7 + $0x3c] sm:$0xf]
        %v3215 = vld [vmem:[%s8] sm:$0x1]
        %v3217 = vperm.slane %v3215, 0
        %v3235 = vunpack.c.l.b16 %v3199
        %v3236 = vunpack.c.l.b16 %v3200
        %v3237 = vunpack.c.l.b16 %v3201
        %v3238 = vunpack.c.l.b16 %v3202
        %v3239 = vunpack.c.l.b16 %v3203
        %v3240 = vunpack.c.l.b16 %v3204
        %v3241 = vunpack.c.l.b16 %v3205
        %v3242 = vunpack.c.l.b16 %v3206
        %v3243 = vunpack.c.l.b16 %v3207
        %v3244 = vunpack.c.l.b16 %v3208
        %v3245 = vunpack.c.l.b16 %v3209
        %v3246 = vunpack.c.l.b16 %v3210
        %v3247 = vunpack.c.l.b16 %v3211
        %v3248 = vunpack.c.l.b16 %v3212
        %v3249 = vunpack.c.l.b16 %v3213
        %v3250 = vunpack.c.l.b16 %v3214
        %v3251 = vpack.c.b16 %v3236, %v3235
        %v3252 = vpack.c.b16 %v3238, %v3237
        %v3253 = vpack.c.b16 %v3240, %v3239
        %v3254 = vpack.c.b16 %v3242, %v3241
        %v3255 = vpack.c.b16 %v3244, %v3243
        %v3256 = vpack.c.b16 %v3246, %v3245
        %v3257 = vpack.c.b16 %v3248, %v3247
        %v3258 = vpack.c.b16 %v3250, %v3249
        %3267 = vmatpush.bf16.msra.mxu0 %v3258
        %3268 = vmatpush.bf16.msra.mxu0 %v3257
        %3269 = vmatpush.bf16.msra.mxu0 %v3256
        %3270 = vmatpush.bf16.msra.mxu0 %v3255
        %3271 = vmatpush.bf16.msra.mxu0 %v3254
        %3272 = vmatpush.bf16.msra.mxu0 %v3253
        %3273 = vmatpush.bf16.msra.mxu0 %v3252
        %3274 = vmatpush.bf16.msra.mxu0 %v3251
        %3275 = vmatmul.bf16.gmra.mxu0 %v3198
        %v3276 = vpop.f32.mrf.mxu0
        %v3277 = vadd.f32 %v3217, %v3276
        %v3278 = vpop.f32.mrf.mxu0
        %3279 = vdwg.mxu0
        %v3280 = vmax.f32 %v3277, 0.0
        %v3281 = vpack.c.bf16 %v3280, %v3280
        %v3282 = vld [vmem:[#allocation12] sm:$0xf]
        %v3283 = vld [vmem:[#allocation12 + $0x4] sm:$0xf]
        %v3284 = vld [vmem:[#allocation12 + $0x8] sm:$0xf]
        %v3285 = vld [vmem:[#allocation12 + $0xc] sm:$0xf]
        %v3286 = vld [vmem:[#allocation12 + $0x10] sm:$0xf]
        %v3287 = vld [vmem:[#allocation12 + $0x14] sm:$0xf]
        %v3288 = vld [vmem:[#allocation12 + $0x18] sm:$0xf]
        %v3289 = vld [vmem:[#allocation12 + $0x1c] sm:$0xf]
        %v3290 = vld [vmem:[#allocation12 + $0x20] sm:$0xf]
        %v3291 = vld [vmem:[#allocation12 + $0x24] sm:$0xf]
        %v3292 = vld [vmem:[#allocation12 + $0x28] sm:$0xf]
        %v3293 = vld [vmem:[#allocation12 + $0x2c] sm:$0xf]
        %v3294 = vld [vmem:[#allocation12 + $0x30] sm:$0xf]
        %v3295 = vld [vmem:[#allocation12 + $0x34] sm:$0xf]
        %v3296 = vld [vmem:[#allocation12 + $0x38] sm:$0xf]
        %v3297 = vld [vmem:[#allocation12 + $0x3c] sm:$0xf]
        %v3298 = vld [vmem:[#allocation13] sm:$0x1]
        %v3300 = vperm.slane %v3298, 0
        %v3318 = vunpack.c.l.b16 %v3282
        %v3319 = vunpack.c.l.b16 %v3283
        %v3320 = vunpack.c.l.b16 %v3284
        %v3321 = vunpack.c.l.b16 %v3285
        %v3322 = vunpack.c.l.b16 %v3286
        %v3323 = vunpack.c.l.b16 %v3287
        %v3324 = vunpack.c.l.b16 %v3288
        %v3325 = vunpack.c.l.b16 %v3289
        %v3326 = vunpack.c.l.b16 %v3290
        %v3327 = vunpack.c.l.b16 %v3291
        %v3328 = vunpack.c.l.b16 %v3292
        %v3329 = vunpack.c.l.b16 %v3293
        %v3330 = vunpack.c.l.b16 %v3294
        %v3331 = vunpack.c.l.b16 %v3295
        %v3332 = vunpack.c.l.b16 %v3296
        %v3333 = vunpack.c.l.b16 %v3297
        %v3334 = vpack.c.b16 %v3319, %v3318
        %v3335 = vpack.c.b16 %v3321, %v3320
        %v3336 = vpack.c.b16 %v3323, %v3322
        %v3337 = vpack.c.b16 %v3325, %v3324
        %v3338 = vpack.c.b16 %v3327, %v3326
        %v3339 = vpack.c.b16 %v3329, %v3328
        %v3340 = vpack.c.b16 %v3331, %v3330
        %v3341 = vpack.c.b16 %v3333, %v3332
        %3350 = vmatpush.bf16.msra.mxu0 %v3341
        %3351 = vmatpush.bf16.msra.mxu0 %v3340
        %3352 = vmatpush.bf16.msra.mxu0 %v3339
        %3353 = vmatpush.bf16.msra.mxu0 %v3338
        %3354 = vmatpush.bf16.msra.mxu0 %v3337
        %3355 = vmatpush.bf16.msra.mxu0 %v3336
        %3356 = vmatpush.bf16.msra.mxu0 %v3335
        %3357 = vmatpush.bf16.msra.mxu0 %v3334
        %3358 = vmatmul.bf16.gmra.mxu0 %v3281
        %v3359 = vpop.f32.mrf.mxu0
        %v3360 = vadd.f32 %v3300, %v3359
        %v3361 = vpop.f32.mrf.mxu0
        %3362 = vdwg.mxu0
        %3363 = vst [vmem:[%s451] sm:$0xff] %v3360
        %p3364 = scmp.lt.s32.totalorder %s25, 1
        %s3365 = scalar_select %p3364, %s25, 1
        %s3366 = smul.addr %s3365, 8
        %s3367 = scalar_lea.vmem %s11, %s3366
        // Predicated region
        $region81: #{net_forward.1} parent=63 // pred_check
          %p3368 = pneg %p279
        $region82: #{net_forward.1} parent=63 // pred_check_branch
          %3370 = sbr.rel (%p3368) target = $region84
        $region83: #{net_forward.1} parent=63 // pred_region
          _
        $region84: #{net_forward.1} parent=63 // pred_fallthru
          _
      $region64: #{net_forward.1} parent=5 // pred_fallthru
        _
      %p3371 = scmp.le.s32.totalorder 2, %s20
      // Predicated region
      $region85: #{net_forward.1} parent=5 // pred_check
        %p3372 = pneg %p3371
      $region86: #{net_forward.1} parent=5 // pred_check_branch
        %3374 = sbr.rel (%p3372) target = $region88
      $region87: #{net_forward.1} parent=5 // pred_region
        %s3375 = ssub.s32 %s20, 2
        // Predicated region
        $region89: #{net_forward.1} parent=87 // pred_check
          %p3376 = pneg %p285
        $region90: #{net_forward.1} parent=87 // pred_check_branch
          %3378 = sbr.rel (%p3376) target = $region92
        $region91: #{net_forward.1} parent=87 // pred_region
          %p3379 = scmp.lt.s32.totalorder %s26, 1
          %s3380 = scalar_select %p3379, %s26, 1
          %s3381 = smul.addr %s3380, 8
          %s3382 = scalar_lea.vmem %s11, %s3381
        $region92: #{net_forward.1} parent=87 // pred_fallthru
          _
      $region88: #{net_forward.1} parent=5 // pred_fallthru
        _
    $region6: #{net_forward.1} parent=1 // loop_footer
      %s24 = sadd.s32 1, %s20
    $region7: #{net_forward.1} parent=1 // loop_footer_branch
      %19 = sbr.rel target = $region3
    $region8: #{net_forward.1} parent=1 // loop_exit
      _
    %3383 = vsyncpa [#allocation9], 1
    %s3384 = scalar_lea.sflag [#allocation9], 1
    %3385 = vsyncpa %s3384, 1
    %3386 = vsyncpa [#allocation11], 1
    %3387 = vsyncpa [#allocation14], 1

</llo_original>
